<compile_context>
chip_gen: v7x
topology: tpu7x:2x2x1
jax: 0.10.0
libtpu: 0.0.40
codegen_flags: <defaults>
</compile_context>

<pallas_src>
import functools
import math

import jax
import jax.numpy as jnp
from jax.experimental import pallas as pl
from jax.experimental.pallas import tpu as pltpu

_LANE = 128          # per-gate lane slab width (one vreg lane tile)


def _lstm_kernel(x_ref, w_ih0_ref, b0_ref, w_rec_ref, b_rec_ref,
                 w_lin_ref, b_lin_ref, out_ref, gi0_ref, hkeep_ref,
                 *, seq_len, batch, num_layers, keep_from):
    """Whole-sequence stacked LSTM + linear head in one invocation.

    x_ref      : (T*B, input_size)         time-major, flattened over (t, b)
    w_ih0_ref  : (input_size, 4*128)       layer-0 input weights, gate slabs
    b0_ref     : (1, 4*128)                layer-0 bias (b_ih + b_hh), gate slabs
    w_rec_ref  : (L*128, L*4*128)          fused wavefront weight:
                                           row-block r -> col-block r (w_hh_r)
                                           and col-block r+1 (w_ih_{r+1})
    b_rec_ref  : (1, L*4*128)              biases of layers>0 (layer-0 block = 0)
    w_lin_ref  : (128, out_pad)            linear head, row/lane padded
    b_lin_ref  : (1, out_pad)
    out_ref    : (T_keep*B, out_pad)       outputs for timesteps >= keep_from
    gi0_ref    : VMEM scratch (T*B, 4*128) hoisted layer-0 input projection
    hkeep_ref  : VMEM scratch (T_keep*B, 128) kept top-layer hidden states
    """
    B, T, L = batch, seq_len, num_layers
    GP = _LANE
    G4 = 4 * GP

    # (1) Hoisted layer-0 input projection (+ bias) for ALL timesteps, staged
    #     in VMEM scratch so it does not stay live in vregs across the loop.
    gi0_ref[...] = (jnp.dot(x_ref[...], w_ih0_ref[...],
                            preferred_element_type=jnp.float32) + b0_ref[...])

    # (2) One-off (hoisted) sublane broadcast of the fused recurrent bias.
    bias_rec = jnp.broadcast_to(b_rec_ref[...], (B, L * G4))

    def cell(gates, c_prev):
        # Each gate sits in its own lane-aligned 128-wide slab: all slices are
        # whole-vreg selects, no lane rotates. Padded lanes (>= H) stay 0.
        i_g = jax.nn.sigmoid(gates[:, 0 * GP:1 * GP])
        f_g = jax.nn.sigmoid(gates[:, 1 * GP:2 * GP])
        g_g = jnp.tanh(gates[:, 2 * GP:3 * GP])
        o_g = jax.nn.sigmoid(gates[:, 3 * GP:4 * GP])
        c_new = f_g * c_prev + i_g * g_g
        return o_g * jnp.tanh(c_new), c_new

    h = [jnp.zeros((B, GP), jnp.float32) for _ in range(L)]
    c = [jnp.zeros((B, GP), jnp.float32) for _ in range(L)]

    # (3) Wavefront recurrence: at wave step s, layer l processes timestep s-l,
    #     so all per-layer gate matmuls of the step fuse into ONE MXU issue.
    #     Static unroll == lax.fori_loop(unroll=True) at this size (T+L-1 = 9).
    # TODO(synk): for long sequences convert to a time-chunked grid axis with
    # h/c carried in VMEM scratch (v7x 64 MiB VMEM) and a parallel batch axis
    # for the second v7x TensorCore; not needed at these shapes.
    for s in range(T + L - 1):
        h_all = h[0] if L == 1 else jnp.concatenate(h, axis=-1)  # vreg-aligned
        gates_all = jnp.dot(h_all, w_rec_ref[...],
                            preferred_element_type=jnp.float32) + bias_rec
        for l in range(L):
            t_l = s - l                    # timestep this layer processes now
            if t_l < 0 or t_l >= T:
                continue                   # layer idle at this wave step
            g_l = gates_all[:, l * G4:(l + 1) * G4]
            if l == 0:
                g_l = g_l + gi0_ref[pl.ds(t_l * B, B), :]
            h[l], c[l] = cell(g_l, c[l])
            if l == L - 1 and t_l >= keep_from:
                hkeep_ref[pl.ds((t_l - keep_from) * B, B), :] = h[l]

    # (4) Single lane-dense linear head over all kept top-layer states.
    out_ref[...] = (jnp.dot(hkeep_ref[...], w_lin_ref[...],
                            preferred_element_type=jnp.float32) + b_lin_ref[...])


def run_lstm_kernel(x_tbf, kparams, *, output_size, keep_from):
    """x_tbf: (T, B, input_size) f32 -> (T_keep, B, output_size) f32."""
    T, B, input_size = x_tbf.shape
    w_ih0, b0, w_rec, b_rec, w_lin, b_lin = kparams
    L = w_rec.shape[0] // _LANE
    out_pad = w_lin.shape[1]
    T_keep = T - keep_from

    x_flat = x_tbf.reshape(T * B, input_size)
    kernel = functools.partial(_lstm_kernel, seq_len=T, batch=B,
                               num_layers=L, keep_from=keep_from)

    vmem = pl.BlockSpec(memory_space=pltpu.MemorySpace.VMEM)
    y_flat = pl.pallas_call(
        kernel,
        out_shape=jax.ShapeDtypeStruct((T_keep * B, out_pad), jnp.float32),
        in_specs=[vmem] * 6 + [vmem],
        out_specs=vmem,
        scratch_shapes=[pltpu.VMEM((T * B, 4 * _LANE), jnp.float32),
                        pltpu.VMEM((T_keep * B, _LANE), jnp.float32)],
    )(x_flat, w_ih0, b0, w_rec, b_rec, w_lin, b_lin)

    return y_flat.reshape(T_keep, B, out_pad)[:, :, :output_size]


def lstm_forward(batch_init, batch_next, batch_size, steps_in, steps_out,
                 kparams, *, output_size, tf_prob=1):
    """Mirrors LSTM.forward for tf_prob=1 (always teacher forcing)."""
    # TODO(synk): tf_prob < 1 (stochastic scheduled sampling) not implemented;
    # only the always-teacher-forcing path matches the PyTorch module.
    del batch_size, steps_in, steps_out  # unused by the PyTorch forward too
    x = jnp.concatenate([batch_init, batch_next], axis=1)    # (B, T_in+T_next, D)
    x_tbf = jnp.transpose(x, (1, 0, 2)).astype(jnp.float32)  # time-major
    y_tbf = run_lstm_kernel(x_tbf, kparams, output_size=output_size,
                            keep_from=batch_init.shape[1] - 1)
    return jnp.transpose(y_tbf, (1, 0, 2))                   # (B, 1+T_next, out)


# ----------------------------- parameter prep -------------------------------
def init_params(key, input_size, hidden_size, output_size, num_layers):
    """Raw PyTorch-layout parameters (w_ih (4H,in), w_hh (4H,H), b_ih, b_hh)."""
    H = hidden_size
    bound = 1.0 / math.sqrt(H)
    keys = jax.random.split(key, 4 * num_layers + 2)

    def unif(kk, shape):
        return jax.random.uniform(kk, shape, jnp.float32, -bound, bound)

    layers = []
    for l in range(num_layers):
        in_dim = input_size if l == 0 else H
        layers.append((unif(keys[4 * l + 0], (4 * H, in_dim)),
                       unif(keys[4 * l + 1], (4 * H, H)),
                       unif(keys[4 * l + 2], (4 * H,)),
                       unif(keys[4 * l + 3], (4 * H,))))
    w_lin = unif(keys[-2], (output_size, H))
    b_lin = unif(keys[-1], (output_size,))
    return layers, w_lin, b_lin


def pack_params(layers, w_lin, b_lin, *, hidden_size, output_size):
    """Convert raw weights into the kernel's gate-slab / wavefront layout."""
    H = hidden_size
    GP = _LANE
    G4 = 4 * GP
    L = len(layers)

    def slab_cols(w_t):
        # (rows, 4H) -> (rows, 4*GP): gate g goes to lanes [g*GP, g*GP+H)
        rows = w_t.shape[0]
        out = jnp.zeros((rows, G4), jnp.float32)
        for g in range(4):
            out = out.at[:, g * GP:g * GP + H].set(w_t[:, g * H:(g + 1) * H])
        return out

    w_ih0, w_hh0, b_ih0, b_hh0 = layers[0]
    w_ih0_slab = slab_cols(w_ih0.T)                          # (input_size, 4*GP)
    b0_slab = slab_cols((b_ih0 + b_hh0)[None, :])            # (1, 4*GP)

    # Fused wavefront weight: [h_0 ... h_{L-1}] (B, L*GP)  @  (L*GP, L*G4)
    #   row-block r contributes w_hh_r to column-block r and w_ih_{r+1} to
    #   column-block r+1 (layer r+1 reads layer r's previous-wave output).
    w_rec = jnp.zeros((L * GP, L * G4), jnp.float32)
    b_rec = jnp.zeros((1, L * G4), jnp.float32)
    for l in range(L):
        w_ih, w_hh, b_ih, b_hh = layers[l]
        w_rec = w_rec.at[l * GP:l * GP + H, l * G4:(l + 1) * G4].set(
            slab_cols(w_hh.T))
        if l > 0:
            w_rec = w_rec.at[(l - 1) * GP:(l - 1) * GP + H,
                             l * G4:(l + 1) * G4].set(slab_cols(w_ih.T))
            b_rec = b_rec.at[:, l * G4:(l + 1) * G4].set(
                slab_cols((b_ih + b_hh)[None, :]))

    # Lane-pad the linear head so the single output store is dense (>=128 lanes).
    # TODO(synk): at large T_keep*B on v5e, pack multiple timesteps per 128-lane
    # row instead of zero-padding to avoid 16x HBM writeback bloat.
    out_pad = max(GP, ((output_size + GP - 1) // GP) * GP)
    w_lin_pad = jnp.zeros((GP, out_pad), jnp.float32).at[:H, :output_size].set(w_lin.T)
    b_lin_pad = jnp.zeros((1, out_pad), jnp.float32).at[:, :output_size].set(b_lin[None, :])

    return (w_ih0_slab, b0_slab, w_rec, b_rec, w_lin_pad, b_lin_pad)


# ------------------------- plain-JAX reference ------------------------------
def lstm_reference(batch_init, batch_next, layers, w_lin, b_lin, hidden_size):
    x = jnp.concatenate([batch_init, batch_next], axis=1)
    B, T, _ = x.shape
    H = hidden_size
    L = len(layers)
    h = [jnp.zeros((B, H), jnp.float32) for _ in range(L)]
    c = [jnp.zeros((B, H), jnp.float32) for _ in range(L)]
    outs = []
    for t in range(T):
        inp = x[:, t, :]
        for l, (w_ih, w_hh, b_ih, b_hh) in enumerate(layers):
            gates = inp @ w_ih.T + h[l] @ w_hh.T + b_ih + b_hh
            i = jax.nn.sigmoid(gates[:, :H])
            f = jax.nn.sigmoid(gates[:, H:2 * H])
            g = jnp.tanh(gates[:, 2 * H:3 * H])
            o = jax.nn.sigmoid(gates[:, 3 * H:])
            c[l] = f * c[l] + i * g
            h[l] = o * jnp.tanh(c[l])
            inp = h[l]
        outs.append(inp @ w_lin.T + b_lin)
    y = jnp.stack(outs, axis=1)
    return y[:, batch_init.shape[1] - 1:, :]


if __name__ == "__main__":
    B, T_IN, T_NEXT = 8, 4, 4
    INPUT_SIZE, HIDDEN_SIZE, OUTPUT_SIZE, NUM_LAYERS = 8, 32, 8, 2

    key = jax.random.PRNGKey(0)
    k_p, k_a, k_b = jax.random.split(key, 3)
    layers, w_lin, b_lin = init_params(
        k_p, INPUT_SIZE, HIDDEN_SIZE, OUTPUT_SIZE, NUM_LAYERS)
    kparams = pack_params(layers, w_lin, b_lin,
                          hidden_size=HIDDEN_SIZE, output_size=OUTPUT_SIZE)

    batch_init = jax.random.normal(k_a, (B, T_IN, INPUT_SIZE), jnp.float32)
    batch_next = jax.random.normal(k_b, (B, T_NEXT, INPUT_SIZE), jnp.float32)

    out = lstm_forward(batch_init, batch_next, B, T_IN, T_NEXT, kparams,
                       output_size=OUTPUT_SIZE, tf_prob=1)
    out = jax.block_until_ready(out)

    assert out.shape == (B, 1 + T_NEXT, OUTPUT_SIZE), out.shape

    ref = lstm_reference(batch_init, batch_next, layers, w_lin, b_lin, HIDDEN_SIZE)
    err = float(jnp.max(jnp.abs(out - ref)))
    assert jnp.allclose(out, ref, atol=5e-3, rtol=5e-3), err

    print("KERNEL_OK")
</pallas_src>

<mosaic_0001>
module attributes {stable_mosaic.version = 11 : i64} {
  func.func @_lstm_kernel(%arg0: memref<64x8xf32, #tpu.memory_space<vmem>>, %arg1: memref<8x512xf32, #tpu.memory_space<vmem>>, %arg2: memref<1x512xf32, #tpu.memory_space<vmem>>, %arg3: memref<256x1024xf32, #tpu.memory_space<vmem>>, %arg4: memref<1x1024xf32, #tpu.memory_space<vmem>>, %arg5: memref<128x128xf32, #tpu.memory_space<vmem>>, %arg6: memref<1x128xf32, #tpu.memory_space<vmem>>, %arg7: memref<40x128xf32, #tpu.memory_space<vmem>>, %arg8: memref<64x512xf32, #tpu.memory_space<vmem>>, %arg9: memref<40x128xf32, #tpu.memory_space<vmem>>) attributes {dimension_semantics = [], scalar_prefetch = 0 : i64, scratch_operands = 2 : i64, tpu.core_type = #tpu.core_type<tc>} {
    %c0 = arith.constant 0 : index
    %c0_0 = arith.constant 0 : index
    %0 = vector.load %arg0[%c0, %c0_0] : memref<64x8xf32, #tpu.memory_space<vmem>>, vector<64x8xf32>
    %c0_1 = arith.constant 0 : index
    %c0_2 = arith.constant 0 : index
    %1 = vector.load %arg1[%c0_1, %c0_2] : memref<8x512xf32, #tpu.memory_space<vmem>>, vector<8x512xf32>
    %cst = arith.constant dense<0.000000e+00> : vector<64x512xf32>
    %2 = tpu.matmul %0, %1, %cst {dimension_numbers = #tpu.dot_dimension_numbers<[1], [0], [0], [1], [0, 0, 1, 1], [], []>} : vector<64x8xf32>, vector<8x512xf32>, vector<64x512xf32> -> vector<64x512xf32>
    %c0_3 = arith.constant 0 : index
    %c0_4 = arith.constant 0 : index
    %3 = vector.load %arg2[%c0_3, %c0_4] : memref<1x512xf32, #tpu.memory_space<vmem>>, vector<1x512xf32>
    %4 = vector.broadcast %3 : vector<1x512xf32> to vector<64x512xf32>
    %5 = arith.addf %2, %4 : vector<64x512xf32>
    %c0_5 = arith.constant 0 : index
    %c0_6 = arith.constant 0 : index
    %6 = vector.load %arg8[%c0_5, %c0_6] : memref<64x512xf32, #tpu.memory_space<vmem>>, vector<64x512xf32>
    tpu.vector_store %arg8[%c0_5, %c0_6], %5 {strides = array<i32>} : memref<64x512xf32, #tpu.memory_space<vmem>>, vector<64x512xf32>,
    %c0_7 = arith.constant 0 : index
    %c0_8 = arith.constant 0 : index
    %7 = vector.load %arg4[%c0_7, %c0_8] : memref<1x1024xf32, #tpu.memory_space<vmem>>, vector<1x1024xf32>
    %8 = vector.shape_cast %7 : vector<1x1024xf32> to vector<1x1024xf32>
    %9 = vector.broadcast %8 : vector<1x1024xf32> to vector<8x1024xf32>
    %cst_9 = arith.constant 0.000000e+00 : f32
    %10 = vector.broadcast %cst_9 : f32 to vector<8x128xf32>
    %cst_10 = arith.constant 0.000000e+00 : f32
    %11 = vector.broadcast %cst_10 : f32 to vector<8x128xf32>
    %cst_11 = arith.constant 0.000000e+00 : f32
    %12 = vector.broadcast %cst_11 : f32 to vector<8x128xf32>
    %cst_12 = arith.constant 0.000000e+00 : f32
    %13 = vector.broadcast %cst_12 : f32 to vector<8x128xf32>
    %14 = tpu.concatenate %10, %11 in 1 : vector<8x128xf32>, vector<8x128xf32> -> vector<8x256xf32>
    %c0_13 = arith.constant 0 : index
    %c0_14 = arith.constant 0 : index
    %15 = vector.load %arg3[%c0_13, %c0_14] : memref<256x1024xf32, #tpu.memory_space<vmem>>, vector<256x1024xf32>
    %cst_15 = arith.constant dense<0.000000e+00> : vector<8x1024xf32>
    %16 = tpu.matmul %14, %15, %cst_15 {dimension_numbers = #tpu.dot_dimension_numbers<[1], [0], [0], [1], [0, 0, 1, 1], [], []>} : vector<8x256xf32>, vector<256x1024xf32>, vector<8x1024xf32> -> vector<8x1024xf32>
    %17 = arith.addf %16, %9 : vector<8x1024xf32>
    %18 = vector.extract_strided_slice %17 {offsets = [0, 0], sizes = [8, 512], strides = [1, 1]} : vector<8x1024xf32> to vector<8x512xf32>
    %c0_16 = arith.constant 0 : index
    %c0_17 = arith.constant 0 : index
    %19 = vector.load %arg8[%c0_16, %c0_17] : memref<64x512xf32, #tpu.memory_space<vmem>>, vector<8x512xf32>
    %20 = arith.addf %18, %19 : vector<8x512xf32>
    %21 = vector.extract_strided_slice %20 {offsets = [0, 0], sizes = [8, 128], strides = [1, 1]} : vector<8x512xf32> to vector<8x128xf32>
    %22 = arith.negf %21 : vector<8x128xf32>
    %23 = math.exp %22 : vector<8x128xf32>
    %cst_18 = arith.constant 1.000000e+00 : f32
    %24 = vector.broadcast %cst_18 : f32 to vector<8x128xf32>
    %25 = arith.addf %24, %23 : vector<8x128xf32>
    %26 = arith.divf %24, %25 : vector<8x128xf32>
    %27 = vector.extract_strided_slice %20 {offsets = [0, 128], sizes = [8, 128], strides = [1, 1]} : vector<8x512xf32> to vector<8x128xf32>
    %28 = arith.negf %27 : vector<8x128xf32>
    %29 = math.exp %28 : vector<8x128xf32>
    %cst_19 = arith.constant 1.000000e+00 : f32
    %30 = vector.broadcast %cst_19 : f32 to vector<8x128xf32>
    %31 = arith.addf %30, %29 : vector<8x128xf32>
    %32 = arith.divf %30, %31 : vector<8x128xf32>
    %33 = vector.extract_strided_slice %20 {offsets = [0, 256], sizes = [8, 128], strides = [1, 1]} : vector<8x512xf32> to vector<8x128xf32>
    %34 = math.tanh %33 : vector<8x128xf32>
    %35 = vector.extract_strided_slice %20 {offsets = [0, 384], sizes = [8, 128], strides = [1, 1]} : vector<8x512xf32> to vector<8x128xf32>
    %36 = arith.negf %35 : vector<8x128xf32>
    %37 = math.exp %36 : vector<8x128xf32>
    %cst_20 = arith.constant 1.000000e+00 : f32
    %38 = vector.broadcast %cst_20 : f32 to vector<8x128xf32>
    %39 = arith.addf %38, %37 : vector<8x128xf32>
    %40 = arith.divf %38, %39 : vector<8x128xf32>
    %41 = arith.mulf %32, %12 : vector<8x128xf32>
    %42 = arith.mulf %26, %34 : vector<8x128xf32>
    %43 = arith.addf %41, %42 : vector<8x128xf32>
    %44 = math.tanh %43 : vector<8x128xf32>
    %45 = arith.mulf %40, %44 : vector<8x128xf32>
    %46 = tpu.concatenate %45, %11 in 1 : vector<8x128xf32>, vector<8x128xf32> -> vector<8x256xf32>
    %c0_21 = arith.constant 0 : index
    %c0_22 = arith.constant 0 : index
    %47 = vector.load %arg3[%c0_21, %c0_22] : memref<256x1024xf32, #tpu.memory_space<vmem>>, vector<256x1024xf32>
    %cst_23 = arith.constant dense<0.000000e+00> : vector<8x1024xf32>
    %48 = tpu.matmul %46, %47, %cst_23 {dimension_numbers = #tpu.dot_dimension_numbers<[1], [0], [0], [1], [0, 0, 1, 1], [], []>} : vector<8x256xf32>, vector<256x1024xf32>, vector<8x1024xf32> -> vector<8x1024xf32>
    %49 = arith.addf %48, %9 : vector<8x1024xf32>
    %50 = vector.extract_strided_slice %49 {offsets = [0, 0], sizes = [8, 512], strides = [1, 1]} : vector<8x1024xf32> to vector<8x512xf32>
    %c8 = arith.constant 8 : index
    %c0_24 = arith.constant 0 : index
    %51 = vector.load %arg8[%c8, %c0_24] : memref<64x512xf32, #tpu.memory_space<vmem>>, vector<8x512xf32>
    %52 = arith.addf %50, %51 : vector<8x512xf32>
    %53 = vector.extract_strided_slice %52 {offsets = [0, 0], sizes = [8, 128], strides = [1, 1]} : vector<8x512xf32> to vector<8x128xf32>
    %54 = arith.negf %53 : vector<8x128xf32>
    %55 = math.exp %54 : vector<8x128xf32>
    %cst_25 = arith.constant 1.000000e+00 : f32
    %56 = vector.broadcast %cst_25 : f32 to vector<8x128xf32>
    %57 = arith.addf %56, %55 : vector<8x128xf32>
    %58 = arith.divf %56, %57 : vector<8x128xf32>
    %59 = vector.extract_strided_slice %52 {offsets = [0, 128], sizes = [8, 128], strides = [1, 1]} : vector<8x512xf32> to vector<8x128xf32>
    %60 = arith.negf %59 : vector<8x128xf32>
    %61 = math.exp %60 : vector<8x128xf32>
    %cst_26 = arith.constant 1.000000e+00 : f32
    %62 = vector.broadcast %cst_26 : f32 to vector<8x128xf32>
    %63 = arith.addf %62, %61 : vector<8x128xf32>
    %64 = arith.divf %62, %63 : vector<8x128xf32>
    %65 = vector.extract_strided_slice %52 {offsets = [0, 256], sizes = [8, 128], strides = [1, 1]} : vector<8x512xf32> to vector<8x128xf32>
    %66 = math.tanh %65 : vector<8x128xf32>
    %67 = vector.extract_strided_slice %52 {offsets = [0, 384], sizes = [8, 128], strides = [1, 1]} : vector<8x512xf32> to vector<8x128xf32>
    %68 = arith.negf %67 : vector<8x128xf32>
    %69 = math.exp %68 : vector<8x128xf32>
    %cst_27 = arith.constant 1.000000e+00 : f32
    %70 = vector.broadcast %cst_27 : f32 to vector<8x128xf32>
    %71 = arith.addf %70, %69 : vector<8x128xf32>
    %72 = arith.divf %70, %71 : vector<8x128xf32>
    %73 = arith.mulf %64, %43 : vector<8x128xf32>
    %74 = arith.mulf %58, %66 : vector<8x128xf32>
    %75 = arith.addf %73, %74 : vector<8x128xf32>
    %76 = math.tanh %75 : vector<8x128xf32>
    %77 = arith.mulf %72, %76 : vector<8x128xf32>
    %78 = vector.extract_strided_slice %49 {offsets = [0, 512], sizes = [8, 512], strides = [1, 1]} : vector<8x1024xf32> to vector<8x512xf32>
    %79 = vector.extract_strided_slice %78 {offsets = [0, 0], sizes = [8, 128], strides = [1, 1]} : vector<8x512xf32> to vector<8x128xf32>
    %80 = arith.negf %79 : vector<8x128xf32>
    %81 = math.exp %80 : vector<8x128xf32>
    %cst_28 = arith.constant 1.000000e+00 : f32
    %82 = vector.broadcast %cst_28 : f32 to vector<8x128xf32>
    %83 = arith.addf %82, %81 : vector<8x128xf32>
    %84 = arith.divf %82, %83 : vector<8x128xf32>
    %85 = vector.extract_strided_slice %78 {offsets = [0, 128], sizes = [8, 128], strides = [1, 1]} : vector<8x512xf32> to vector<8x128xf32>
    %86 = arith.negf %85 : vector<8x128xf32>
    %87 = math.exp %86 : vector<8x128xf32>
    %cst_29 = arith.constant 1.000000e+00 : f32
    %88 = vector.broadcast %cst_29 : f32 to vector<8x128xf32>
    %89 = arith.addf %88, %87 : vector<8x128xf32>
    %90 = arith.divf %88, %89 : vector<8x128xf32>
    %91 = vector.extract_strided_slice %78 {offsets = [0, 256], sizes = [8, 128], strides = [1, 1]} : vector<8x512xf32> to vector<8x128xf32>
    %92 = math.tanh %91 : vector<8x128xf32>
    %93 = vector.extract_strided_slice %78 {offsets = [0, 384], sizes = [8, 128], strides = [1, 1]} : vector<8x512xf32> to vector<8x128xf32>
    %94 = arith.negf %93 : vector<8x128xf32>
    %95 = math.exp %94 : vector<8x128xf32>
    %cst_30 = arith.constant 1.000000e+00 : f32
    %96 = vector.broadcast %cst_30 : f32 to vector<8x128xf32>
    %97 = arith.addf %96, %95 : vector<8x128xf32>
    %98 = arith.divf %96, %97 : vector<8x128xf32>
    %99 = arith.mulf %90, %13 : vector<8x128xf32>
    %100 = arith.mulf %84, %92 : vector<8x128xf32>
    %101 = arith.addf %99, %100 : vector<8x128xf32>
    %102 = math.tanh %101 : vector<8x128xf32>
    %103 = arith.mulf %98, %102 : vector<8x128xf32>
    %104 = tpu.concatenate %77, %103 in 1 : vector<8x128xf32>, vector<8x128xf32> -> vector<8x256xf32>
    %c0_31 = arith.constant 0 : index
    %c0_32 = arith.constant 0 : index
    %105 = vector.load %arg3[%c0_31, %c0_32] : memref<256x1024xf32, #tpu.memory_space<vmem>>, vector<256x1024xf32>
    %cst_33 = arith.constant dense<0.000000e+00> : vector<8x1024xf32>
    %106 = tpu.matmul %104, %105, %cst_33 {dimension_numbers = #tpu.dot_dimension_numbers<[1], [0], [0], [1], [0, 0, 1, 1], [], []>} : vector<8x256xf32>, vector<256x1024xf32>, vector<8x1024xf32> -> vector<8x1024xf32>
    %107 = arith.addf %106, %9 : vector<8x1024xf32>
    %108 = vector.extract_strided_slice %107 {offsets = [0, 0], sizes = [8, 512], strides = [1, 1]} : vector<8x1024xf32> to vector<8x512xf32>
    %c16 = arith.constant 16 : index
    %c0_34 = arith.constant 0 : index
    %109 = vector.load %arg8[%c16, %c0_34] : memref<64x512xf32, #tpu.memory_space<vmem>>, vector<8x512xf32>
    %110 = arith.addf %108, %109 : vector<8x512xf32>
    %111 = vector.extract_strided_slice %110 {offsets = [0, 0], sizes = [8, 128], strides = [1, 1]} : vector<8x512xf32> to vector<8x128xf32>
    %112 = arith.negf %111 : vector<8x128xf32>
    %113 = math.exp %112 : vector<8x128xf32>
    %cst_35 = arith.constant 1.000000e+00 : f32
    %114 = vector.broadcast %cst_35 : f32 to vector<8x128xf32>
    %115 = arith.addf %114, %113 : vector<8x128xf32>
    %116 = arith.divf %114, %115 : vector<8x128xf32>
    %117 = vector.extract_strided_slice %110 {offsets = [0, 128], sizes = [8, 128], strides = [1, 1]} : vector<8x512xf32> to vector<8x128xf32>
    %118 = arith.negf %117 : vector<8x128xf32>
    %119 = math.exp %118 : vector<8x128xf32>
    %cst_36 = arith.constant 1.000000e+00 : f32
    %120 = vector.broadcast %cst_36 : f32 to vector<8x128xf32>
    %121 = arith.addf %120, %119 : vector<8x128xf32>
    %122 = arith.divf %120, %121 : vector<8x128xf32>
    %123 = vector.extract_strided_slice %110 {offsets = [0, 256], sizes = [8, 128], strides = [1, 1]} : vector<8x512xf32> to vector<8x128xf32>
    %124 = math.tanh %123 : vector<8x128xf32>
    %125 = vector.extract_strided_slice %110 {offsets = [0, 384], sizes = [8, 128], strides = [1, 1]} : vector<8x512xf32> to vector<8x128xf32>
    %126 = arith.negf %125 : vector<8x128xf32>
    %127 = math.exp %126 : vector<8x128xf32>
    %cst_37 = arith.constant 1.000000e+00 : f32
    %128 = vector.broadcast %cst_37 : f32 to vector<8x128xf32>
    %129 = arith.addf %128, %127 : vector<8x128xf32>
    %130 = arith.divf %128, %129 : vector<8x128xf32>
    %131 = arith.mulf %122, %75 : vector<8x128xf32>
    %132 = arith.mulf %116, %124 : vector<8x128xf32>
    %133 = arith.addf %131, %132 : vector<8x128xf32>
    %134 = math.tanh %133 : vector<8x128xf32>
    %135 = arith.mulf %130, %134 : vector<8x128xf32>
    %136 = vector.extract_strided_slice %107 {offsets = [0, 512], sizes = [8, 512], strides = [1, 1]} : vector<8x1024xf32> to vector<8x512xf32>
    %137 = vector.extract_strided_slice %136 {offsets = [0, 0], sizes = [8, 128], strides = [1, 1]} : vector<8x512xf32> to vector<8x128xf32>
    %138 = arith.negf %137 : vector<8x128xf32>
    %139 = math.exp %138 : vector<8x128xf32>
    %cst_38 = arith.constant 1.000000e+00 : f32
    %140 = vector.broadcast %cst_38 : f32 to vector<8x128xf32>
    %141 = arith.addf %140, %139 : vector<8x128xf32>
    %142 = arith.divf %140, %141 : vector<8x128xf32>
    %143 = vector.extract_strided_slice %136 {offsets = [0, 128], sizes = [8, 128], strides = [1, 1]} : vector<8x512xf32> to vector<8x128xf32>
    %144 = arith.negf %143 : vector<8x128xf32>
    %145 = math.exp %144 : vector<8x128xf32>
    %cst_39 = arith.constant 1.000000e+00 : f32
    %146 = vector.broadcast %cst_39 : f32 to vector<8x128xf32>
    %147 = arith.addf %146, %145 : vector<8x128xf32>
    %148 = arith.divf %146, %147 : vector<8x128xf32>
    %149 = vector.extract_strided_slice %136 {offsets = [0, 256], sizes = [8, 128], strides = [1, 1]} : vector<8x512xf32> to vector<8x128xf32>
    %150 = math.tanh %149 : vector<8x128xf32>
    %151 = vector.extract_strided_slice %136 {offsets = [0, 384], sizes = [8, 128], strides = [1, 1]} : vector<8x512xf32> to vector<8x128xf32>
    %152 = arith.negf %151 : vector<8x128xf32>
    %153 = math.exp %152 : vector<8x128xf32>
    %cst_40 = arith.constant 1.000000e+00 : f32
    %154 = vector.broadcast %cst_40 : f32 to vector<8x128xf32>
    %155 = arith.addf %154, %153 : vector<8x128xf32>
    %156 = arith.divf %154, %155 : vector<8x128xf32>
    %157 = arith.mulf %148, %101 : vector<8x128xf32>
    %158 = arith.mulf %142, %150 : vector<8x128xf32>
    %159 = arith.addf %157, %158 : vector<8x128xf32>
    %160 = math.tanh %159 : vector<8x128xf32>
    %161 = arith.mulf %156, %160 : vector<8x128xf32>
    %162 = tpu.concatenate %135, %161 in 1 : vector<8x128xf32>, vector<8x128xf32> -> vector<8x256xf32>
    %c0_41 = arith.constant 0 : index
    %c0_42 = arith.constant 0 : index
    %163 = vector.load %arg3[%c0_41, %c0_42] : memref<256x1024xf32, #tpu.memory_space<vmem>>, vector<256x1024xf32>
    %cst_43 = arith.constant dense<0.000000e+00> : vector<8x1024xf32>
    %164 = tpu.matmul %162, %163, %cst_43 {dimension_numbers = #tpu.dot_dimension_numbers<[1], [0], [0], [1], [0, 0, 1, 1], [], []>} : vector<8x256xf32>, vector<256x1024xf32>, vector<8x1024xf32> -> vector<8x1024xf32>
    %165 = arith.addf %164, %9 : vector<8x1024xf32>
    %166 = vector.extract_strided_slice %165 {offsets = [0, 0], sizes = [8, 512], strides = [1, 1]} : vector<8x1024xf32> to vector<8x512xf32>
    %c24 = arith.constant 24 : index
    %c0_44 = arith.constant 0 : index
    %167 = vector.load %arg8[%c24, %c0_44] : memref<64x512xf32, #tpu.memory_space<vmem>>, vector<8x512xf32>
    %168 = arith.addf %166, %167 : vector<8x512xf32>
    %169 = vector.extract_strided_slice %168 {offsets = [0, 0], sizes = [8, 128], strides = [1, 1]} : vector<8x512xf32> to vector<8x128xf32>
    %170 = arith.negf %169 : vector<8x128xf32>
    %171 = math.exp %170 : vector<8x128xf32>
    %cst_45 = arith.constant 1.000000e+00 : f32
    %172 = vector.broadcast %cst_45 : f32 to vector<8x128xf32>
    %173 = arith.addf %172, %171 : vector<8x128xf32>
    %174 = arith.divf %172, %173 : vector<8x128xf32>
    %175 = vector.extract_strided_slice %168 {offsets = [0, 128], sizes = [8, 128], strides = [1, 1]} : vector<8x512xf32> to vector<8x128xf32>
    %176 = arith.negf %175 : vector<8x128xf32>
    %177 = math.exp %176 : vector<8x128xf32>
    %cst_46 = arith.constant 1.000000e+00 : f32
    %178 = vector.broadcast %cst_46 : f32 to vector<8x128xf32>
    %179 = arith.addf %178, %177 : vector<8x128xf32>
    %180 = arith.divf %178, %179 : vector<8x128xf32>
    %181 = vector.extract_strided_slice %168 {offsets = [0, 256], sizes = [8, 128], strides = [1, 1]} : vector<8x512xf32> to vector<8x128xf32>
    %182 = math.tanh %181 : vector<8x128xf32>
    %183 = vector.extract_strided_slice %168 {offsets = [0, 384], sizes = [8, 128], strides = [1, 1]} : vector<8x512xf32> to vector<8x128xf32>
    %184 = arith.negf %183 : vector<8x128xf32>
    %185 = math.exp %184 : vector<8x128xf32>
    %cst_47 = arith.constant 1.000000e+00 : f32
    %186 = vector.broadcast %cst_47 : f32 to vector<8x128xf32>
    %187 = arith.addf %186, %185 : vector<8x128xf32>
    %188 = arith.divf %186, %187 : vector<8x128xf32>
    %189 = arith.mulf %180, %133 : vector<8x128xf32>
    %190 = arith.mulf %174, %182 : vector<8x128xf32>
    %191 = arith.addf %189, %190 : vector<8x128xf32>
    %192 = math.tanh %191 : vector<8x128xf32>
    %193 = arith.mulf %188, %192 : vector<8x128xf32>
    %194 = vector.extract_strided_slice %165 {offsets = [0, 512], sizes = [8, 512], strides = [1, 1]} : vector<8x1024xf32> to vector<8x512xf32>
    %195 = vector.extract_strided_slice %194 {offsets = [0, 0], sizes = [8, 128], strides = [1, 1]} : vector<8x512xf32> to vector<8x128xf32>
    %196 = arith.negf %195 : vector<8x128xf32>
    %197 = math.exp %196 : vector<8x128xf32>
    %cst_48 = arith.constant 1.000000e+00 : f32
    %198 = vector.broadcast %cst_48 : f32 to vector<8x128xf32>
    %199 = arith.addf %198, %197 : vector<8x128xf32>
    %200 = arith.divf %198, %199 : vector<8x128xf32>
    %201 = vector.extract_strided_slice %194 {offsets = [0, 128], sizes = [8, 128], strides = [1, 1]} : vector<8x512xf32> to vector<8x128xf32>
    %202 = arith.negf %201 : vector<8x128xf32>
    %203 = math.exp %202 : vector<8x128xf32>
    %cst_49 = arith.constant 1.000000e+00 : f32
    %204 = vector.broadcast %cst_49 : f32 to vector<8x128xf32>
    %205 = arith.addf %204, %203 : vector<8x128xf32>
    %206 = arith.divf %204, %205 : vector<8x128xf32>
    %207 = vector.extract_strided_slice %194 {offsets = [0, 256], sizes = [8, 128], strides = [1, 1]} : vector<8x512xf32> to vector<8x128xf32>
    %208 = math.tanh %207 : vector<8x128xf32>
    %209 = vector.extract_strided_slice %194 {offsets = [0, 384], sizes = [8, 128], strides = [1, 1]} : vector<8x512xf32> to vector<8x128xf32>
    %210 = arith.negf %209 : vector<8x128xf32>
    %211 = math.exp %210 : vector<8x128xf32>
    %cst_50 = arith.constant 1.000000e+00 : f32
    %212 = vector.broadcast %cst_50 : f32 to vector<8x128xf32>
    %213 = arith.addf %212, %211 : vector<8x128xf32>
    %214 = arith.divf %212, %213 : vector<8x128xf32>
    %215 = arith.mulf %206, %159 : vector<8x128xf32>
    %216 = arith.mulf %200, %208 : vector<8x128xf32>
    %217 = arith.addf %215, %216 : vector<8x128xf32>
    %218 = math.tanh %217 : vector<8x128xf32>
    %219 = arith.mulf %214, %218 : vector<8x128xf32>
    %220 = tpu.concatenate %193, %219 in 1 : vector<8x128xf32>, vector<8x128xf32> -> vector<8x256xf32>
    %c0_51 = arith.constant 0 : index
    %c0_52 = arith.constant 0 : index
    %221 = vector.load %arg3[%c0_51, %c0_52] : memref<256x1024xf32, #tpu.memory_space<vmem>>, vector<256x1024xf32>
    %cst_53 = arith.constant dense<0.000000e+00> : vector<8x1024xf32>
    %222 = tpu.matmul %220, %221, %cst_53 {dimension_numbers = #tpu.dot_dimension_numbers<[1], [0], [0], [1], [0, 0, 1, 1], [], []>} : vector<8x256xf32>, vector<256x1024xf32>, vector<8x1024xf32> -> vector<8x1024xf32>
    %223 = arith.addf %222, %9 : vector<8x1024xf32>
    %224 = vector.extract_strided_slice %223 {offsets = [0, 0], sizes = [8, 512], strides = [1, 1]} : vector<8x1024xf32> to vector<8x512xf32>
    %c32 = arith.constant 32 : index
    %c0_54 = arith.constant 0 : index
    %225 = vector.load %arg8[%c32, %c0_54] : memref<64x512xf32, #tpu.memory_space<vmem>>, vector<8x512xf32>
    %226 = arith.addf %224, %225 : vector<8x512xf32>
    %227 = vector.extract_strided_slice %226 {offsets = [0, 0], sizes = [8, 128], strides = [1, 1]} : vector<8x512xf32> to vector<8x128xf32>
    %228 = arith.negf %227 : vector<8x128xf32>
    %229 = math.exp %228 : vector<8x128xf32>
    %cst_55 = arith.constant 1.000000e+00 : f32
    %230 = vector.broadcast %cst_55 : f32 to vector<8x128xf32>
    %231 = arith.addf %230, %229 : vector<8x128xf32>
    %232 = arith.divf %230, %231 : vector<8x128xf32>
    %233 = vector.extract_strided_slice %226 {offsets = [0, 128], sizes = [8, 128], strides = [1, 1]} : vector<8x512xf32> to vector<8x128xf32>
    %234 = arith.negf %233 : vector<8x128xf32>
    %235 = math.exp %234 : vector<8x128xf32>
    %cst_56 = arith.constant 1.000000e+00 : f32
    %236 = vector.broadcast %cst_56 : f32 to vector<8x128xf32>
    %237 = arith.addf %236, %235 : vector<8x128xf32>
    %238 = arith.divf %236, %237 : vector<8x128xf32>
    %239 = vector.extract_strided_slice %226 {offsets = [0, 256], sizes = [8, 128], strides = [1, 1]} : vector<8x512xf32> to vector<8x128xf32>
    %240 = math.tanh %239 : vector<8x128xf32>
    %241 = vector.extract_strided_slice %226 {offsets = [0, 384], sizes = [8, 128], strides = [1, 1]} : vector<8x512xf32> to vector<8x128xf32>
    %242 = arith.negf %241 : vector<8x128xf32>
    %243 = math.exp %242 : vector<8x128xf32>
    %cst_57 = arith.constant 1.000000e+00 : f32
    %244 = vector.broadcast %cst_57 : f32 to vector<8x128xf32>
    %245 = arith.addf %244, %243 : vector<8x128xf32>
    %246 = arith.divf %244, %245 : vector<8x128xf32>
    %247 = arith.mulf %238, %191 : vector<8x128xf32>
    %248 = arith.mulf %232, %240 : vector<8x128xf32>
    %249 = arith.addf %247, %248 : vector<8x128xf32>
    %250 = math.tanh %249 : vector<8x128xf32>
    %251 = arith.mulf %246, %250 : vector<8x128xf32>
    %252 = vector.extract_strided_slice %223 {offsets = [0, 512], sizes = [8, 512], strides = [1, 1]} : vector<8x1024xf32> to vector<8x512xf32>
    %253 = vector.extract_strided_slice %252 {offsets = [0, 0], sizes = [8, 128], strides = [1, 1]} : vector<8x512xf32> to vector<8x128xf32>
    %254 = arith.negf %253 : vector<8x128xf32>
    %255 = math.exp %254 : vector<8x128xf32>
    %cst_58 = arith.constant 1.000000e+00 : f32
    %256 = vector.broadcast %cst_58 : f32 to vector<8x128xf32>
    %257 = arith.addf %256, %255 : vector<8x128xf32>
    %258 = arith.divf %256, %257 : vector<8x128xf32>
    %259 = vector.extract_strided_slice %252 {offsets = [0, 128], sizes = [8, 128], strides = [1, 1]} : vector<8x512xf32> to vector<8x128xf32>
    %260 = arith.negf %259 : vector<8x128xf32>
    %261 = math.exp %260 : vector<8x128xf32>
    %cst_59 = arith.constant 1.000000e+00 : f32
    %262 = vector.broadcast %cst_59 : f32 to vector<8x128xf32>
    %263 = arith.addf %262, %261 : vector<8x128xf32>
    %264 = arith.divf %262, %263 : vector<8x128xf32>
    %265 = vector.extract_strided_slice %252 {offsets = [0, 256], sizes = [8, 128], strides = [1, 1]} : vector<8x512xf32> to vector<8x128xf32>
    %266 = math.tanh %265 : vector<8x128xf32>
    %267 = vector.extract_strided_slice %252 {offsets = [0, 384], sizes = [8, 128], strides = [1, 1]} : vector<8x512xf32> to vector<8x128xf32>
    %268 = arith.negf %267 : vector<8x128xf32>
    %269 = math.exp %268 : vector<8x128xf32>
    %cst_60 = arith.constant 1.000000e+00 : f32
    %270 = vector.broadcast %cst_60 : f32 to vector<8x128xf32>
    %271 = arith.addf %270, %269 : vector<8x128xf32>
    %272 = arith.divf %270, %271 : vector<8x128xf32>
    %273 = arith.mulf %264, %217 : vector<8x128xf32>
    %274 = arith.mulf %258, %266 : vector<8x128xf32>
    %275 = arith.addf %273, %274 : vector<8x128xf32>
    %276 = math.tanh %275 : vector<8x128xf32>
    %277 = arith.mulf %272, %276 : vector<8x128xf32>
    %c0_61 = arith.constant 0 : index
    %c0_62 = arith.constant 0 : index
    %278 = vector.load %arg9[%c0_61, %c0_62] : memref<40x128xf32, #tpu.memory_space<vmem>>, vector<8x128xf32>
    tpu.vector_store %arg9[%c0_61, %c0_62], %277 {strides = array<i32>} : memref<40x128xf32, #tpu.memory_space<vmem>>, vector<8x128xf32>,
    %279 = tpu.concatenate %251, %277 in 1 : vector<8x128xf32>, vector<8x128xf32> -> vector<8x256xf32>
    %c0_63 = arith.constant 0 : index
    %c0_64 = arith.constant 0 : index
    %280 = vector.load %arg3[%c0_63, %c0_64] : memref<256x1024xf32, #tpu.memory_space<vmem>>, vector<256x1024xf32>
    %cst_65 = arith.constant dense<0.000000e+00> : vector<8x1024xf32>
    %281 = tpu.matmul %279, %280, %cst_65 {dimension_numbers = #tpu.dot_dimension_numbers<[1], [0], [0], [1], [0, 0, 1, 1], [], []>} : vector<8x256xf32>, vector<256x1024xf32>, vector<8x1024xf32> -> vector<8x1024xf32>
    %282 = arith.addf %281, %9 : vector<8x1024xf32>
    %283 = vector.extract_strided_slice %282 {offsets = [0, 0], sizes = [8, 512], strides = [1, 1]} : vector<8x1024xf32> to vector<8x512xf32>
    %c40 = arith.constant 40 : index
    %c0_66 = arith.constant 0 : index
    %284 = vector.load %arg8[%c40, %c0_66] : memref<64x512xf32, #tpu.memory_space<vmem>>, vector<8x512xf32>
    %285 = arith.addf %283, %284 : vector<8x512xf32>
    %286 = vector.extract_strided_slice %285 {offsets = [0, 0], sizes = [8, 128], strides = [1, 1]} : vector<8x512xf32> to vector<8x128xf32>
    %287 = arith.negf %286 : vector<8x128xf32>
    %288 = math.exp %287 : vector<8x128xf32>
    %cst_67 = arith.constant 1.000000e+00 : f32
    %289 = vector.broadcast %cst_67 : f32 to vector<8x128xf32>
    %290 = arith.addf %289, %288 : vector<8x128xf32>
    %291 = arith.divf %289, %290 : vector<8x128xf32>
    %292 = vector.extract_strided_slice %285 {offsets = [0, 128], sizes = [8, 128], strides = [1, 1]} : vector<8x512xf32> to vector<8x128xf32>
    %293 = arith.negf %292 : vector<8x128xf32>
    %294 = math.exp %293 : vector<8x128xf32>
    %cst_68 = arith.constant 1.000000e+00 : f32
    %295 = vector.broadcast %cst_68 : f32 to vector<8x128xf32>
    %296 = arith.addf %295, %294 : vector<8x128xf32>
    %297 = arith.divf %295, %296 : vector<8x128xf32>
    %298 = vector.extract_strided_slice %285 {offsets = [0, 256], sizes = [8, 128], strides = [1, 1]} : vector<8x512xf32> to vector<8x128xf32>
    %299 = math.tanh %298 : vector<8x128xf32>
    %300 = vector.extract_strided_slice %285 {offsets = [0, 384], sizes = [8, 128], strides = [1, 1]} : vector<8x512xf32> to vector<8x128xf32>
    %301 = arith.negf %300 : vector<8x128xf32>
    %302 = math.exp %301 : vector<8x128xf32>
    %cst_69 = arith.constant 1.000000e+00 : f32
    %303 = vector.broadcast %cst_69 : f32 to vector<8x128xf32>
    %304 = arith.addf %303, %302 : vector<8x128xf32>
    %305 = arith.divf %303, %304 : vector<8x128xf32>
    %306 = arith.mulf %297, %249 : vector<8x128xf32>
    %307 = arith.mulf %291, %299 : vector<8x128xf32>
    %308 = arith.addf %306, %307 : vector<8x128xf32>
    %309 = math.tanh %308 : vector<8x128xf32>
    %310 = arith.mulf %305, %309 : vector<8x128xf32>
    %311 = vector.extract_strided_slice %282 {offsets = [0, 512], sizes = [8, 512], strides = [1, 1]} : vector<8x1024xf32> to vector<8x512xf32>
    %312 = vector.extract_strided_slice %311 {offsets = [0, 0], sizes = [8, 128], strides = [1, 1]} : vector<8x512xf32> to vector<8x128xf32>
    %313 = arith.negf %312 : vector<8x128xf32>
    %314 = math.exp %313 : vector<8x128xf32>
    %cst_70 = arith.constant 1.000000e+00 : f32
    %315 = vector.broadcast %cst_70 : f32 to vector<8x128xf32>
    %316 = arith.addf %315, %314 : vector<8x128xf32>
    %317 = arith.divf %315, %316 : vector<8x128xf32>
    %318 = vector.extract_strided_slice %311 {offsets = [0, 128], sizes = [8, 128], strides = [1, 1]} : vector<8x512xf32> to vector<8x128xf32>
    %319 = arith.negf %318 : vector<8x128xf32>
    %320 = math.exp %319 : vector<8x128xf32>
    %cst_71 = arith.constant 1.000000e+00 : f32
    %321 = vector.broadcast %cst_71 : f32 to vector<8x128xf32>
    %322 = arith.addf %321, %320 : vector<8x128xf32>
    %323 = arith.divf %321, %322 : vector<8x128xf32>
    %324 = vector.extract_strided_slice %311 {offsets = [0, 256], sizes = [8, 128], strides = [1, 1]} : vector<8x512xf32> to vector<8x128xf32>
    %325 = math.tanh %324 : vector<8x128xf32>
    %326 = vector.extract_strided_slice %311 {offsets = [0, 384], sizes = [8, 128], strides = [1, 1]} : vector<8x512xf32> to vector<8x128xf32>
    %327 = arith.negf %326 : vector<8x128xf32>
    %328 = math.exp %327 : vector<8x128xf32>
    %cst_72 = arith.constant 1.000000e+00 : f32
    %329 = vector.broadcast %cst_72 : f32 to vector<8x128xf32>
    %330 = arith.addf %329, %328 : vector<8x128xf32>
    %331 = arith.divf %329, %330 : vector<8x128xf32>
    %332 = arith.mulf %323, %275 : vector<8x128xf32>
    %333 = arith.mulf %317, %325 : vector<8x128xf32>
    %334 = arith.addf %332, %333 : vector<8x128xf32>
    %335 = math.tanh %334 : vector<8x128xf32>
    %336 = arith.mulf %331, %335 : vector<8x128xf32>
    %c8_73 = arith.constant 8 : index
    %c0_74 = arith.constant 0 : index
    %337 = vector.load %arg9[%c8_73, %c0_74] : memref<40x128xf32, #tpu.memory_space<vmem>>, vector<8x128xf32>
    tpu.vector_store %arg9[%c8_73, %c0_74], %336 {strides = array<i32>} : memref<40x128xf32, #tpu.memory_space<vmem>>, vector<8x128xf32>,
    %338 = tpu.concatenate %310, %336 in 1 : vector<8x128xf32>, vector<8x128xf32> -> vector<8x256xf32>
    %c0_75 = arith.constant 0 : index
    %c0_76 = arith.constant 0 : index
    %339 = vector.load %arg3[%c0_75, %c0_76] : memref<256x1024xf32, #tpu.memory_space<vmem>>, vector<256x1024xf32>
    %cst_77 = arith.constant dense<0.000000e+00> : vector<8x1024xf32>
    %340 = tpu.matmul %338, %339, %cst_77 {dimension_numbers = #tpu.dot_dimension_numbers<[1], [0], [0], [1], [0, 0, 1, 1], [], []>} : vector<8x256xf32>, vector<256x1024xf32>, vector<8x1024xf32> -> vector<8x1024xf32>
    %341 = arith.addf %340, %9 : vector<8x1024xf32>
    %342 = vector.extract_strided_slice %341 {offsets = [0, 0], sizes = [8, 512], strides = [1, 1]} : vector<8x1024xf32> to vector<8x512xf32>
    %c48 = arith.constant 48 : index
    %c0_78 = arith.constant 0 : index
    %343 = vector.load %arg8[%c48, %c0_78] : memref<64x512xf32, #tpu.memory_space<vmem>>, vector<8x512xf32>
    %344 = arith.addf %342, %343 : vector<8x512xf32>
    %345 = vector.extract_strided_slice %344 {offsets = [0, 0], sizes = [8, 128], strides = [1, 1]} : vector<8x512xf32> to vector<8x128xf32>
    %346 = arith.negf %345 : vector<8x128xf32>
    %347 = math.exp %346 : vector<8x128xf32>
    %cst_79 = arith.constant 1.000000e+00 : f32
    %348 = vector.broadcast %cst_79 : f32 to vector<8x128xf32>
    %349 = arith.addf %348, %347 : vector<8x128xf32>
    %350 = arith.divf %348, %349 : vector<8x128xf32>
    %351 = vector.extract_strided_slice %344 {offsets = [0, 128], sizes = [8, 128], strides = [1, 1]} : vector<8x512xf32> to vector<8x128xf32>
    %352 = arith.negf %351 : vector<8x128xf32>
    %353 = math.exp %352 : vector<8x128xf32>
    %cst_80 = arith.constant 1.000000e+00 : f32
    %354 = vector.broadcast %cst_80 : f32 to vector<8x128xf32>
    %355 = arith.addf %354, %353 : vector<8x128xf32>
    %356 = arith.divf %354, %355 : vector<8x128xf32>
    %357 = vector.extract_strided_slice %344 {offsets = [0, 256], sizes = [8, 128], strides = [1, 1]} : vector<8x512xf32> to vector<8x128xf32>
    %358 = math.tanh %357 : vector<8x128xf32>
    %359 = vector.extract_strided_slice %344 {offsets = [0, 384], sizes = [8, 128], strides = [1, 1]} : vector<8x512xf32> to vector<8x128xf32>
    %360 = arith.negf %359 : vector<8x128xf32>
    %361 = math.exp %360 : vector<8x128xf32>
    %cst_81 = arith.constant 1.000000e+00 : f32
    %362 = vector.broadcast %cst_81 : f32 to vector<8x128xf32>
    %363 = arith.addf %362, %361 : vector<8x128xf32>
    %364 = arith.divf %362, %363 : vector<8x128xf32>
    %365 = arith.mulf %356, %308 : vector<8x128xf32>
    %366 = arith.mulf %350, %358 : vector<8x128xf32>
    %367 = arith.addf %365, %366 : vector<8x128xf32>
    %368 = math.tanh %367 : vector<8x128xf32>
    %369 = arith.mulf %364, %368 : vector<8x128xf32>
    %370 = vector.extract_strided_slice %341 {offsets = [0, 512], sizes = [8, 512], strides = [1, 1]} : vector<8x1024xf32> to vector<8x512xf32>
    %371 = vector.extract_strided_slice %370 {offsets = [0, 0], sizes = [8, 128], strides = [1, 1]} : vector<8x512xf32> to vector<8x128xf32>
    %372 = arith.negf %371 : vector<8x128xf32>
    %373 = math.exp %372 : vector<8x128xf32>
    %cst_82 = arith.constant 1.000000e+00 : f32
    %374 = vector.broadcast %cst_82 : f32 to vector<8x128xf32>
    %375 = arith.addf %374, %373 : vector<8x128xf32>
    %376 = arith.divf %374, %375 : vector<8x128xf32>
    %377 = vector.extract_strided_slice %370 {offsets = [0, 128], sizes = [8, 128], strides = [1, 1]} : vector<8x512xf32> to vector<8x128xf32>
    %378 = arith.negf %377 : vector<8x128xf32>
    %379 = math.exp %378 : vector<8x128xf32>
    %cst_83 = arith.constant 1.000000e+00 : f32
    %380 = vector.broadcast %cst_83 : f32 to vector<8x128xf32>
    %381 = arith.addf %380, %379 : vector<8x128xf32>
    %382 = arith.divf %380, %381 : vector<8x128xf32>
    %383 = vector.extract_strided_slice %370 {offsets = [0, 256], sizes = [8, 128], strides = [1, 1]} : vector<8x512xf32> to vector<8x128xf32>
    %384 = math.tanh %383 : vector<8x128xf32>
    %385 = vector.extract_strided_slice %370 {offsets = [0, 384], sizes = [8, 128], strides = [1, 1]} : vector<8x512xf32> to vector<8x128xf32>
    %386 = arith.negf %385 : vector<8x128xf32>
    %387 = math.exp %386 : vector<8x128xf32>
    %cst_84 = arith.constant 1.000000e+00 : f32
    %388 = vector.broadcast %cst_84 : f32 to vector<8x128xf32>
    %389 = arith.addf %388, %387 : vector<8x128xf32>
    %390 = arith.divf %388, %389 : vector<8x128xf32>
    %391 = arith.mulf %382, %334 : vector<8x128xf32>
    %392 = arith.mulf %376, %384 : vector<8x128xf32>
    %393 = arith.addf %391, %392 : vector<8x128xf32>
    %394 = math.tanh %393 : vector<8x128xf32>
    %395 = arith.mulf %390, %394 : vector<8x128xf32>
    %c16_85 = arith.constant 16 : index
    %c0_86 = arith.constant 0 : index
    %396 = vector.load %arg9[%c16_85, %c0_86] : memref<40x128xf32, #tpu.memory_space<vmem>>, vector<8x128xf32>
    tpu.vector_store %arg9[%c16_85, %c0_86], %395 {strides = array<i32>} : memref<40x128xf32, #tpu.memory_space<vmem>>, vector<8x128xf32>,
    %397 = tpu.concatenate %369, %395 in 1 : vector<8x128xf32>, vector<8x128xf32> -> vector<8x256xf32>
    %c0_87 = arith.constant 0 : index
    %c0_88 = arith.constant 0 : index
    %398 = vector.load %arg3[%c0_87, %c0_88] : memref<256x1024xf32, #tpu.memory_space<vmem>>, vector<256x1024xf32>
    %cst_89 = arith.constant dense<0.000000e+00> : vector<8x1024xf32>
    %399 = tpu.matmul %397, %398, %cst_89 {dimension_numbers = #tpu.dot_dimension_numbers<[1], [0], [0], [1], [0, 0, 1, 1], [], []>} : vector<8x256xf32>, vector<256x1024xf32>, vector<8x1024xf32> -> vector<8x1024xf32>
    %400 = arith.addf %399, %9 : vector<8x1024xf32>
    %401 = vector.extract_strided_slice %400 {offsets = [0, 0], sizes = [8, 512], strides = [1, 1]} : vector<8x1024xf32> to vector<8x512xf32>
    %c56 = arith.constant 56 : index
    %c0_90 = arith.constant 0 : index
    %402 = vector.load %arg8[%c56, %c0_90] : memref<64x512xf32, #tpu.memory_space<vmem>>, vector<8x512xf32>
    %403 = arith.addf %401, %402 : vector<8x512xf32>
    %404 = vector.extract_strided_slice %403 {offsets = [0, 0], sizes = [8, 128], strides = [1, 1]} : vector<8x512xf32> to vector<8x128xf32>
    %405 = arith.negf %404 : vector<8x128xf32>
    %406 = math.exp %405 : vector<8x128xf32>
    %cst_91 = arith.constant 1.000000e+00 : f32
    %407 = vector.broadcast %cst_91 : f32 to vector<8x128xf32>
    %408 = arith.addf %407, %406 : vector<8x128xf32>
    %409 = arith.divf %407, %408 : vector<8x128xf32>
    %410 = vector.extract_strided_slice %403 {offsets = [0, 128], sizes = [8, 128], strides = [1, 1]} : vector<8x512xf32> to vector<8x128xf32>
    %411 = arith.negf %410 : vector<8x128xf32>
    %412 = math.exp %411 : vector<8x128xf32>
    %cst_92 = arith.constant 1.000000e+00 : f32
    %413 = vector.broadcast %cst_92 : f32 to vector<8x128xf32>
    %414 = arith.addf %413, %412 : vector<8x128xf32>
    %415 = arith.divf %413, %414 : vector<8x128xf32>
    %416 = vector.extract_strided_slice %403 {offsets = [0, 256], sizes = [8, 128], strides = [1, 1]} : vector<8x512xf32> to vector<8x128xf32>
    %417 = math.tanh %416 : vector<8x128xf32>
    %418 = vector.extract_strided_slice %403 {offsets = [0, 384], sizes = [8, 128], strides = [1, 1]} : vector<8x512xf32> to vector<8x128xf32>
    %419 = arith.negf %418 : vector<8x128xf32>
    %420 = math.exp %419 : vector<8x128xf32>
    %cst_93 = arith.constant 1.000000e+00 : f32
    %421 = vector.broadcast %cst_93 : f32 to vector<8x128xf32>
    %422 = arith.addf %421, %420 : vector<8x128xf32>
    %423 = arith.divf %421, %422 : vector<8x128xf32>
    %424 = arith.mulf %415, %367 : vector<8x128xf32>
    %425 = arith.mulf %409, %417 : vector<8x128xf32>
    %426 = arith.addf %424, %425 : vector<8x128xf32>
    %427 = math.tanh %426 : vector<8x128xf32>
    %428 = arith.mulf %423, %427 : vector<8x128xf32>
    %429 = vector.extract_strided_slice %400 {offsets = [0, 512], sizes = [8, 512], strides = [1, 1]} : vector<8x1024xf32> to vector<8x512xf32>
    %430 = vector.extract_strided_slice %429 {offsets = [0, 0], sizes = [8, 128], strides = [1, 1]} : vector<8x512xf32> to vector<8x128xf32>
    %431 = arith.negf %430 : vector<8x128xf32>
    %432 = math.exp %431 : vector<8x128xf32>
    %cst_94 = arith.constant 1.000000e+00 : f32
    %433 = vector.broadcast %cst_94 : f32 to vector<8x128xf32>
    %434 = arith.addf %433, %432 : vector<8x128xf32>
    %435 = arith.divf %433, %434 : vector<8x128xf32>
    %436 = vector.extract_strided_slice %429 {offsets = [0, 128], sizes = [8, 128], strides = [1, 1]} : vector<8x512xf32> to vector<8x128xf32>
    %437 = arith.negf %436 : vector<8x128xf32>
    %438 = math.exp %437 : vector<8x128xf32>
    %cst_95 = arith.constant 1.000000e+00 : f32
    %439 = vector.broadcast %cst_95 : f32 to vector<8x128xf32>
    %440 = arith.addf %439, %438 : vector<8x128xf32>
    %441 = arith.divf %439, %440 : vector<8x128xf32>
    %442 = vector.extract_strided_slice %429 {offsets = [0, 256], sizes = [8, 128], strides = [1, 1]} : vector<8x512xf32> to vector<8x128xf32>
    %443 = math.tanh %442 : vector<8x128xf32>
    %444 = vector.extract_strided_slice %429 {offsets = [0, 384], sizes = [8, 128], strides = [1, 1]} : vector<8x512xf32> to vector<8x128xf32>
    %445 = arith.negf %444 : vector<8x128xf32>
    %446 = math.exp %445 : vector<8x128xf32>
    %cst_96 = arith.constant 1.000000e+00 : f32
    %447 = vector.broadcast %cst_96 : f32 to vector<8x128xf32>
    %448 = arith.addf %447, %446 : vector<8x128xf32>
    %449 = arith.divf %447, %448 : vector<8x128xf32>
    %450 = arith.mulf %441, %393 : vector<8x128xf32>
    %451 = arith.mulf %435, %443 : vector<8x128xf32>
    %452 = arith.addf %450, %451 : vector<8x128xf32>
    %453 = math.tanh %452 : vector<8x128xf32>
    %454 = arith.mulf %449, %453 : vector<8x128xf32>
    %c24_97 = arith.constant 24 : index
    %c0_98 = arith.constant 0 : index
    %455 = vector.load %arg9[%c24_97, %c0_98] : memref<40x128xf32, #tpu.memory_space<vmem>>, vector<8x128xf32>
    tpu.vector_store %arg9[%c24_97, %c0_98], %454 {strides = array<i32>} : memref<40x128xf32, #tpu.memory_space<vmem>>, vector<8x128xf32>,
    %456 = tpu.concatenate %428, %454 in 1 : vector<8x128xf32>, vector<8x128xf32> -> vector<8x256xf32>
    %c0_99 = arith.constant 0 : index
    %c0_100 = arith.constant 0 : index
    %457 = vector.load %arg3[%c0_99, %c0_100] : memref<256x1024xf32, #tpu.memory_space<vmem>>, vector<256x1024xf32>
    %cst_101 = arith.constant dense<0.000000e+00> : vector<8x1024xf32>
    %458 = tpu.matmul %456, %457, %cst_101 {dimension_numbers = #tpu.dot_dimension_numbers<[1], [0], [0], [1], [0, 0, 1, 1], [], []>} : vector<8x256xf32>, vector<256x1024xf32>, vector<8x1024xf32> -> vector<8x1024xf32>
    %459 = arith.addf %458, %9 : vector<8x1024xf32>
    %460 = vector.extract_strided_slice %459 {offsets = [0, 512], sizes = [8, 512], strides = [1, 1]} : vector<8x1024xf32> to vector<8x512xf32>
    %461 = vector.extract_strided_slice %460 {offsets = [0, 0], sizes = [8, 128], strides = [1, 1]} : vector<8x512xf32> to vector<8x128xf32>
    %462 = arith.negf %461 : vector<8x128xf32>
    %463 = math.exp %462 : vector<8x128xf32>
    %cst_102 = arith.constant 1.000000e+00 : f32
    %464 = vector.broadcast %cst_102 : f32 to vector<8x128xf32>
    %465 = arith.addf %464, %463 : vector<8x128xf32>
    %466 = arith.divf %464, %465 : vector<8x128xf32>
    %467 = vector.extract_strided_slice %460 {offsets = [0, 128], sizes = [8, 128], strides = [1, 1]} : vector<8x512xf32> to vector<8x128xf32>
    %468 = arith.negf %467 : vector<8x128xf32>
    %469 = math.exp %468 : vector<8x128xf32>
    %cst_103 = arith.constant 1.000000e+00 : f32
    %470 = vector.broadcast %cst_103 : f32 to vector<8x128xf32>
    %471 = arith.addf %470, %469 : vector<8x128xf32>
    %472 = arith.divf %470, %471 : vector<8x128xf32>
    %473 = vector.extract_strided_slice %460 {offsets = [0, 256], sizes = [8, 128], strides = [1, 1]} : vector<8x512xf32> to vector<8x128xf32>
    %474 = math.tanh %473 : vector<8x128xf32>
    %475 = vector.extract_strided_slice %460 {offsets = [0, 384], sizes = [8, 128], strides = [1, 1]} : vector<8x512xf32> to vector<8x128xf32>
    %476 = arith.negf %475 : vector<8x128xf32>
    %477 = math.exp %476 : vector<8x128xf32>
    %cst_104 = arith.constant 1.000000e+00 : f32
    %478 = vector.broadcast %cst_104 : f32 to vector<8x128xf32>
    %479 = arith.addf %478, %477 : vector<8x128xf32>
    %480 = arith.divf %478, %479 : vector<8x128xf32>
    %481 = arith.mulf %472, %452 : vector<8x128xf32>
    %482 = arith.mulf %466, %474 : vector<8x128xf32>
    %483 = arith.addf %481, %482 : vector<8x128xf32>
    %484 = math.tanh %483 : vector<8x128xf32>
    %485 = arith.mulf %480, %484 : vector<8x128xf32>
    %c32_105 = arith.constant 32 : index
    %c0_106 = arith.constant 0 : index
    %486 = vector.load %arg9[%c32_105, %c0_106] : memref<40x128xf32, #tpu.memory_space<vmem>>, vector<8x128xf32>
    tpu.vector_store %arg9[%c32_105, %c0_106], %485 {strides = array<i32>} : memref<40x128xf32, #tpu.memory_space<vmem>>, vector<8x128xf32>,
    %c0_107 = arith.constant 0 : index
    %c0_108 = arith.constant 0 : index
    %487 = vector.load %arg9[%c0_107, %c0_108] : memref<40x128xf32, #tpu.memory_space<vmem>>, vector<40x128xf32>
    %c0_109 = arith.constant 0 : index
    %c0_110 = arith.constant 0 : index
    %488 = vector.load %arg5[%c0_109, %c0_110] : memref<128x128xf32, #tpu.memory_space<vmem>>, vector<128x128xf32>
    %cst_111 = arith.constant dense<0.000000e+00> : vector<40x128xf32>
    %489 = tpu.matmul %487, %488, %cst_111 {dimension_numbers = #tpu.dot_dimension_numbers<[1], [0], [0], [1], [0, 0, 1, 1], [], []>} : vector<40x128xf32>, vector<128x128xf32>, vector<40x128xf32> -> vector<40x128xf32>
    %c0_112 = arith.constant 0 : index
    %c0_113 = arith.constant 0 : index
    %490 = vector.load %arg6[%c0_112, %c0_113] : memref<1x128xf32, #tpu.memory_space<vmem>>, vector<1x128xf32>
    %491 = vector.broadcast %490 : vector<1x128xf32> to vector<40x128xf32>
    %492 = arith.addf %489, %491 : vector<40x128xf32>
    %c0_114 = arith.constant 0 : index
    %c0_115 = arith.constant 0 : index
    %493 = vector.load %arg7[%c0_114, %c0_115] : memref<40x128xf32, #tpu.memory_space<vmem>>, vector<40x128xf32>
    tpu.vector_store %arg7[%c0_114, %c0_115], %492 {strides = array<i32>} : memref<40x128xf32, #tpu.memory_space<vmem>>, vector<40x128xf32>,
    return
  }
}

</mosaic_0001>

<llo_original>
// kernel: tpu_custom_call.1
$region0: #{tpu_custom_call.1}
  #allocation0 [shape = 'u32[]', space=smem, size = 0x4, offset = 0x4, fixed_abs, tag = 'smem constant byte address 0x4 - core index']
  #allocation1 [shape = 'u32[144,128]{1,0:T(1,128)}', space=vmem, size = 0x12000, scoped, tag = 'internal scratch']
  #allocation2 [shape = 'f32[64,512]{1,0:T(8,128)}', space=vmem, size = 0x20000, scoped, tag = 'scratch operand']
  #allocation3 [shape = 'f32[40,128]{1,0:T(8,128)}', space=vmem, size = 0x5000, scoped, tag = 'scratch operand']
  %s0 = inlined_call_operand.vmem [shape: f32[64,8], index: 0, kind: input, shape index: {}]
  %s1 = inlined_call_operand.vmem [shape: f32[8,512], index: 1, kind: input, shape index: {}]
  %s2 = inlined_call_operand.vmem [shape: f32[1,512], index: 2, kind: input, shape index: {}]
  %s3 = inlined_call_operand.hbm [shape: f32[256,1024], index: 3, kind: input, shape index: {}]
  %s4 = inlined_call_operand.vmem [shape: f32[1,1024], index: 4, kind: input, shape index: {}]
  %s5 = inlined_call_operand.hbm [shape: f32[128,128], index: 5, kind: input, shape index: {}]
  %s6 = inlined_call_operand.vmem [shape: f32[1,128], index: 6, kind: input, shape index: {}]
  %s7 = inlined_call_operand.hbm [shape: f32[40,128], index: 7, kind: output, shape index: {}]
  %s8 = sld [smem:[#allocation0]]
  $region46: #{tpu_custom_call.1} parent=0
    _
  %s10 = ssub.s32 1, %s8
  %s11 = scalar_select 0, %s10, %s8
  $region1: #{tpu_custom_call.1} parent=0
    #allocation4 [shape = 'u8[1048576]{0}', space=vmem, size = 0x100000, scoped, tag = 'input window, operand 3, single buffered']
    #allocation5 [shape = 's32[1]{0}', space=sflag, size = 0x4, scoped, tag = 'scoped memory for tpu_custom_call.1']
    #allocation6 [shape = 's32[1]{0}', space=sflag, size = 0x4, scoped, tag = 'scoped memory for tpu_custom_call.1']
    #allocation7 [shape = 'u8[65536]{0}', space=vmem, size = 0x10000, scoped, tag = 'input window, operand 5, single buffered']
    #allocation8 [shape = 's32[1]{0}', space=sflag, size = 0x4, scoped, tag = 'scoped memory for tpu_custom_call.1']
    #allocation9 [shape = 'u8[20480]{0}', space=vmem, size = 0x5000, scoped, tag = 'output window, operand 0, single buffered']
    %12 = vsyncpa [#allocation5], 0
    %13 = vsyncpa [#allocation8], 0
    %14 = vsyncpa [#allocation6], 0
    // Predicated region
    $region2: #{tpu_custom_call.1} parent=1 // pred_check
      _
    $region3: #{tpu_custom_call.1} parent=1 // pred_check_branch
      %16 = sbr.rel (0) target = $region5
    $region4: #{tpu_custom_call.1} parent=1 // pred_region
      _
    $region5: #{tpu_custom_call.1} parent=1 // pred_fallthru
      _
    // Predicated region
    $region6: #{tpu_custom_call.1} parent=1 // pred_check
      _
    $region7: #{tpu_custom_call.1} parent=1 // pred_check_branch
      %18 = sbr.rel (0) target = $region9
    $region8: #{tpu_custom_call.1} parent=1 // pred_region
      _
    $region9: #{tpu_custom_call.1} parent=1 // pred_fallthru
      _
    // Predicated region
    $region10: #{tpu_custom_call.1} parent=1 // pred_check
      _
    $region11: #{tpu_custom_call.1} parent=1 // pred_check_branch
      %20 = sbr.rel (0) target = $region13
    $region12: #{tpu_custom_call.1} parent=1 // pred_region
      _
    $region13: #{tpu_custom_call.1} parent=1 // pred_fallthru
      _
    // Predicated region
    $region14: #{tpu_custom_call.1} parent=1 // pred_check
      _
    $region15: #{tpu_custom_call.1} parent=1 // pred_check_branch
      %22 = sbr.rel (0) target = $region17
    $region16: #{tpu_custom_call.1} parent=1 // pred_region
      %s24 = ssub.s32 32768, 32768
      %25 = vsyncadd [#allocation5], %s24
      %s26 = sshll.u32 [#allocation4], 4
      %s27 = int_to_ptr.vmem [resolvable:$true] %s26
      %32 = dma.hbm_to_vmem [thread:$0]  %s3, 32768, %s27, [#allocation5], 1024, 1024, 64
    $region17: #{tpu_custom_call.1} parent=1 // pred_fallthru
      _
    // Predicated region
    $region18: #{tpu_custom_call.1} parent=1 // pred_check
      _
    $region19: #{tpu_custom_call.1} parent=1 // pred_check_branch
      %34 = sbr.rel (0) target = $region21
    $region20: #{tpu_custom_call.1} parent=1 // pred_region
      _
    $region21: #{tpu_custom_call.1} parent=1 // pred_fallthru
      _
    // Predicated region
    $region22: #{tpu_custom_call.1} parent=1 // pred_check
      _
    $region23: #{tpu_custom_call.1} parent=1 // pred_check_branch
      %36 = sbr.rel (0) target = $region25
    $region24: #{tpu_custom_call.1} parent=1 // pred_region
      %s38 = ssub.s32 2048, 2048
      %39 = vsyncadd [#allocation8], %s38
      %s40 = sshll.u32 [#allocation7], 4
      %s41 = int_to_ptr.vmem [resolvable:$true] %s40
      %46 = dma.hbm_to_vmem [thread:$0]  %s5, 2048, %s41, [#allocation8], 128, 128, 8
    $region25: #{tpu_custom_call.1} parent=1 // pred_fallthru
      _
    // Predicated region
    $region26: #{tpu_custom_call.1} parent=1 // pred_check
      _
    $region27: #{tpu_custom_call.1} parent=1 // pred_check_branch
      %48 = sbr.rel (0) target = $region29
    $region28: #{tpu_custom_call.1} parent=1 // pred_region
      _
    $region29: #{tpu_custom_call.1} parent=1 // pred_fallthru
      _
    // Predicated region
    $region30: #{tpu_custom_call.1} parent=1 // pred_check
      _
    $region31: #{tpu_custom_call.1} parent=1 // pred_check_branch
      %50 = sbr.rel (0) target = $region33
    $region32: #{tpu_custom_call.1} parent=1 // pred_region
      %51 = dma.done [#allocation5], 32768
    $region33: #{tpu_custom_call.1} parent=1 // pred_fallthru
      _
    // Predicated region
    $region34: #{tpu_custom_call.1} parent=1 // pred_check
      _
    $region35: #{tpu_custom_call.1} parent=1 // pred_check_branch
      %53 = sbr.rel (0) target = $region37
    $region36: #{tpu_custom_call.1} parent=1 // pred_region
      %54 = dma.done [#allocation8], 2048
    $region37: #{tpu_custom_call.1} parent=1 // pred_fallthru
      _
    %v55 = vld [vmem:[%s0] sm:$0xff]
    %v56 = vld [vmem:[%s0 + $0x8] sm:$0xff]
    %v57 = vld [vmem:[%s0 + $0x10] sm:$0xff]
    %v58 = vld [vmem:[%s0 + $0x18] sm:$0xff]
    %v59 = vld [vmem:[%s0 + $0x20] sm:$0xff]
    %v60 = vld [vmem:[%s0 + $0x28] sm:$0xff]
    %v61 = vld [vmem:[%s0 + $0x30] sm:$0xff]
    %v62 = vld [vmem:[%s0 + $0x38] sm:$0xff]
    %v63 = vld [vmem:[%s1] sm:$0xff]
    %v64 = vld [vmem:[%s1 + $0x8] sm:$0xff]
    %v65 = vld [vmem:[%s1 + $0x10] sm:$0xff]
    %v66 = vld [vmem:[%s1 + $0x18] sm:$0xff]
    %v67 = vld [vmem:[%s2] sm:$0xf]
    %v69 = vlaneseq
    %v70 = vshrl.u32 %v69, 7
    %v71 = vsub.s32 0, %v70
    %v72 = vrot.slane %v67, %v71
    %v73 = vlaneseq
    %v74 = vshrl.u32 %v73, 7
    %v75 = vsub.s32 1, %v74
    %v76 = vrot.slane %v67, %v75
    %v77 = vlaneseq
    %v78 = vshrl.u32 %v77, 7
    %v79 = vsub.s32 2, %v78
    %v80 = vrot.slane %v67, %v79
    %v81 = vlaneseq
    %v82 = vshrl.u32 %v81, 7
    %v83 = vsub.s32 3, %v82
    %v84 = vrot.slane %v67, %v83
    %vm89 = vcmask 64512
    %v91 = vsel %vm89, %v55, 0
    %v94 = vsel %vm89, %v56, 0
    %v97 = vsel %vm89, %v57, 0
    %v100 = vsel %vm89, %v58, 0
    %v103 = vsel %vm89, %v59, 0
    %v106 = vsel %vm89, %v60, 0
    %v109 = vsel %vm89, %v61, 0
    %v112 = vsel %vm89, %v62, 0
    %114 = vmatprep.subr.mxu0 %v64
    %115 = vmatpush1.msra.mxu0 %v63
    %116 = vmatprep.subr.mxu0 0.0
    %117 = vmatpush1.msra.mxu0 0.0
    %118 = vmatprep.subr.mxu0 0.0
    %119 = vmatpush1.msra.mxu0 0.0
    %120 = vmatprep.subr.mxu0 0.0
    %121 = vmatpush1.msra.mxu0 0.0
    %122 = vmatprep.subr.mxu0 0.0
    %123 = vmatpush1.msra.mxu0 0.0
    %124 = vmatprep.subr.mxu0 0.0
    %125 = vmatpush1.msra.mxu0 0.0
    %126 = vmatprep.subr.mxu0 0.0
    %127 = vmatpush1.msra.mxu0 0.0
    %128 = vmatprep.subr.mxu0 0.0
    %129 = vmatpush1.msra.mxu0 0.0
    %130 = vmatprep.subr.mxu0 0.0
    %131 = vmatpush1.msra.mxu0 0.0
    %132 = vmatprep.subr.mxu0 0.0
    %133 = vmatpush1.msra.mxu0 0.0
    %134 = vmatprep.subr.mxu0 0.0
    %135 = vmatpush1.msra.mxu0 0.0
    %136 = vmatprep.subr.mxu0 0.0
    %137 = vmatpush1.msra.mxu0 0.0
    %138 = vmatprep.subr.mxu0 0.0
    %139 = vmatpush1.msra.mxu0 0.0
    %140 = vmatprep.subr.mxu0 0.0
    %141 = vmatpush1.msra.mxu0 0.0
    %142 = vmatprep.subr.mxu0 0.0
    %143 = vmatpush1.msra.mxu0 0.0
    %144 = vmatprep.subr.mxu0 0.0
    %145 = vmatpush1.msra.mxu0 0.0
    %146 = vmatprep.subr.mxu0 0.0
    %147 = vmatpush1.msra.mxu0 0.0
    %148 = vmatprep.subr.mxu0 0.0
    %149 = vmatpush1.msra.mxu0 0.0
    %150 = vmatprep.subr.mxu0 0.0
    %151 = vmatpush1.msra.mxu0 0.0
    %152 = vmatprep.subr.mxu0 0.0
    %153 = vmatpush1.msra.mxu0 0.0
    %154 = vmatprep.subr.mxu0 0.0
    %155 = vmatpush1.msra.mxu0 0.0
    %156 = vmatprep.subr.mxu0 0.0
    %157 = vmatpush1.msra.mxu0 0.0
    %158 = vmatprep.subr.mxu0 0.0
    %159 = vmatpush1.msra.mxu0 0.0
    %160 = vmatprep.subr.mxu0 0.0
    %161 = vmatpush1.msra.mxu0 0.0
    %162 = vmatprep.subr.mxu0 0.0
    %163 = vmatpush1.msra.mxu0 0.0
    %164 = vmatprep.subr.mxu0 0.0
    %165 = vmatpush1.msra.mxu0 0.0
    %166 = vmatprep.subr.mxu0 0.0
    %167 = vmatpush1.msra.mxu0 0.0
    %168 = vmatprep.subr.mxu0 0.0
    %169 = vmatpush1.msra.mxu0 0.0
    %170 = vmatprep.subr.mxu0 0.0
    %171 = vmatpush1.msra.mxu0 0.0
    %172 = vmatprep.subr.mxu0 0.0
    %173 = vmatpush1.msra.mxu0 0.0
    %174 = vmatprep.subr.mxu0 0.0
    %175 = vmatpush1.msra.mxu0 0.0
    %176 = vmatprep.subr.mxu0 0.0
    %177 = vmatpush1.msra.mxu0 0.0
    %178 = vmatprep.mubr.f32.mxu0 0.0
    %179 = vmatmul.mubr.f32.gmra.mrb[0].mxu0 %v91
    %v180 = vpop.f32.mrb[0].mxu0
    %v181 = vadd.f32 %v72, %v180
    %v182 = vpop.f32.mrb[0].mxu0
    %v183 = vadd.f32 %v76, %v182
    %184 = vmatprep.mubr.f32.mxu0 0.0
    %185 = vmatmul.mubr.f32.gmra.mrb[0].mxu0 %v94
    %v186 = vpop.f32.mrb[0].mxu0
    %v187 = vadd.f32 %v72, %v186
    %v188 = vpop.f32.mrb[0].mxu0
    %v189 = vadd.f32 %v76, %v188
    %190 = vmatprep.mubr.f32.mxu0 0.0
    %191 = vmatmul.mubr.f32.gmra.mrb[0].mxu0 %v97
    %v192 = vpop.f32.mrb[0].mxu0
    %v193 = vadd.f32 %v72, %v192
    %v194 = vpop.f32.mrb[0].mxu0
    %v195 = vadd.f32 %v76, %v194
    %196 = vmatprep.mubr.f32.mxu0 0.0
    %197 = vmatmul.mubr.f32.gmra.mrb[0].mxu0 %v100
    %v198 = vpop.f32.mrb[0].mxu0
    %v199 = vadd.f32 %v72, %v198
    %v200 = vpop.f32.mrb[0].mxu0
    %v201 = vadd.f32 %v76, %v200
    %202 = vmatprep.mubr.f32.mxu0 0.0
    %203 = vmatmul.mubr.f32.gmra.mrb[0].mxu0 %v103
    %v204 = vpop.f32.mrb[0].mxu0
    %v205 = vadd.f32 %v72, %v204
    %v206 = vpop.f32.mrb[0].mxu0
    %v207 = vadd.f32 %v76, %v206
    %208 = vmatprep.mubr.f32.mxu0 0.0
    %209 = vmatmul.mubr.f32.gmra.mrb[0].mxu0 %v106
    %v210 = vpop.f32.mrb[0].mxu0
    %v211 = vadd.f32 %v72, %v210
    %v212 = vpop.f32.mrb[0].mxu0
    %v213 = vadd.f32 %v76, %v212
    %214 = vmatprep.mubr.f32.mxu0 0.0
    %215 = vmatmul.mubr.f32.gmra.mrb[0].mxu0 %v109
    %v216 = vpop.f32.mrb[0].mxu0
    %v217 = vadd.f32 %v72, %v216
    %v218 = vpop.f32.mrb[0].mxu0
    %v219 = vadd.f32 %v76, %v218
    %220 = vmatprep.mubr.f32.mxu0 0.0
    %221 = vmatmul.mubr.f32.gmra.mrb[0].mxu0 %v112
    %v222 = vpop.f32.mrb[0].mxu0
    %v223 = vadd.f32 %v72, %v222
    %v224 = vpop.f32.mrb[0].mxu0
    %v225 = vadd.f32 %v76, %v224
    %226 = vdwg.mxu0
    %227 = vmatprep.subr.mxu0 %v66
    %228 = vmatpush1.msra.mxu0 %v65
    %229 = vmatprep.subr.mxu0 0.0
    %230 = vmatpush1.msra.mxu0 0.0
    %231 = vmatprep.subr.mxu0 0.0
    %232 = vmatpush1.msra.mxu0 0.0
    %233 = vmatprep.subr.mxu0 0.0
    %234 = vmatpush1.msra.mxu0 0.0
    %235 = vmatprep.subr.mxu0 0.0
    %236 = vmatpush1.msra.mxu0 0.0
    %237 = vmatprep.subr.mxu0 0.0
    %238 = vmatpush1.msra.mxu0 0.0
    %239 = vmatprep.subr.mxu0 0.0
    %240 = vmatpush1.msra.mxu0 0.0
    %241 = vmatprep.subr.mxu0 0.0
    %242 = vmatpush1.msra.mxu0 0.0
    %243 = vmatprep.subr.mxu0 0.0
    %244 = vmatpush1.msra.mxu0 0.0
    %245 = vmatprep.subr.mxu0 0.0
    %246 = vmatpush1.msra.mxu0 0.0
    %247 = vmatprep.subr.mxu0 0.0
    %248 = vmatpush1.msra.mxu0 0.0
    %249 = vmatprep.subr.mxu0 0.0
    %250 = vmatpush1.msra.mxu0 0.0
    %251 = vmatprep.subr.mxu0 0.0
    %252 = vmatpush1.msra.mxu0 0.0
    %253 = vmatprep.subr.mxu0 0.0
    %254 = vmatpush1.msra.mxu0 0.0
    %255 = vmatprep.subr.mxu0 0.0
    %256 = vmatpush1.msra.mxu0 0.0
    %257 = vmatprep.subr.mxu0 0.0
    %258 = vmatpush1.msra.mxu0 0.0
    %259 = vmatprep.subr.mxu0 0.0
    %260 = vmatpush1.msra.mxu0 0.0
    %261 = vmatprep.subr.mxu0 0.0
    %262 = vmatpush1.msra.mxu0 0.0
    %263 = vmatprep.subr.mxu0 0.0
    %264 = vmatpush1.msra.mxu0 0.0
    %265 = vmatprep.subr.mxu0 0.0
    %266 = vmatpush1.msra.mxu0 0.0
    %267 = vmatprep.subr.mxu0 0.0
    %268 = vmatpush1.msra.mxu0 0.0
    %269 = vmatprep.subr.mxu0 0.0
    %270 = vmatpush1.msra.mxu0 0.0
    %271 = vmatprep.subr.mxu0 0.0
    %272 = vmatpush1.msra.mxu0 0.0
    %273 = vmatprep.subr.mxu0 0.0
    %274 = vmatpush1.msra.mxu0 0.0
    %275 = vmatprep.subr.mxu0 0.0
    %276 = vmatpush1.msra.mxu0 0.0
    %277 = vmatprep.subr.mxu0 0.0
    %278 = vmatpush1.msra.mxu0 0.0
    %279 = vmatprep.subr.mxu0 0.0
    %280 = vmatpush1.msra.mxu0 0.0
    %281 = vmatprep.subr.mxu0 0.0
    %282 = vmatpush1.msra.mxu0 0.0
    %283 = vmatprep.subr.mxu0 0.0
    %284 = vmatpush1.msra.mxu0 0.0
    %285 = vmatprep.subr.mxu0 0.0
    %286 = vmatpush1.msra.mxu0 0.0
    %287 = vmatprep.subr.mxu0 0.0
    %288 = vmatpush1.msra.mxu0 0.0
    %289 = vmatprep.subr.mxu0 0.0
    %290 = vmatpush1.msra.mxu0 0.0
    %291 = vmatprep.mubr.f32.mxu0 0.0
    %292 = vmatmul.mubr.f32.gmra.mrb[0].mxu0 %v91
    %v293 = vpop.f32.mrb[0].mxu0
    %v294 = vadd.f32 %v80, %v293
    %v295 = vpop.f32.mrb[0].mxu0
    %v296 = vadd.f32 %v84, %v295
    %297 = vmatprep.mubr.f32.mxu0 0.0
    %298 = vmatmul.mubr.f32.gmra.mrb[0].mxu0 %v94
    %v299 = vpop.f32.mrb[0].mxu0
    %v300 = vadd.f32 %v80, %v299
    %v301 = vpop.f32.mrb[0].mxu0
    %v302 = vadd.f32 %v84, %v301
    %303 = vmatprep.mubr.f32.mxu0 0.0
    %304 = vmatmul.mubr.f32.gmra.mrb[0].mxu0 %v97
    %v305 = vpop.f32.mrb[0].mxu0
    %v306 = vadd.f32 %v80, %v305
    %v307 = vpop.f32.mrb[0].mxu0
    %v308 = vadd.f32 %v84, %v307
    %309 = vmatprep.mubr.f32.mxu0 0.0
    %310 = vmatmul.mubr.f32.gmra.mrb[0].mxu0 %v100
    %v311 = vpop.f32.mrb[0].mxu0
    %v312 = vadd.f32 %v80, %v311
    %v313 = vpop.f32.mrb[0].mxu0
    %v314 = vadd.f32 %v84, %v313
    %315 = vmatprep.mubr.f32.mxu0 0.0
    %316 = vmatmul.mubr.f32.gmra.mrb[0].mxu0 %v103
    %v317 = vpop.f32.mrb[0].mxu0
    %v318 = vadd.f32 %v80, %v317
    %v319 = vpop.f32.mrb[0].mxu0
    %v320 = vadd.f32 %v84, %v319
    %321 = vmatprep.mubr.f32.mxu0 0.0
    %322 = vmatmul.mubr.f32.gmra.mrb[0].mxu0 %v106
    %v323 = vpop.f32.mrb[0].mxu0
    %v324 = vadd.f32 %v80, %v323
    %v325 = vpop.f32.mrb[0].mxu0
    %v326 = vadd.f32 %v84, %v325
    %327 = vmatprep.mubr.f32.mxu0 0.0
    %328 = vmatmul.mubr.f32.gmra.mrb[0].mxu0 %v109
    %v329 = vpop.f32.mrb[0].mxu0
    %v330 = vadd.f32 %v80, %v329
    %v331 = vpop.f32.mrb[0].mxu0
    %v332 = vadd.f32 %v84, %v331
    %333 = vmatprep.mubr.f32.mxu0 0.0
    %334 = vmatmul.mubr.f32.gmra.mrb[0].mxu0 %v112
    %v335 = vpop.f32.mrb[0].mxu0
    %v336 = vadd.f32 %v80, %v335
    %v337 = vpop.f32.mrb[0].mxu0
    %v338 = vadd.f32 %v84, %v337
    %339 = vdwg.mxu0
    %340 = vst [vmem:[#allocation2] sm:$0xff] %v181
    %341 = vst [vmem:[#allocation2 + $0x8] sm:$0xff] %v183
    %342 = vst [vmem:[#allocation2 + $0x10] sm:$0xff] %v294
    %343 = vst [vmem:[#allocation2 + $0x18] sm:$0xff] %v296
    %344 = vst [vmem:[#allocation2 + $0x20] sm:$0xff] %v187
    %345 = vst [vmem:[#allocation2 + $0x28] sm:$0xff] %v189
    %346 = vst [vmem:[#allocation2 + $0x30] sm:$0xff] %v300
    %347 = vst [vmem:[#allocation2 + $0x38] sm:$0xff] %v302
    %348 = vst [vmem:[#allocation2 + $0x40] sm:$0xff] %v193
    %349 = vst [vmem:[#allocation2 + $0x48] sm:$0xff] %v195
    %350 = vst [vmem:[#allocation2 + $0x50] sm:$0xff] %v306
    %351 = vst [vmem:[#allocation2 + $0x58] sm:$0xff] %v308
    %352 = vst [vmem:[#allocation2 + $0x60] sm:$0xff] %v199
    %353 = vst [vmem:[#allocation2 + $0x68] sm:$0xff] %v201
    %354 = vst [vmem:[#allocation2 + $0x70] sm:$0xff] %v312
    %355 = vst [vmem:[#allocation2 + $0x78] sm:$0xff] %v314
    %356 = vst [vmem:[#allocation2 + $0x80] sm:$0xff] %v205
    %357 = vst [vmem:[#allocation2 + $0x88] sm:$0xff] %v207
    %358 = vst [vmem:[#allocation2 + $0x90] sm:$0xff] %v318
    %359 = vst [vmem:[#allocation2 + $0x98] sm:$0xff] %v320
    %360 = vst [vmem:[#allocation2 + $0xa0] sm:$0xff] %v211
    %361 = vst [vmem:[#allocation2 + $0xa8] sm:$0xff] %v213
    %362 = vst [vmem:[#allocation2 + $0xb0] sm:$0xff] %v324
    %363 = vst [vmem:[#allocation2 + $0xb8] sm:$0xff] %v326
    %364 = vst [vmem:[#allocation2 + $0xc0] sm:$0xff] %v217
    %365 = vst [vmem:[#allocation2 + $0xc8] sm:$0xff] %v219
    %366 = vst [vmem:[#allocation2 + $0xd0] sm:$0xff] %v330
    %367 = vst [vmem:[#allocation2 + $0xd8] sm:$0xff] %v332
    %368 = vst [vmem:[#allocation2 + $0xe0] sm:$0xff] %v223
    %369 = vst [vmem:[#allocation2 + $0xe8] sm:$0xff] %v225
    %370 = vst [vmem:[#allocation2 + $0xf0] sm:$0xff] %v336
    %371 = vst [vmem:[#allocation2 + $0xf8] sm:$0xff] %v338
    %v372 = vld [vmem:[%s4] sm:$0xff]
    %v374 = vlaneseq
    %v375 = vshrl.u32 %v374, 7
    %v376 = vsub.s32 0, %v375
    %v377 = vrot.slane %v372, %v376
    %v378 = vlaneseq
    %v379 = vshrl.u32 %v378, 7
    %v380 = vsub.s32 1, %v379
    %v381 = vrot.slane %v372, %v380
    %v382 = vlaneseq
    %v383 = vshrl.u32 %v382, 7
    %v384 = vsub.s32 2, %v383
    %v385 = vrot.slane %v372, %v384
    %v386 = vlaneseq
    %v387 = vshrl.u32 %v386, 7
    %v388 = vsub.s32 3, %v387
    %v389 = vrot.slane %v372, %v388
    %v390 = vlaneseq
    %v391 = vshrl.u32 %v390, 7
    %v392 = vsub.s32 4, %v391
    %v393 = vrot.slane %v372, %v392
    %v394 = vlaneseq
    %v395 = vshrl.u32 %v394, 7
    %v396 = vsub.s32 5, %v395
    %v397 = vrot.slane %v372, %v396
    %v398 = vlaneseq
    %v399 = vshrl.u32 %v398, 7
    %v400 = vsub.s32 6, %v399
    %v401 = vrot.slane %v372, %v400
    %v402 = vlaneseq
    %v403 = vshrl.u32 %v402, 7
    %v404 = vsub.s32 7, %v403
    %v405 = vrot.slane %v372, %v404
    %v414 = vld [vmem:[#allocation4] sm:$0xff]
    %v415 = vld [vmem:[#allocation4 + $0x8] sm:$0xff]
    %v416 = vld [vmem:[#allocation4 + $0x10] sm:$0xff]
    %v417 = vld [vmem:[#allocation4 + $0x18] sm:$0xff]
    %v418 = vld [vmem:[#allocation4 + $0x20] sm:$0xff]
    %v419 = vld [vmem:[#allocation4 + $0x28] sm:$0xff]
    %v420 = vld [vmem:[#allocation4 + $0x30] sm:$0xff]
    %v421 = vld [vmem:[#allocation4 + $0x38] sm:$0xff]
    %v422 = vld [vmem:[#allocation4 + $0x40] sm:$0xff]
    %v423 = vld [vmem:[#allocation4 + $0x48] sm:$0xff]
    %v424 = vld [vmem:[#allocation4 + $0x50] sm:$0xff]
    %v425 = vld [vmem:[#allocation4 + $0x58] sm:$0xff]
    %v426 = vld [vmem:[#allocation4 + $0x60] sm:$0xff]
    %v427 = vld [vmem:[#allocation4 + $0x68] sm:$0xff]
    %v428 = vld [vmem:[#allocation4 + $0x70] sm:$0xff]
    %v429 = vld [vmem:[#allocation4 + $0x78] sm:$0xff]
    %v430 = vld [vmem:[#allocation4 + $0x80] sm:$0xff]
    %v431 = vld [vmem:[#allocation4 + $0x88] sm:$0xff]
    %v432 = vld [vmem:[#allocation4 + $0x90] sm:$0xff]
    %v433 = vld [vmem:[#allocation4 + $0x98] sm:$0xff]
    %v434 = vld [vmem:[#allocation4 + $0xa0] sm:$0xff]
    %v435 = vld [vmem:[#allocation4 + $0xa8] sm:$0xff]
    %v436 = vld [vmem:[#allocation4 + $0xb0] sm:$0xff]
    %v437 = vld [vmem:[#allocation4 + $0xb8] sm:$0xff]
    %v438 = vld [vmem:[#allocation4 + $0xc0] sm:$0xff]
    %v439 = vld [vmem:[#allocation4 + $0xc8] sm:$0xff]
    %v440 = vld [vmem:[#allocation4 + $0xd0] sm:$0xff]
    %v441 = vld [vmem:[#allocation4 + $0xd8] sm:$0xff]
    %v442 = vld [vmem:[#allocation4 + $0xe0] sm:$0xff]
    %v443 = vld [vmem:[#allocation4 + $0xe8] sm:$0xff]
    %v444 = vld [vmem:[#allocation4 + $0xf0] sm:$0xff]
    %v445 = vld [vmem:[#allocation4 + $0xf8] sm:$0xff]
    %v446 = vld [vmem:[#allocation4 + $0x100] sm:$0xff]
    %v447 = vld [vmem:[#allocation4 + $0x108] sm:$0xff]
    %v448 = vld [vmem:[#allocation4 + $0x110] sm:$0xff]
    %v449 = vld [vmem:[#allocation4 + $0x118] sm:$0xff]
    %v450 = vld [vmem:[#allocation4 + $0x120] sm:$0xff]
    %v451 = vld [vmem:[#allocation4 + $0x128] sm:$0xff]
    %v452 = vld [vmem:[#allocation4 + $0x130] sm:$0xff]
    %v453 = vld [vmem:[#allocation4 + $0x138] sm:$0xff]
    %v454 = vld [vmem:[#allocation4 + $0x140] sm:$0xff]
    %v455 = vld [vmem:[#allocation4 + $0x148] sm:$0xff]
    %v456 = vld [vmem:[#allocation4 + $0x150] sm:$0xff]
    %v457 = vld [vmem:[#allocation4 + $0x158] sm:$0xff]
    %v458 = vld [vmem:[#allocation4 + $0x160] sm:$0xff]
    %v459 = vld [vmem:[#allocation4 + $0x168] sm:$0xff]
    %v460 = vld [vmem:[#allocation4 + $0x170] sm:$0xff]
    %v461 = vld [vmem:[#allocation4 + $0x178] sm:$0xff]
    %v462 = vld [vmem:[#allocation4 + $0x180] sm:$0xff]
    %v463 = vld [vmem:[#allocation4 + $0x188] sm:$0xff]
    %v464 = vld [vmem:[#allocation4 + $0x190] sm:$0xff]
    %v465 = vld [vmem:[#allocation4 + $0x198] sm:$0xff]
    %v466 = vld [vmem:[#allocation4 + $0x1a0] sm:$0xff]
    %v467 = vld [vmem:[#allocation4 + $0x1a8] sm:$0xff]
    %v468 = vld [vmem:[#allocation4 + $0x1b0] sm:$0xff]
    %v469 = vld [vmem:[#allocation4 + $0x1b8] sm:$0xff]
    %v470 = vld [vmem:[#allocation4 + $0x1c0] sm:$0xff]
    %v471 = vld [vmem:[#allocation4 + $0x1c8] sm:$0xff]
    %v472 = vld [vmem:[#allocation4 + $0x1d0] sm:$0xff]
    %v473 = vld [vmem:[#allocation4 + $0x1d8] sm:$0xff]
    %v474 = vld [vmem:[#allocation4 + $0x1e0] sm:$0xff]
    %v475 = vld [vmem:[#allocation4 + $0x1e8] sm:$0xff]
    %v476 = vld [vmem:[#allocation4 + $0x1f0] sm:$0xff]
    %v477 = vld [vmem:[#allocation4 + $0x1f8] sm:$0xff]
    %v478 = vld [vmem:[#allocation4 + $0x200] sm:$0xff]
    %v479 = vld [vmem:[#allocation4 + $0x208] sm:$0xff]
    %v480 = vld [vmem:[#allocation4 + $0x210] sm:$0xff]
    %v481 = vld [vmem:[#allocation4 + $0x218] sm:$0xff]
    %v482 = vld [vmem:[#allocation4 + $0x220] sm:$0xff]
    %v483 = vld [vmem:[#allocation4 + $0x228] sm:$0xff]
    %v484 = vld [vmem:[#allocation4 + $0x230] sm:$0xff]
    %v485 = vld [vmem:[#allocation4 + $0x238] sm:$0xff]
    %v486 = vld [vmem:[#allocation4 + $0x240] sm:$0xff]
    %v487 = vld [vmem:[#allocation4 + $0x248] sm:$0xff]
    %v488 = vld [vmem:[#allocation4 + $0x250] sm:$0xff]
    %v489 = vld [vmem:[#allocation4 + $0x258] sm:$0xff]
    %v490 = vld [vmem:[#allocation4 + $0x260] sm:$0xff]
    %v491 = vld [vmem:[#allocation4 + $0x268] sm:$0xff]
    %v492 = vld [vmem:[#allocation4 + $0x270] sm:$0xff]
    %v493 = vld [vmem:[#allocation4 + $0x278] sm:$0xff]
    %v494 = vld [vmem:[#allocation4 + $0x280] sm:$0xff]
    %v495 = vld [vmem:[#allocation4 + $0x288] sm:$0xff]
    %v496 = vld [vmem:[#allocation4 + $0x290] sm:$0xff]
    %v497 = vld [vmem:[#allocation4 + $0x298] sm:$0xff]
    %v498 = vld [vmem:[#allocation4 + $0x2a0] sm:$0xff]
    %v499 = vld [vmem:[#allocation4 + $0x2a8] sm:$0xff]
    %v500 = vld [vmem:[#allocation4 + $0x2b0] sm:$0xff]
    %v501 = vld [vmem:[#allocation4 + $0x2b8] sm:$0xff]
    %v502 = vld [vmem:[#allocation4 + $0x2c0] sm:$0xff]
    %v503 = vld [vmem:[#allocation4 + $0x2c8] sm:$0xff]
    %v504 = vld [vmem:[#allocation4 + $0x2d0] sm:$0xff]
    %v505 = vld [vmem:[#allocation4 + $0x2d8] sm:$0xff]
    %v506 = vld [vmem:[#allocation4 + $0x2e0] sm:$0xff]
    %v507 = vld [vmem:[#allocation4 + $0x2e8] sm:$0xff]
    %v508 = vld [vmem:[#allocation4 + $0x2f0] sm:$0xff]
    %v509 = vld [vmem:[#allocation4 + $0x2f8] sm:$0xff]
    %v510 = vld [vmem:[#allocation4 + $0x300] sm:$0xff]
    %v511 = vld [vmem:[#allocation4 + $0x308] sm:$0xff]
    %v512 = vld [vmem:[#allocation4 + $0x310] sm:$0xff]
    %v513 = vld [vmem:[#allocation4 + $0x318] sm:$0xff]
    %v514 = vld [vmem:[#allocation4 + $0x320] sm:$0xff]
    %v515 = vld [vmem:[#allocation4 + $0x328] sm:$0xff]
    %v516 = vld [vmem:[#allocation4 + $0x330] sm:$0xff]
    %v517 = vld [vmem:[#allocation4 + $0x338] sm:$0xff]
    %v518 = vld [vmem:[#allocation4 + $0x340] sm:$0xff]
    %v519 = vld [vmem:[#allocation4 + $0x348] sm:$0xff]
    %v520 = vld [vmem:[#allocation4 + $0x350] sm:$0xff]
    %v521 = vld [vmem:[#allocation4 + $0x358] sm:$0xff]
    %v522 = vld [vmem:[#allocation4 + $0x360] sm:$0xff]
    %v523 = vld [vmem:[#allocation4 + $0x368] sm:$0xff]
    %v524 = vld [vmem:[#allocation4 + $0x370] sm:$0xff]
    %v525 = vld [vmem:[#allocation4 + $0x378] sm:$0xff]
    %v526 = vld [vmem:[#allocation4 + $0x380] sm:$0xff]
    %v527 = vld [vmem:[#allocation4 + $0x388] sm:$0xff]
    %v528 = vld [vmem:[#allocation4 + $0x390] sm:$0xff]
    %v529 = vld [vmem:[#allocation4 + $0x398] sm:$0xff]
    %v530 = vld [vmem:[#allocation4 + $0x3a0] sm:$0xff]
    %v531 = vld [vmem:[#allocation4 + $0x3a8] sm:$0xff]
    %v532 = vld [vmem:[#allocation4 + $0x3b0] sm:$0xff]
    %v533 = vld [vmem:[#allocation4 + $0x3b8] sm:$0xff]
    %v534 = vld [vmem:[#allocation4 + $0x3c0] sm:$0xff]
    %v535 = vld [vmem:[#allocation4 + $0x3c8] sm:$0xff]
    %v536 = vld [vmem:[#allocation4 + $0x3d0] sm:$0xff]
    %v537 = vld [vmem:[#allocation4 + $0x3d8] sm:$0xff]
    %v538 = vld [vmem:[#allocation4 + $0x3e0] sm:$0xff]
    %v539 = vld [vmem:[#allocation4 + $0x3e8] sm:$0xff]
    %v540 = vld [vmem:[#allocation4 + $0x3f0] sm:$0xff]
    %v541 = vld [vmem:[#allocation4 + $0x3f8] sm:$0xff]
    %v542 = vld [vmem:[#allocation4 + $0x400] sm:$0xff]
    %v543 = vld [vmem:[#allocation4 + $0x408] sm:$0xff]
    %v544 = vld [vmem:[#allocation4 + $0x410] sm:$0xff]
    %v545 = vld [vmem:[#allocation4 + $0x418] sm:$0xff]
    %v546 = vld [vmem:[#allocation4 + $0x420] sm:$0xff]
    %v547 = vld [vmem:[#allocation4 + $0x428] sm:$0xff]
    %v548 = vld [vmem:[#allocation4 + $0x430] sm:$0xff]
    %v549 = vld [vmem:[#allocation4 + $0x438] sm:$0xff]
    %v550 = vld [vmem:[#allocation4 + $0x440] sm:$0xff]
    %v551 = vld [vmem:[#allocation4 + $0x448] sm:$0xff]
    %v552 = vld [vmem:[#allocation4 + $0x450] sm:$0xff]
    %v553 = vld [vmem:[#allocation4 + $0x458] sm:$0xff]
    %v554 = vld [vmem:[#allocation4 + $0x460] sm:$0xff]
    %v555 = vld [vmem:[#allocation4 + $0x468] sm:$0xff]
    %v556 = vld [vmem:[#allocation4 + $0x470] sm:$0xff]
    %v557 = vld [vmem:[#allocation4 + $0x478] sm:$0xff]
    %v558 = vld [vmem:[#allocation4 + $0x480] sm:$0xff]
    %v559 = vld [vmem:[#allocation4 + $0x488] sm:$0xff]
    %v560 = vld [vmem:[#allocation4 + $0x490] sm:$0xff]
    %v561 = vld [vmem:[#allocation4 + $0x498] sm:$0xff]
    %v562 = vld [vmem:[#allocation4 + $0x4a0] sm:$0xff]
    %v563 = vld [vmem:[#allocation4 + $0x4a8] sm:$0xff]
    %v564 = vld [vmem:[#allocation4 + $0x4b0] sm:$0xff]
    %v565 = vld [vmem:[#allocation4 + $0x4b8] sm:$0xff]
    %v566 = vld [vmem:[#allocation4 + $0x4c0] sm:$0xff]
    %v567 = vld [vmem:[#allocation4 + $0x4c8] sm:$0xff]
    %v568 = vld [vmem:[#allocation4 + $0x4d0] sm:$0xff]
    %v569 = vld [vmem:[#allocation4 + $0x4d8] sm:$0xff]
    %v570 = vld [vmem:[#allocation4 + $0x4e0] sm:$0xff]
    %v571 = vld [vmem:[#allocation4 + $0x4e8] sm:$0xff]
    %v572 = vld [vmem:[#allocation4 + $0x4f0] sm:$0xff]
    %v573 = vld [vmem:[#allocation4 + $0x4f8] sm:$0xff]
    %v574 = vld [vmem:[#allocation4 + $0x500] sm:$0xff]
    %v575 = vld [vmem:[#allocation4 + $0x508] sm:$0xff]
    %v576 = vld [vmem:[#allocation4 + $0x510] sm:$0xff]
    %v577 = vld [vmem:[#allocation4 + $0x518] sm:$0xff]
    %v578 = vld [vmem:[#allocation4 + $0x520] sm:$0xff]
    %v579 = vld [vmem:[#allocation4 + $0x528] sm:$0xff]
    %v580 = vld [vmem:[#allocation4 + $0x530] sm:$0xff]
    %v581 = vld [vmem:[#allocation4 + $0x538] sm:$0xff]
    %v582 = vld [vmem:[#allocation4 + $0x540] sm:$0xff]
    %v583 = vld [vmem:[#allocation4 + $0x548] sm:$0xff]
    %v584 = vld [vmem:[#allocation4 + $0x550] sm:$0xff]
    %v585 = vld [vmem:[#allocation4 + $0x558] sm:$0xff]
    %v586 = vld [vmem:[#allocation4 + $0x560] sm:$0xff]
    %v587 = vld [vmem:[#allocation4 + $0x568] sm:$0xff]
    %v588 = vld [vmem:[#allocation4 + $0x570] sm:$0xff]
    %v589 = vld [vmem:[#allocation4 + $0x578] sm:$0xff]
    %v590 = vld [vmem:[#allocation4 + $0x580] sm:$0xff]
    %v591 = vld [vmem:[#allocation4 + $0x588] sm:$0xff]
    %v592 = vld [vmem:[#allocation4 + $0x590] sm:$0xff]
    %v593 = vld [vmem:[#allocation4 + $0x598] sm:$0xff]
    %v594 = vld [vmem:[#allocation4 + $0x5a0] sm:$0xff]
    %v595 = vld [vmem:[#allocation4 + $0x5a8] sm:$0xff]
    %v596 = vld [vmem:[#allocation4 + $0x5b0] sm:$0xff]
    %v597 = vld [vmem:[#allocation4 + $0x5b8] sm:$0xff]
    %v598 = vld [vmem:[#allocation4 + $0x5c0] sm:$0xff]
    %v599 = vld [vmem:[#allocation4 + $0x5c8] sm:$0xff]
    %v600 = vld [vmem:[#allocation4 + $0x5d0] sm:$0xff]
    %v601 = vld [vmem:[#allocation4 + $0x5d8] sm:$0xff]
    %v602 = vld [vmem:[#allocation4 + $0x5e0] sm:$0xff]
    %v603 = vld [vmem:[#allocation4 + $0x5e8] sm:$0xff]
    %v604 = vld [vmem:[#allocation4 + $0x5f0] sm:$0xff]
    %v605 = vld [vmem:[#allocation4 + $0x5f8] sm:$0xff]
    %v606 = vld [vmem:[#allocation4 + $0x600] sm:$0xff]
    %v607 = vld [vmem:[#allocation4 + $0x608] sm:$0xff]
    %v608 = vld [vmem:[#allocation4 + $0x610] sm:$0xff]
    %v609 = vld [vmem:[#allocation4 + $0x618] sm:$0xff]
    %v610 = vld [vmem:[#allocation4 + $0x620] sm:$0xff]
    %v611 = vld [vmem:[#allocation4 + $0x628] sm:$0xff]
    %v612 = vld [vmem:[#allocation4 + $0x630] sm:$0xff]
    %v613 = vld [vmem:[#allocation4 + $0x638] sm:$0xff]
    %v614 = vld [vmem:[#allocation4 + $0x640] sm:$0xff]
    %v615 = vld [vmem:[#allocation4 + $0x648] sm:$0xff]
    %v616 = vld [vmem:[#allocation4 + $0x650] sm:$0xff]
    %v617 = vld [vmem:[#allocation4 + $0x658] sm:$0xff]
    %v618 = vld [vmem:[#allocation4 + $0x660] sm:$0xff]
    %v619 = vld [vmem:[#allocation4 + $0x668] sm:$0xff]
    %v620 = vld [vmem:[#allocation4 + $0x670] sm:$0xff]
    %v621 = vld [vmem:[#allocation4 + $0x678] sm:$0xff]
    %v622 = vld [vmem:[#allocation4 + $0x680] sm:$0xff]
    %v623 = vld [vmem:[#allocation4 + $0x688] sm:$0xff]
    %v624 = vld [vmem:[#allocation4 + $0x690] sm:$0xff]
    %v625 = vld [vmem:[#allocation4 + $0x698] sm:$0xff]
    %v626 = vld [vmem:[#allocation4 + $0x6a0] sm:$0xff]
    %v627 = vld [vmem:[#allocation4 + $0x6a8] sm:$0xff]
    %v628 = vld [vmem:[#allocation4 + $0x6b0] sm:$0xff]
    %v629 = vld [vmem:[#allocation4 + $0x6b8] sm:$0xff]
    %v630 = vld [vmem:[#allocation4 + $0x6c0] sm:$0xff]
    %v631 = vld [vmem:[#allocation4 + $0x6c8] sm:$0xff]
    %v632 = vld [vmem:[#allocation4 + $0x6d0] sm:$0xff]
    %v633 = vld [vmem:[#allocation4 + $0x6d8] sm:$0xff]
    %v634 = vld [vmem:[#allocation4 + $0x6e0] sm:$0xff]
    %v635 = vld [vmem:[#allocation4 + $0x6e8] sm:$0xff]
    %v636 = vld [vmem:[#allocation4 + $0x6f0] sm:$0xff]
    %v637 = vld [vmem:[#allocation4 + $0x6f8] sm:$0xff]
    %v638 = vld [vmem:[#allocation4 + $0x700] sm:$0xff]
    %v639 = vld [vmem:[#allocation4 + $0x708] sm:$0xff]
    %v640 = vld [vmem:[#allocation4 + $0x710] sm:$0xff]
    %v641 = vld [vmem:[#allocation4 + $0x718] sm:$0xff]
    %v642 = vld [vmem:[#allocation4 + $0x720] sm:$0xff]
    %v643 = vld [vmem:[#allocation4 + $0x728] sm:$0xff]
    %v644 = vld [vmem:[#allocation4 + $0x730] sm:$0xff]
    %v645 = vld [vmem:[#allocation4 + $0x738] sm:$0xff]
    %v646 = vld [vmem:[#allocation4 + $0x740] sm:$0xff]
    %v647 = vld [vmem:[#allocation4 + $0x748] sm:$0xff]
    %v648 = vld [vmem:[#allocation4 + $0x750] sm:$0xff]
    %v649 = vld [vmem:[#allocation4 + $0x758] sm:$0xff]
    %v650 = vld [vmem:[#allocation4 + $0x760] sm:$0xff]
    %v651 = vld [vmem:[#allocation4 + $0x768] sm:$0xff]
    %v652 = vld [vmem:[#allocation4 + $0x770] sm:$0xff]
    %v653 = vld [vmem:[#allocation4 + $0x778] sm:$0xff]
    %v654 = vld [vmem:[#allocation4 + $0x780] sm:$0xff]
    %v655 = vld [vmem:[#allocation4 + $0x788] sm:$0xff]
    %v656 = vld [vmem:[#allocation4 + $0x790] sm:$0xff]
    %v657 = vld [vmem:[#allocation4 + $0x798] sm:$0xff]
    %v658 = vld [vmem:[#allocation4 + $0x7a0] sm:$0xff]
    %v659 = vld [vmem:[#allocation4 + $0x7a8] sm:$0xff]
    %v660 = vld [vmem:[#allocation4 + $0x7b0] sm:$0xff]
    %v661 = vld [vmem:[#allocation4 + $0x7b8] sm:$0xff]
    %v662 = vld [vmem:[#allocation4 + $0x7c0] sm:$0xff]
    %v663 = vld [vmem:[#allocation4 + $0x7c8] sm:$0xff]
    %v664 = vld [vmem:[#allocation4 + $0x7d0] sm:$0xff]
    %v665 = vld [vmem:[#allocation4 + $0x7d8] sm:$0xff]
    %v666 = vld [vmem:[#allocation4 + $0x7e0] sm:$0xff]
    %v667 = vld [vmem:[#allocation4 + $0x7e8] sm:$0xff]
    %v668 = vld [vmem:[#allocation4 + $0x7f0] sm:$0xff]
    %v669 = vld [vmem:[#allocation4 + $0x7f8] sm:$0xff]
    %670 = vmatprep.subr.mxu0 %v415
    %671 = vmatpush1.msra.mxu0 %v414
    %672 = vmatprep.subr.mxu0 %v423
    %673 = vmatpush1.msra.mxu0 %v422
    %674 = vmatprep.subr.mxu0 %v431
    %675 = vmatpush1.msra.mxu0 %v430
    %676 = vmatprep.subr.mxu0 %v439
    %677 = vmatpush1.msra.mxu0 %v438
    %678 = vmatprep.subr.mxu0 %v447
    %679 = vmatpush1.msra.mxu0 %v446
    %680 = vmatprep.subr.mxu0 %v455
    %681 = vmatpush1.msra.mxu0 %v454
    %682 = vmatprep.subr.mxu0 %v463
    %683 = vmatpush1.msra.mxu0 %v462
    %684 = vmatprep.subr.mxu0 %v471
    %685 = vmatpush1.msra.mxu0 %v470
    %686 = vmatprep.subr.mxu0 %v479
    %687 = vmatpush1.msra.mxu0 %v478
    %688 = vmatprep.subr.mxu0 %v487
    %689 = vmatpush1.msra.mxu0 %v486
    %690 = vmatprep.subr.mxu0 %v495
    %691 = vmatpush1.msra.mxu0 %v494
    %692 = vmatprep.subr.mxu0 %v503
    %693 = vmatpush1.msra.mxu0 %v502
    %694 = vmatprep.subr.mxu0 %v511
    %695 = vmatpush1.msra.mxu0 %v510
    %696 = vmatprep.subr.mxu0 %v519
    %697 = vmatpush1.msra.mxu0 %v518
    %698 = vmatprep.subr.mxu0 %v527
    %699 = vmatpush1.msra.mxu0 %v526
    %700 = vmatprep.subr.mxu0 %v535
    %701 = vmatpush1.msra.mxu0 %v534
    %702 = vmatprep.subr.mxu0 %v543
    %703 = vmatpush1.msra.mxu0 %v542
    %704 = vmatprep.subr.mxu0 %v551
    %705 = vmatpush1.msra.mxu0 %v550
    %706 = vmatprep.subr.mxu0 %v559
    %707 = vmatpush1.msra.mxu0 %v558
    %708 = vmatprep.subr.mxu0 %v567
    %709 = vmatpush1.msra.mxu0 %v566
    %710 = vmatprep.subr.mxu0 %v575
    %711 = vmatpush1.msra.mxu0 %v574
    %712 = vmatprep.subr.mxu0 %v583
    %713 = vmatpush1.msra.mxu0 %v582
    %714 = vmatprep.subr.mxu0 %v591
    %715 = vmatpush1.msra.mxu0 %v590
    %716 = vmatprep.subr.mxu0 %v599
    %717 = vmatpush1.msra.mxu0 %v598
    %718 = vmatprep.subr.mxu0 %v607
    %719 = vmatpush1.msra.mxu0 %v606
    %720 = vmatprep.subr.mxu0 %v615
    %721 = vmatpush1.msra.mxu0 %v614
    %722 = vmatprep.subr.mxu0 %v623
    %723 = vmatpush1.msra.mxu0 %v622
    %724 = vmatprep.subr.mxu0 %v631
    %725 = vmatpush1.msra.mxu0 %v630
    %726 = vmatprep.subr.mxu0 %v639
    %727 = vmatpush1.msra.mxu0 %v638
    %728 = vmatprep.subr.mxu0 %v647
    %729 = vmatpush1.msra.mxu0 %v646
    %730 = vmatprep.subr.mxu0 %v655
    %731 = vmatpush1.msra.mxu0 %v654
    %732 = vmatprep.subr.mxu0 %v663
    %733 = vmatpush1.msra.mxu0 %v662
    %734 = vmatprep.mubr.f32.mxu0 0.0
    %735 = vmatmul.mubr.f32.gmra.mrb[0].mxu0 0.0
    %v736 = vpop.f32.mrb[0].mxu0
    %v737 = vadd.f32 %v377, %v736
    %v738 = vpop.f32.mrb[0].mxu0
    %v739 = vadd.f32 %v381, %v738
    %740 = vdwg.mxu0
    %741 = vmatprep.subr.mxu0 %v417
    %742 = vmatpush1.msra.mxu0 %v416
    %743 = vmatprep.subr.mxu0 %v425
    %744 = vmatpush1.msra.mxu0 %v424
    %745 = vmatprep.subr.mxu0 %v433
    %746 = vmatpush1.msra.mxu0 %v432
    %747 = vmatprep.subr.mxu0 %v441
    %748 = vmatpush1.msra.mxu0 %v440
    %749 = vmatprep.subr.mxu0 %v449
    %750 = vmatpush1.msra.mxu0 %v448
    %751 = vmatprep.subr.mxu0 %v457
    %752 = vmatpush1.msra.mxu0 %v456
    %753 = vmatprep.subr.mxu0 %v465
    %754 = vmatpush1.msra.mxu0 %v464
    %755 = vmatprep.subr.mxu0 %v473
    %756 = vmatpush1.msra.mxu0 %v472
    %757 = vmatprep.subr.mxu0 %v481
    %758 = vmatpush1.msra.mxu0 %v480
    %759 = vmatprep.subr.mxu0 %v489
    %760 = vmatpush1.msra.mxu0 %v488
    %761 = vmatprep.subr.mxu0 %v497
    %762 = vmatpush1.msra.mxu0 %v496
    %763 = vmatprep.subr.mxu0 %v505
    %764 = vmatpush1.msra.mxu0 %v504
    %765 = vmatprep.subr.mxu0 %v513
    %766 = vmatpush1.msra.mxu0 %v512
    %767 = vmatprep.subr.mxu0 %v521
    %768 = vmatpush1.msra.mxu0 %v520
    %769 = vmatprep.subr.mxu0 %v529
    %770 = vmatpush1.msra.mxu0 %v528
    %771 = vmatprep.subr.mxu0 %v537
    %772 = vmatpush1.msra.mxu0 %v536
    %773 = vmatprep.subr.mxu0 %v545
    %774 = vmatpush1.msra.mxu0 %v544
    %775 = vmatprep.subr.mxu0 %v553
    %776 = vmatpush1.msra.mxu0 %v552
    %777 = vmatprep.subr.mxu0 %v561
    %778 = vmatpush1.msra.mxu0 %v560
    %779 = vmatprep.subr.mxu0 %v569
    %780 = vmatpush1.msra.mxu0 %v568
    %781 = vmatprep.subr.mxu0 %v577
    %782 = vmatpush1.msra.mxu0 %v576
    %783 = vmatprep.subr.mxu0 %v585
    %784 = vmatpush1.msra.mxu0 %v584
    %785 = vmatprep.subr.mxu0 %v593
    %786 = vmatpush1.msra.mxu0 %v592
    %787 = vmatprep.subr.mxu0 %v601
    %788 = vmatpush1.msra.mxu0 %v600
    %789 = vmatprep.subr.mxu0 %v609
    %790 = vmatpush1.msra.mxu0 %v608
    %791 = vmatprep.subr.mxu0 %v617
    %792 = vmatpush1.msra.mxu0 %v616
    %793 = vmatprep.subr.mxu0 %v625
    %794 = vmatpush1.msra.mxu0 %v624
    %795 = vmatprep.subr.mxu0 %v633
    %796 = vmatpush1.msra.mxu0 %v632
    %797 = vmatprep.subr.mxu0 %v641
    %798 = vmatpush1.msra.mxu0 %v640
    %799 = vmatprep.subr.mxu0 %v649
    %800 = vmatpush1.msra.mxu0 %v648
    %801 = vmatprep.subr.mxu0 %v657
    %802 = vmatpush1.msra.mxu0 %v656
    %803 = vmatprep.subr.mxu0 %v665
    %804 = vmatpush1.msra.mxu0 %v664
    %805 = vmatprep.mubr.f32.mxu0 0.0
    %806 = vmatmul.mubr.f32.gmra.mrb[0].mxu0 0.0
    %v807 = vpop.f32.mrb[0].mxu0
    %v808 = vadd.f32 %v385, %v807
    %v809 = vpop.f32.mrb[0].mxu0
    %v810 = vadd.f32 %v389, %v809
    %811 = vdwg.mxu0
    %v812 = vld [vmem:[#allocation2] sm:$0xff]
    %v813 = vld [vmem:[#allocation2 + $0x8] sm:$0xff]
    %v814 = vld [vmem:[#allocation2 + $0x10] sm:$0xff]
    %v815 = vld [vmem:[#allocation2 + $0x18] sm:$0xff]
    %v816 = vadd.f32 %v737, %v812
    %v817 = vadd.f32 %v739, %v813
    %v818 = vadd.f32 %v808, %v814
    %v819 = vadd.f32 %v810, %v815
    %v820 = vxor.u32 %v816, 2147483648
    %v821 = vmul.f32 %v820, 1.442695
    %v822 = vpow.pop %v821
    %v823 = vadd.f32 %v822, 1.0
    %v824 = vrcp.pop %v823
    %v825 = vmul.f32 1.0, %v824
    %v826 = vxor.u32 %v817, 2147483648
    %v827 = vmul.f32 %v826, 1.442695
    %v828 = vpow.pop %v827
    %v829 = vadd.f32 %v828, 1.0
    %v830 = vrcp.pop %v829
    %v831 = vmul.f32 1.0, %v830
    %v832 = vtanh.pop %v818
    %v833 = vxor.u32 %v819, 2147483648
    %v834 = vmul.f32 %v833, 1.442695
    %v835 = vpow.pop %v834
    %v836 = vadd.f32 %v835, 1.0
    %v837 = vrcp.pop %v836
    %v838 = vmul.f32 1.0, %v837
    %v839 = vmul.f32 %v831, 0.0
    %v840 = vmul.f32 %v825, %v832
    %v841 = vadd.f32 %v839, %v840
    %v842 = vtanh.pop %v841
    %v843 = vmul.f32 %v838, %v842
    %844 = vmatprep.subr.mxu0 %v415
    %845 = vmatpush1.msra.mxu0 %v414
    %846 = vmatprep.subr.mxu0 %v423
    %847 = vmatpush1.msra.mxu0 %v422
    %848 = vmatprep.subr.mxu0 %v431
    %849 = vmatpush1.msra.mxu0 %v430
    %850 = vmatprep.subr.mxu0 %v439
    %851 = vmatpush1.msra.mxu0 %v438
    %852 = vmatprep.subr.mxu0 %v447
    %853 = vmatpush1.msra.mxu0 %v446
    %854 = vmatprep.subr.mxu0 %v455
    %855 = vmatpush1.msra.mxu0 %v454
    %856 = vmatprep.subr.mxu0 %v463
    %857 = vmatpush1.msra.mxu0 %v462
    %858 = vmatprep.subr.mxu0 %v471
    %859 = vmatpush1.msra.mxu0 %v470
    %860 = vmatprep.subr.mxu0 %v479
    %861 = vmatpush1.msra.mxu0 %v478
    %862 = vmatprep.subr.mxu0 %v487
    %863 = vmatpush1.msra.mxu0 %v486
    %864 = vmatprep.subr.mxu0 %v495
    %865 = vmatpush1.msra.mxu0 %v494
    %866 = vmatprep.subr.mxu0 %v503
    %867 = vmatpush1.msra.mxu0 %v502
    %868 = vmatprep.subr.mxu0 %v511
    %869 = vmatpush1.msra.mxu0 %v510
    %870 = vmatprep.subr.mxu0 %v519
    %871 = vmatpush1.msra.mxu0 %v518
    %872 = vmatprep.subr.mxu0 %v527
    %873 = vmatpush1.msra.mxu0 %v526
    %874 = vmatprep.subr.mxu0 %v535
    %875 = vmatpush1.msra.mxu0 %v534
    %876 = vmatprep.subr.mxu0 %v543
    %877 = vmatpush1.msra.mxu0 %v542
    %878 = vmatprep.subr.mxu0 %v551
    %879 = vmatpush1.msra.mxu0 %v550
    %880 = vmatprep.subr.mxu0 %v559
    %881 = vmatpush1.msra.mxu0 %v558
    %882 = vmatprep.subr.mxu0 %v567
    %883 = vmatpush1.msra.mxu0 %v566
    %884 = vmatprep.subr.mxu0 %v575
    %885 = vmatpush1.msra.mxu0 %v574
    %886 = vmatprep.subr.mxu0 %v583
    %887 = vmatpush1.msra.mxu0 %v582
    %888 = vmatprep.subr.mxu0 %v591
    %889 = vmatpush1.msra.mxu0 %v590
    %890 = vmatprep.subr.mxu0 %v599
    %891 = vmatpush1.msra.mxu0 %v598
    %892 = vmatprep.subr.mxu0 %v607
    %893 = vmatpush1.msra.mxu0 %v606
    %894 = vmatprep.subr.mxu0 %v615
    %895 = vmatpush1.msra.mxu0 %v614
    %896 = vmatprep.subr.mxu0 %v623
    %897 = vmatpush1.msra.mxu0 %v622
    %898 = vmatprep.subr.mxu0 %v631
    %899 = vmatpush1.msra.mxu0 %v630
    %900 = vmatprep.subr.mxu0 %v639
    %901 = vmatpush1.msra.mxu0 %v638
    %902 = vmatprep.subr.mxu0 %v647
    %903 = vmatpush1.msra.mxu0 %v646
    %904 = vmatprep.subr.mxu0 %v655
    %905 = vmatpush1.msra.mxu0 %v654
    %906 = vmatprep.subr.mxu0 %v663
    %907 = vmatpush1.msra.mxu0 %v662
    %908 = vmatprep.mubr.f32.mxu0 0.0
    %909 = vmatmul.mubr.f32.gmra.mrb[0].mxu0 %v843
    %v910 = vpop.f32.mrb[0].mxu0
    %v911 = vadd.f32 %v377, %v910
    %v912 = vpop.f32.mrb[0].mxu0
    %v913 = vadd.f32 %v381, %v912
    %914 = vdwg.mxu0
    %915 = vmatprep.subr.mxu0 %v417
    %916 = vmatpush1.msra.mxu0 %v416
    %917 = vmatprep.subr.mxu0 %v425
    %918 = vmatpush1.msra.mxu0 %v424
    %919 = vmatprep.subr.mxu0 %v433
    %920 = vmatpush1.msra.mxu0 %v432
    %921 = vmatprep.subr.mxu0 %v441
    %922 = vmatpush1.msra.mxu0 %v440
    %923 = vmatprep.subr.mxu0 %v449
    %924 = vmatpush1.msra.mxu0 %v448
    %925 = vmatprep.subr.mxu0 %v457
    %926 = vmatpush1.msra.mxu0 %v456
    %927 = vmatprep.subr.mxu0 %v465
    %928 = vmatpush1.msra.mxu0 %v464
    %929 = vmatprep.subr.mxu0 %v473
    %930 = vmatpush1.msra.mxu0 %v472
    %931 = vmatprep.subr.mxu0 %v481
    %932 = vmatpush1.msra.mxu0 %v480
    %933 = vmatprep.subr.mxu0 %v489
    %934 = vmatpush1.msra.mxu0 %v488
    %935 = vmatprep.subr.mxu0 %v497
    %936 = vmatpush1.msra.mxu0 %v496
    %937 = vmatprep.subr.mxu0 %v505
    %938 = vmatpush1.msra.mxu0 %v504
    %939 = vmatprep.subr.mxu0 %v513
    %940 = vmatpush1.msra.mxu0 %v512
    %941 = vmatprep.subr.mxu0 %v521
    %942 = vmatpush1.msra.mxu0 %v520
    %943 = vmatprep.subr.mxu0 %v529
    %944 = vmatpush1.msra.mxu0 %v528
    %945 = vmatprep.subr.mxu0 %v537
    %946 = vmatpush1.msra.mxu0 %v536
    %947 = vmatprep.subr.mxu0 %v545
    %948 = vmatpush1.msra.mxu0 %v544
    %949 = vmatprep.subr.mxu0 %v553
    %950 = vmatpush1.msra.mxu0 %v552
    %951 = vmatprep.subr.mxu0 %v561
    %952 = vmatpush1.msra.mxu0 %v560
    %953 = vmatprep.subr.mxu0 %v569
    %954 = vmatpush1.msra.mxu0 %v568
    %955 = vmatprep.subr.mxu0 %v577
    %956 = vmatpush1.msra.mxu0 %v576
    %957 = vmatprep.subr.mxu0 %v585
    %958 = vmatpush1.msra.mxu0 %v584
    %959 = vmatprep.subr.mxu0 %v593
    %960 = vmatpush1.msra.mxu0 %v592
    %961 = vmatprep.subr.mxu0 %v601
    %962 = vmatpush1.msra.mxu0 %v600
    %963 = vmatprep.subr.mxu0 %v609
    %964 = vmatpush1.msra.mxu0 %v608
    %965 = vmatprep.subr.mxu0 %v617
    %966 = vmatpush1.msra.mxu0 %v616
    %967 = vmatprep.subr.mxu0 %v625
    %968 = vmatpush1.msra.mxu0 %v624
    %969 = vmatprep.subr.mxu0 %v633
    %970 = vmatpush1.msra.mxu0 %v632
    %971 = vmatprep.subr.mxu0 %v641
    %972 = vmatpush1.msra.mxu0 %v640
    %973 = vmatprep.subr.mxu0 %v649
    %974 = vmatpush1.msra.mxu0 %v648
    %975 = vmatprep.subr.mxu0 %v657
    %976 = vmatpush1.msra.mxu0 %v656
    %977 = vmatprep.subr.mxu0 %v665
    %978 = vmatpush1.msra.mxu0 %v664
    %979 = vmatprep.mubr.f32.mxu0 0.0
    %980 = vmatmul.mubr.f32.gmra.mrb[0].mxu0 %v843
    %v981 = vpop.f32.mrb[0].mxu0
    %v982 = vadd.f32 %v385, %v981
    %v983 = vpop.f32.mrb[0].mxu0
    %v984 = vadd.f32 %v389, %v983
    %985 = vdwg.mxu0
    %986 = vmatprep.subr.mxu0 %v419
    %987 = vmatpush1.msra.mxu0 %v418
    %988 = vmatprep.subr.mxu0 %v427
    %989 = vmatpush1.msra.mxu0 %v426
    %990 = vmatprep.subr.mxu0 %v435
    %991 = vmatpush1.msra.mxu0 %v434
    %992 = vmatprep.subr.mxu0 %v443
    %993 = vmatpush1.msra.mxu0 %v442
    %994 = vmatprep.subr.mxu0 %v451
    %995 = vmatpush1.msra.mxu0 %v450
    %996 = vmatprep.subr.mxu0 %v459
    %997 = vmatpush1.msra.mxu0 %v458
    %998 = vmatprep.subr.mxu0 %v467
    %999 = vmatpush1.msra.mxu0 %v466
    %1000 = vmatprep.subr.mxu0 %v475
    %1001 = vmatpush1.msra.mxu0 %v474
    %1002 = vmatprep.subr.mxu0 %v483
    %1003 = vmatpush1.msra.mxu0 %v482
    %1004 = vmatprep.subr.mxu0 %v491
    %1005 = vmatpush1.msra.mxu0 %v490
    %1006 = vmatprep.subr.mxu0 %v499
    %1007 = vmatpush1.msra.mxu0 %v498
    %1008 = vmatprep.subr.mxu0 %v507
    %1009 = vmatpush1.msra.mxu0 %v506
    %1010 = vmatprep.subr.mxu0 %v515
    %1011 = vmatpush1.msra.mxu0 %v514
    %1012 = vmatprep.subr.mxu0 %v523
    %1013 = vmatpush1.msra.mxu0 %v522
    %1014 = vmatprep.subr.mxu0 %v531
    %1015 = vmatpush1.msra.mxu0 %v530
    %1016 = vmatprep.subr.mxu0 %v539
    %1017 = vmatpush1.msra.mxu0 %v538
    %1018 = vmatprep.subr.mxu0 %v547
    %1019 = vmatpush1.msra.mxu0 %v546
    %1020 = vmatprep.subr.mxu0 %v555
    %1021 = vmatpush1.msra.mxu0 %v554
    %1022 = vmatprep.subr.mxu0 %v563
    %1023 = vmatpush1.msra.mxu0 %v562
    %1024 = vmatprep.subr.mxu0 %v571
    %1025 = vmatpush1.msra.mxu0 %v570
    %1026 = vmatprep.subr.mxu0 %v579
    %1027 = vmatpush1.msra.mxu0 %v578
    %1028 = vmatprep.subr.mxu0 %v587
    %1029 = vmatpush1.msra.mxu0 %v586
    %1030 = vmatprep.subr.mxu0 %v595
    %1031 = vmatpush1.msra.mxu0 %v594
    %1032 = vmatprep.subr.mxu0 %v603
    %1033 = vmatpush1.msra.mxu0 %v602
    %1034 = vmatprep.subr.mxu0 %v611
    %1035 = vmatpush1.msra.mxu0 %v610
    %1036 = vmatprep.subr.mxu0 %v619
    %1037 = vmatpush1.msra.mxu0 %v618
    %1038 = vmatprep.subr.mxu0 %v627
    %1039 = vmatpush1.msra.mxu0 %v626
    %1040 = vmatprep.subr.mxu0 %v635
    %1041 = vmatpush1.msra.mxu0 %v634
    %1042 = vmatprep.subr.mxu0 %v643
    %1043 = vmatpush1.msra.mxu0 %v642
    %1044 = vmatprep.subr.mxu0 %v651
    %1045 = vmatpush1.msra.mxu0 %v650
    %1046 = vmatprep.subr.mxu0 %v659
    %1047 = vmatpush1.msra.mxu0 %v658
    %1048 = vmatprep.subr.mxu0 %v667
    %1049 = vmatpush1.msra.mxu0 %v666
    %1050 = vmatprep.mubr.f32.mxu0 0.0
    %1051 = vmatmul.mubr.f32.gmra.mrb[0].mxu0 %v843
    %v1052 = vpop.f32.mrb[0].mxu0
    %v1053 = vadd.f32 %v393, %v1052
    %v1054 = vpop.f32.mrb[0].mxu0
    %v1055 = vadd.f32 %v397, %v1054
    %1056 = vdwg.mxu0
    %1057 = vmatprep.subr.mxu0 %v421
    %1058 = vmatpush1.msra.mxu0 %v420
    %1059 = vmatprep.subr.mxu0 %v429
    %1060 = vmatpush1.msra.mxu0 %v428
    %1061 = vmatprep.subr.mxu0 %v437
    %1062 = vmatpush1.msra.mxu0 %v436
    %1063 = vmatprep.subr.mxu0 %v445
    %1064 = vmatpush1.msra.mxu0 %v444
    %1065 = vmatprep.subr.mxu0 %v453
    %1066 = vmatpush1.msra.mxu0 %v452
    %1067 = vmatprep.subr.mxu0 %v461
    %1068 = vmatpush1.msra.mxu0 %v460
    %1069 = vmatprep.subr.mxu0 %v469
    %1070 = vmatpush1.msra.mxu0 %v468
    %1071 = vmatprep.subr.mxu0 %v477
    %1072 = vmatpush1.msra.mxu0 %v476
    %1073 = vmatprep.subr.mxu0 %v485
    %1074 = vmatpush1.msra.mxu0 %v484
    %1075 = vmatprep.subr.mxu0 %v493
    %1076 = vmatpush1.msra.mxu0 %v492
    %1077 = vmatprep.subr.mxu0 %v501
    %1078 = vmatpush1.msra.mxu0 %v500
    %1079 = vmatprep.subr.mxu0 %v509
    %1080 = vmatpush1.msra.mxu0 %v508
    %1081 = vmatprep.subr.mxu0 %v517
    %1082 = vmatpush1.msra.mxu0 %v516
    %1083 = vmatprep.subr.mxu0 %v525
    %1084 = vmatpush1.msra.mxu0 %v524
    %1085 = vmatprep.subr.mxu0 %v533
    %1086 = vmatpush1.msra.mxu0 %v532
    %1087 = vmatprep.subr.mxu0 %v541
    %1088 = vmatpush1.msra.mxu0 %v540
    %1089 = vmatprep.subr.mxu0 %v549
    %1090 = vmatpush1.msra.mxu0 %v548
    %1091 = vmatprep.subr.mxu0 %v557
    %1092 = vmatpush1.msra.mxu0 %v556
    %1093 = vmatprep.subr.mxu0 %v565
    %1094 = vmatpush1.msra.mxu0 %v564
    %1095 = vmatprep.subr.mxu0 %v573
    %1096 = vmatpush1.msra.mxu0 %v572
    %1097 = vmatprep.subr.mxu0 %v581
    %1098 = vmatpush1.msra.mxu0 %v580
    %1099 = vmatprep.subr.mxu0 %v589
    %1100 = vmatpush1.msra.mxu0 %v588
    %1101 = vmatprep.subr.mxu0 %v597
    %1102 = vmatpush1.msra.mxu0 %v596
    %1103 = vmatprep.subr.mxu0 %v605
    %1104 = vmatpush1.msra.mxu0 %v604
    %1105 = vmatprep.subr.mxu0 %v613
    %1106 = vmatpush1.msra.mxu0 %v612
    %1107 = vmatprep.subr.mxu0 %v621
    %1108 = vmatpush1.msra.mxu0 %v620
    %1109 = vmatprep.subr.mxu0 %v629
    %1110 = vmatpush1.msra.mxu0 %v628
    %1111 = vmatprep.subr.mxu0 %v637
    %1112 = vmatpush1.msra.mxu0 %v636
    %1113 = vmatprep.subr.mxu0 %v645
    %1114 = vmatpush1.msra.mxu0 %v644
    %1115 = vmatprep.subr.mxu0 %v653
    %1116 = vmatpush1.msra.mxu0 %v652
    %1117 = vmatprep.subr.mxu0 %v661
    %1118 = vmatpush1.msra.mxu0 %v660
    %1119 = vmatprep.subr.mxu0 %v669
    %1120 = vmatpush1.msra.mxu0 %v668
    %1121 = vmatprep.mubr.f32.mxu0 0.0
    %1122 = vmatmul.mubr.f32.gmra.mrb[0].mxu0 %v843
    %v1123 = vpop.f32.mrb[0].mxu0
    %v1124 = vadd.f32 %v401, %v1123
    %v1125 = vpop.f32.mrb[0].mxu0
    %v1126 = vadd.f32 %v405, %v1125
    %1127 = vdwg.mxu0
    %v1128 = vld [vmem:[#allocation2 + $0x20] sm:$0xff]
    %v1129 = vld [vmem:[#allocation2 + $0x28] sm:$0xff]
    %v1130 = vld [vmem:[#allocation2 + $0x30] sm:$0xff]
    %v1131 = vld [vmem:[#allocation2 + $0x38] sm:$0xff]
    %v1132 = vadd.f32 %v911, %v1128
    %v1133 = vadd.f32 %v913, %v1129
    %v1134 = vadd.f32 %v982, %v1130
    %v1135 = vadd.f32 %v984, %v1131
    %v1136 = vxor.u32 %v1132, 2147483648
    %v1137 = vmul.f32 %v1136, 1.442695
    %v1138 = vpow.pop %v1137
    %v1139 = vadd.f32 %v1138, 1.0
    %v1140 = vrcp.pop %v1139
    %v1141 = vmul.f32 1.0, %v1140
    %v1142 = vxor.u32 %v1133, 2147483648
    %v1143 = vmul.f32 %v1142, 1.442695
    %v1144 = vpow.pop %v1143
    %v1145 = vadd.f32 %v1144, 1.0
    %v1146 = vrcp.pop %v1145
    %v1147 = vmul.f32 1.0, %v1146
    %v1148 = vtanh.pop %v1134
    %v1149 = vxor.u32 %v1135, 2147483648
    %v1150 = vmul.f32 %v1149, 1.442695
    %v1151 = vpow.pop %v1150
    %v1152 = vadd.f32 %v1151, 1.0
    %v1153 = vrcp.pop %v1152
    %v1154 = vmul.f32 1.0, %v1153
    %v1155 = vmul.f32 %v1147, %v841
    %v1156 = vmul.f32 %v1141, %v1148
    %v1157 = vadd.f32 %v1155, %v1156
    %v1158 = vtanh.pop %v1157
    %v1159 = vmul.f32 %v1154, %v1158
    %v1160 = vxor.u32 %v1053, 2147483648
    %v1161 = vmul.f32 %v1160, 1.442695
    %v1162 = vpow.pop %v1161
    %v1163 = vadd.f32 %v1162, 1.0
    %v1164 = vrcp.pop %v1163
    %v1165 = vmul.f32 1.0, %v1164
    %v1166 = vxor.u32 %v1055, 2147483648
    %v1167 = vmul.f32 %v1166, 1.442695
    %v1168 = vpow.pop %v1167
    %v1169 = vadd.f32 %v1168, 1.0
    %v1170 = vrcp.pop %v1169
    %v1171 = vmul.f32 1.0, %v1170
    %v1172 = vtanh.pop %v1124
    %v1173 = vxor.u32 %v1126, 2147483648
    %v1174 = vmul.f32 %v1173, 1.442695
    %v1175 = vpow.pop %v1174
    %v1176 = vadd.f32 %v1175, 1.0
    %v1177 = vrcp.pop %v1176
    %v1178 = vmul.f32 1.0, %v1177
    %v1179 = vmul.f32 %v1171, 0.0
    %v1180 = vmul.f32 %v1165, %v1172
    %v1181 = vadd.f32 %v1179, %v1180
    %v1182 = vtanh.pop %v1181
    %v1183 = vmul.f32 %v1178, %v1182
    %1184 = vmatprep.subr.mxu0 %v415
    %1185 = vmatpush1.msra.mxu0 %v414
    %1186 = vmatprep.subr.mxu0 %v423
    %1187 = vmatpush1.msra.mxu0 %v422
    %1188 = vmatprep.subr.mxu0 %v431
    %1189 = vmatpush1.msra.mxu0 %v430
    %1190 = vmatprep.subr.mxu0 %v439
    %1191 = vmatpush1.msra.mxu0 %v438
    %1192 = vmatprep.subr.mxu0 %v447
    %1193 = vmatpush1.msra.mxu0 %v446
    %1194 = vmatprep.subr.mxu0 %v455
    %1195 = vmatpush1.msra.mxu0 %v454
    %1196 = vmatprep.subr.mxu0 %v463
    %1197 = vmatpush1.msra.mxu0 %v462
    %1198 = vmatprep.subr.mxu0 %v471
    %1199 = vmatpush1.msra.mxu0 %v470
    %1200 = vmatprep.subr.mxu0 %v479
    %1201 = vmatpush1.msra.mxu0 %v478
    %1202 = vmatprep.subr.mxu0 %v487
    %1203 = vmatpush1.msra.mxu0 %v486
    %1204 = vmatprep.subr.mxu0 %v495
    %1205 = vmatpush1.msra.mxu0 %v494
    %1206 = vmatprep.subr.mxu0 %v503
    %1207 = vmatpush1.msra.mxu0 %v502
    %1208 = vmatprep.subr.mxu0 %v511
    %1209 = vmatpush1.msra.mxu0 %v510
    %1210 = vmatprep.subr.mxu0 %v519
    %1211 = vmatpush1.msra.mxu0 %v518
    %1212 = vmatprep.subr.mxu0 %v527
    %1213 = vmatpush1.msra.mxu0 %v526
    %1214 = vmatprep.subr.mxu0 %v535
    %1215 = vmatpush1.msra.mxu0 %v534
    %1216 = vmatprep.subr.mxu0 %v543
    %1217 = vmatpush1.msra.mxu0 %v542
    %1218 = vmatprep.subr.mxu0 %v551
    %1219 = vmatpush1.msra.mxu0 %v550
    %1220 = vmatprep.subr.mxu0 %v559
    %1221 = vmatpush1.msra.mxu0 %v558
    %1222 = vmatprep.subr.mxu0 %v567
    %1223 = vmatpush1.msra.mxu0 %v566
    %1224 = vmatprep.subr.mxu0 %v575
    %1225 = vmatpush1.msra.mxu0 %v574
    %1226 = vmatprep.subr.mxu0 %v583
    %1227 = vmatpush1.msra.mxu0 %v582
    %1228 = vmatprep.subr.mxu0 %v591
    %1229 = vmatpush1.msra.mxu0 %v590
    %1230 = vmatprep.subr.mxu0 %v599
    %1231 = vmatpush1.msra.mxu0 %v598
    %1232 = vmatprep.subr.mxu0 %v607
    %1233 = vmatpush1.msra.mxu0 %v606
    %1234 = vmatprep.subr.mxu0 %v615
    %1235 = vmatpush1.msra.mxu0 %v614
    %1236 = vmatprep.subr.mxu0 %v623
    %1237 = vmatpush1.msra.mxu0 %v622
    %1238 = vmatprep.subr.mxu0 %v631
    %1239 = vmatpush1.msra.mxu0 %v630
    %1240 = vmatprep.subr.mxu0 %v639
    %1241 = vmatpush1.msra.mxu0 %v638
    %1242 = vmatprep.subr.mxu0 %v647
    %1243 = vmatpush1.msra.mxu0 %v646
    %1244 = vmatprep.subr.mxu0 %v655
    %1245 = vmatpush1.msra.mxu0 %v654
    %1246 = vmatprep.subr.mxu0 %v663
    %1247 = vmatpush1.msra.mxu0 %v662
    %1248 = vmatprep.mubr.f32.mxu0 %v1183
    %1249 = vmatmul.mubr.f32.gmra.mrb[0].mxu0 %v1159
    %v1250 = vpop.f32.mrb[0].mxu0
    %v1251 = vadd.f32 %v377, %v1250
    %v1252 = vpop.f32.mrb[0].mxu0
    %v1253 = vadd.f32 %v381, %v1252
    %1254 = vdwg.mxu0
    %1255 = vmatprep.subr.mxu0 %v417
    %1256 = vmatpush1.msra.mxu0 %v416
    %1257 = vmatprep.subr.mxu0 %v425
    %1258 = vmatpush1.msra.mxu0 %v424
    %1259 = vmatprep.subr.mxu0 %v433
    %1260 = vmatpush1.msra.mxu0 %v432
    %1261 = vmatprep.subr.mxu0 %v441
    %1262 = vmatpush1.msra.mxu0 %v440
    %1263 = vmatprep.subr.mxu0 %v449
    %1264 = vmatpush1.msra.mxu0 %v448
    %1265 = vmatprep.subr.mxu0 %v457
    %1266 = vmatpush1.msra.mxu0 %v456
    %1267 = vmatprep.subr.mxu0 %v465
    %1268 = vmatpush1.msra.mxu0 %v464
    %1269 = vmatprep.subr.mxu0 %v473
    %1270 = vmatpush1.msra.mxu0 %v472
    %1271 = vmatprep.subr.mxu0 %v481
    %1272 = vmatpush1.msra.mxu0 %v480
    %1273 = vmatprep.subr.mxu0 %v489
    %1274 = vmatpush1.msra.mxu0 %v488
    %1275 = vmatprep.subr.mxu0 %v497
    %1276 = vmatpush1.msra.mxu0 %v496
    %1277 = vmatprep.subr.mxu0 %v505
    %1278 = vmatpush1.msra.mxu0 %v504
    %1279 = vmatprep.subr.mxu0 %v513
    %1280 = vmatpush1.msra.mxu0 %v512
    %1281 = vmatprep.subr.mxu0 %v521
    %1282 = vmatpush1.msra.mxu0 %v520
    %1283 = vmatprep.subr.mxu0 %v529
    %1284 = vmatpush1.msra.mxu0 %v528
    %1285 = vmatprep.subr.mxu0 %v537
    %1286 = vmatpush1.msra.mxu0 %v536
    %1287 = vmatprep.subr.mxu0 %v545
    %1288 = vmatpush1.msra.mxu0 %v544
    %1289 = vmatprep.subr.mxu0 %v553
    %1290 = vmatpush1.msra.mxu0 %v552
    %1291 = vmatprep.subr.mxu0 %v561
    %1292 = vmatpush1.msra.mxu0 %v560
    %1293 = vmatprep.subr.mxu0 %v569
    %1294 = vmatpush1.msra.mxu0 %v568
    %1295 = vmatprep.subr.mxu0 %v577
    %1296 = vmatpush1.msra.mxu0 %v576
    %1297 = vmatprep.subr.mxu0 %v585
    %1298 = vmatpush1.msra.mxu0 %v584
    %1299 = vmatprep.subr.mxu0 %v593
    %1300 = vmatpush1.msra.mxu0 %v592
    %1301 = vmatprep.subr.mxu0 %v601
    %1302 = vmatpush1.msra.mxu0 %v600
    %1303 = vmatprep.subr.mxu0 %v609
    %1304 = vmatpush1.msra.mxu0 %v608
    %1305 = vmatprep.subr.mxu0 %v617
    %1306 = vmatpush1.msra.mxu0 %v616
    %1307 = vmatprep.subr.mxu0 %v625
    %1308 = vmatpush1.msra.mxu0 %v624
    %1309 = vmatprep.subr.mxu0 %v633
    %1310 = vmatpush1.msra.mxu0 %v632
    %1311 = vmatprep.subr.mxu0 %v641
    %1312 = vmatpush1.msra.mxu0 %v640
    %1313 = vmatprep.subr.mxu0 %v649
    %1314 = vmatpush1.msra.mxu0 %v648
    %1315 = vmatprep.subr.mxu0 %v657
    %1316 = vmatpush1.msra.mxu0 %v656
    %1317 = vmatprep.subr.mxu0 %v665
    %1318 = vmatpush1.msra.mxu0 %v664
    %1319 = vmatprep.mubr.f32.mxu0 %v1183
    %1320 = vmatmul.mubr.f32.gmra.mrb[0].mxu0 %v1159
    %v1321 = vpop.f32.mrb[0].mxu0
    %v1322 = vadd.f32 %v385, %v1321
    %v1323 = vpop.f32.mrb[0].mxu0
    %v1324 = vadd.f32 %v389, %v1323
    %1325 = vdwg.mxu0
    %1326 = vmatprep.subr.mxu0 %v419
    %1327 = vmatpush1.msra.mxu0 %v418
    %1328 = vmatprep.subr.mxu0 %v427
    %1329 = vmatpush1.msra.mxu0 %v426
    %1330 = vmatprep.subr.mxu0 %v435
    %1331 = vmatpush1.msra.mxu0 %v434
    %1332 = vmatprep.subr.mxu0 %v443
    %1333 = vmatpush1.msra.mxu0 %v442
    %1334 = vmatprep.subr.mxu0 %v451
    %1335 = vmatpush1.msra.mxu0 %v450
    %1336 = vmatprep.subr.mxu0 %v459
    %1337 = vmatpush1.msra.mxu0 %v458
    %1338 = vmatprep.subr.mxu0 %v467
    %1339 = vmatpush1.msra.mxu0 %v466
    %1340 = vmatprep.subr.mxu0 %v475
    %1341 = vmatpush1.msra.mxu0 %v474
    %1342 = vmatprep.subr.mxu0 %v483
    %1343 = vmatpush1.msra.mxu0 %v482
    %1344 = vmatprep.subr.mxu0 %v491
    %1345 = vmatpush1.msra.mxu0 %v490
    %1346 = vmatprep.subr.mxu0 %v499
    %1347 = vmatpush1.msra.mxu0 %v498
    %1348 = vmatprep.subr.mxu0 %v507
    %1349 = vmatpush1.msra.mxu0 %v506
    %1350 = vmatprep.subr.mxu0 %v515
    %1351 = vmatpush1.msra.mxu0 %v514
    %1352 = vmatprep.subr.mxu0 %v523
    %1353 = vmatpush1.msra.mxu0 %v522
    %1354 = vmatprep.subr.mxu0 %v531
    %1355 = vmatpush1.msra.mxu0 %v530
    %1356 = vmatprep.subr.mxu0 %v539
    %1357 = vmatpush1.msra.mxu0 %v538
    %1358 = vmatprep.subr.mxu0 %v547
    %1359 = vmatpush1.msra.mxu0 %v546
    %1360 = vmatprep.subr.mxu0 %v555
    %1361 = vmatpush1.msra.mxu0 %v554
    %1362 = vmatprep.subr.mxu0 %v563
    %1363 = vmatpush1.msra.mxu0 %v562
    %1364 = vmatprep.subr.mxu0 %v571
    %1365 = vmatpush1.msra.mxu0 %v570
    %1366 = vmatprep.subr.mxu0 %v579
    %1367 = vmatpush1.msra.mxu0 %v578
    %1368 = vmatprep.subr.mxu0 %v587
    %1369 = vmatpush1.msra.mxu0 %v586
    %1370 = vmatprep.subr.mxu0 %v595
    %1371 = vmatpush1.msra.mxu0 %v594
    %1372 = vmatprep.subr.mxu0 %v603
    %1373 = vmatpush1.msra.mxu0 %v602
    %1374 = vmatprep.subr.mxu0 %v611
    %1375 = vmatpush1.msra.mxu0 %v610
    %1376 = vmatprep.subr.mxu0 %v619
    %1377 = vmatpush1.msra.mxu0 %v618
    %1378 = vmatprep.subr.mxu0 %v627
    %1379 = vmatpush1.msra.mxu0 %v626
    %1380 = vmatprep.subr.mxu0 %v635
    %1381 = vmatpush1.msra.mxu0 %v634
    %1382 = vmatprep.subr.mxu0 %v643
    %1383 = vmatpush1.msra.mxu0 %v642
    %1384 = vmatprep.subr.mxu0 %v651
    %1385 = vmatpush1.msra.mxu0 %v650
    %1386 = vmatprep.subr.mxu0 %v659
    %1387 = vmatpush1.msra.mxu0 %v658
    %1388 = vmatprep.subr.mxu0 %v667
    %1389 = vmatpush1.msra.mxu0 %v666
    %1390 = vmatprep.mubr.f32.mxu0 %v1183
    %1391 = vmatmul.mubr.f32.gmra.mrb[0].mxu0 %v1159
    %v1392 = vpop.f32.mrb[0].mxu0
    %v1393 = vadd.f32 %v393, %v1392
    %v1394 = vpop.f32.mrb[0].mxu0
    %v1395 = vadd.f32 %v397, %v1394
    %1396 = vdwg.mxu0
    %1397 = vmatprep.subr.mxu0 %v421
    %1398 = vmatpush1.msra.mxu0 %v420
    %1399 = vmatprep.subr.mxu0 %v429
    %1400 = vmatpush1.msra.mxu0 %v428
    %1401 = vmatprep.subr.mxu0 %v437
    %1402 = vmatpush1.msra.mxu0 %v436
    %1403 = vmatprep.subr.mxu0 %v445
    %1404 = vmatpush1.msra.mxu0 %v444
    %1405 = vmatprep.subr.mxu0 %v453
    %1406 = vmatpush1.msra.mxu0 %v452
    %1407 = vmatprep.subr.mxu0 %v461
    %1408 = vmatpush1.msra.mxu0 %v460
    %1409 = vmatprep.subr.mxu0 %v469
    %1410 = vmatpush1.msra.mxu0 %v468
    %1411 = vmatprep.subr.mxu0 %v477
    %1412 = vmatpush1.msra.mxu0 %v476
    %1413 = vmatprep.subr.mxu0 %v485
    %1414 = vmatpush1.msra.mxu0 %v484
    %1415 = vmatprep.subr.mxu0 %v493
    %1416 = vmatpush1.msra.mxu0 %v492
    %1417 = vmatprep.subr.mxu0 %v501
    %1418 = vmatpush1.msra.mxu0 %v500
    %1419 = vmatprep.subr.mxu0 %v509
    %1420 = vmatpush1.msra.mxu0 %v508
    %1421 = vmatprep.subr.mxu0 %v517
    %1422 = vmatpush1.msra.mxu0 %v516
    %1423 = vmatprep.subr.mxu0 %v525
    %1424 = vmatpush1.msra.mxu0 %v524
    %1425 = vmatprep.subr.mxu0 %v533
    %1426 = vmatpush1.msra.mxu0 %v532
    %1427 = vmatprep.subr.mxu0 %v541
    %1428 = vmatpush1.msra.mxu0 %v540
    %1429 = vmatprep.subr.mxu0 %v549
    %1430 = vmatpush1.msra.mxu0 %v548
    %1431 = vmatprep.subr.mxu0 %v557
    %1432 = vmatpush1.msra.mxu0 %v556
    %1433 = vmatprep.subr.mxu0 %v565
    %1434 = vmatpush1.msra.mxu0 %v564
    %1435 = vmatprep.subr.mxu0 %v573
    %1436 = vmatpush1.msra.mxu0 %v572
    %1437 = vmatprep.subr.mxu0 %v581
    %1438 = vmatpush1.msra.mxu0 %v580
    %1439 = vmatprep.subr.mxu0 %v589
    %1440 = vmatpush1.msra.mxu0 %v588
    %1441 = vmatprep.subr.mxu0 %v597
    %1442 = vmatpush1.msra.mxu0 %v596
    %1443 = vmatprep.subr.mxu0 %v605
    %1444 = vmatpush1.msra.mxu0 %v604
    %1445 = vmatprep.subr.mxu0 %v613
    %1446 = vmatpush1.msra.mxu0 %v612
    %1447 = vmatprep.subr.mxu0 %v621
    %1448 = vmatpush1.msra.mxu0 %v620
    %1449 = vmatprep.subr.mxu0 %v629
    %1450 = vmatpush1.msra.mxu0 %v628
    %1451 = vmatprep.subr.mxu0 %v637
    %1452 = vmatpush1.msra.mxu0 %v636
    %1453 = vmatprep.subr.mxu0 %v645
    %1454 = vmatpush1.msra.mxu0 %v644
    %1455 = vmatprep.subr.mxu0 %v653
    %1456 = vmatpush1.msra.mxu0 %v652
    %1457 = vmatprep.subr.mxu0 %v661
    %1458 = vmatpush1.msra.mxu0 %v660
    %1459 = vmatprep.subr.mxu0 %v669
    %1460 = vmatpush1.msra.mxu0 %v668
    %1461 = vmatprep.mubr.f32.mxu0 %v1183
    %1462 = vmatmul.mubr.f32.gmra.mrb[0].mxu0 %v1159
    %v1463 = vpop.f32.mrb[0].mxu0
    %v1464 = vadd.f32 %v401, %v1463
    %v1465 = vpop.f32.mrb[0].mxu0
    %v1466 = vadd.f32 %v405, %v1465
    %1467 = vdwg.mxu0
    %v1468 = vld [vmem:[#allocation2 + $0x40] sm:$0xff]
    %v1469 = vld [vmem:[#allocation2 + $0x48] sm:$0xff]
    %v1470 = vld [vmem:[#allocation2 + $0x50] sm:$0xff]
    %v1471 = vld [vmem:[#allocation2 + $0x58] sm:$0xff]
    %v1472 = vadd.f32 %v1251, %v1468
    %v1473 = vadd.f32 %v1253, %v1469
    %v1474 = vadd.f32 %v1322, %v1470
    %v1475 = vadd.f32 %v1324, %v1471
    %v1476 = vxor.u32 %v1472, 2147483648
    %v1477 = vmul.f32 %v1476, 1.442695
    %v1478 = vpow.pop %v1477
    %v1479 = vadd.f32 %v1478, 1.0
    %v1480 = vrcp.pop %v1479
    %v1481 = vmul.f32 1.0, %v1480
    %v1482 = vxor.u32 %v1473, 2147483648
    %v1483 = vmul.f32 %v1482, 1.442695
    %v1484 = vpow.pop %v1483
    %v1485 = vadd.f32 %v1484, 1.0
    %v1486 = vrcp.pop %v1485
    %v1487 = vmul.f32 1.0, %v1486
    %v1488 = vtanh.pop %v1474
    %v1489 = vxor.u32 %v1475, 2147483648
    %v1490 = vmul.f32 %v1489, 1.442695
    %v1491 = vpow.pop %v1490
    %v1492 = vadd.f32 %v1491, 1.0
    %v1493 = vrcp.pop %v1492
    %v1494 = vmul.f32 1.0, %v1493
    %v1495 = vmul.f32 %v1487, %v1157
    %v1496 = vmul.f32 %v1481, %v1488
    %v1497 = vadd.f32 %v1495, %v1496
    %v1498 = vtanh.pop %v1497
    %v1499 = vmul.f32 %v1494, %v1498
    %v1500 = vxor.u32 %v1393, 2147483648
    %v1501 = vmul.f32 %v1500, 1.442695
    %v1502 = vpow.pop %v1501
    %v1503 = vadd.f32 %v1502, 1.0
    %v1504 = vrcp.pop %v1503
    %v1505 = vmul.f32 1.0, %v1504
    %v1506 = vxor.u32 %v1395, 2147483648
    %v1507 = vmul.f32 %v1506, 1.442695
    %v1508 = vpow.pop %v1507
    %v1509 = vadd.f32 %v1508, 1.0
    %v1510 = vrcp.pop %v1509
    %v1511 = vmul.f32 1.0, %v1510
    %v1512 = vtanh.pop %v1464
    %v1513 = vxor.u32 %v1466, 2147483648
    %v1514 = vmul.f32 %v1513, 1.442695
    %v1515 = vpow.pop %v1514
    %v1516 = vadd.f32 %v1515, 1.0
    %v1517 = vrcp.pop %v1516
    %v1518 = vmul.f32 1.0, %v1517
    %v1519 = vmul.f32 %v1511, %v1181
    %v1520 = vmul.f32 %v1505, %v1512
    %v1521 = vadd.f32 %v1519, %v1520
    %v1522 = vtanh.pop %v1521
    %v1523 = vmul.f32 %v1518, %v1522
    %1524 = vmatprep.subr.mxu0 %v415
    %1525 = vmatpush1.msra.mxu0 %v414
    %1526 = vmatprep.subr.mxu0 %v423
    %1527 = vmatpush1.msra.mxu0 %v422
    %1528 = vmatprep.subr.mxu0 %v431
    %1529 = vmatpush1.msra.mxu0 %v430
    %1530 = vmatprep.subr.mxu0 %v439
    %1531 = vmatpush1.msra.mxu0 %v438
    %1532 = vmatprep.subr.mxu0 %v447
    %1533 = vmatpush1.msra.mxu0 %v446
    %1534 = vmatprep.subr.mxu0 %v455
    %1535 = vmatpush1.msra.mxu0 %v454
    %1536 = vmatprep.subr.mxu0 %v463
    %1537 = vmatpush1.msra.mxu0 %v462
    %1538 = vmatprep.subr.mxu0 %v471
    %1539 = vmatpush1.msra.mxu0 %v470
    %1540 = vmatprep.subr.mxu0 %v479
    %1541 = vmatpush1.msra.mxu0 %v478
    %1542 = vmatprep.subr.mxu0 %v487
    %1543 = vmatpush1.msra.mxu0 %v486
    %1544 = vmatprep.subr.mxu0 %v495
    %1545 = vmatpush1.msra.mxu0 %v494
    %1546 = vmatprep.subr.mxu0 %v503
    %1547 = vmatpush1.msra.mxu0 %v502
    %1548 = vmatprep.subr.mxu0 %v511
    %1549 = vmatpush1.msra.mxu0 %v510
    %1550 = vmatprep.subr.mxu0 %v519
    %1551 = vmatpush1.msra.mxu0 %v518
    %1552 = vmatprep.subr.mxu0 %v527
    %1553 = vmatpush1.msra.mxu0 %v526
    %1554 = vmatprep.subr.mxu0 %v535
    %1555 = vmatpush1.msra.mxu0 %v534
    %1556 = vmatprep.subr.mxu0 %v543
    %1557 = vmatpush1.msra.mxu0 %v542
    %1558 = vmatprep.subr.mxu0 %v551
    %1559 = vmatpush1.msra.mxu0 %v550
    %1560 = vmatprep.subr.mxu0 %v559
    %1561 = vmatpush1.msra.mxu0 %v558
    %1562 = vmatprep.subr.mxu0 %v567
    %1563 = vmatpush1.msra.mxu0 %v566
    %1564 = vmatprep.subr.mxu0 %v575
    %1565 = vmatpush1.msra.mxu0 %v574
    %1566 = vmatprep.subr.mxu0 %v583
    %1567 = vmatpush1.msra.mxu0 %v582
    %1568 = vmatprep.subr.mxu0 %v591
    %1569 = vmatpush1.msra.mxu0 %v590
    %1570 = vmatprep.subr.mxu0 %v599
    %1571 = vmatpush1.msra.mxu0 %v598
    %1572 = vmatprep.subr.mxu0 %v607
    %1573 = vmatpush1.msra.mxu0 %v606
    %1574 = vmatprep.subr.mxu0 %v615
    %1575 = vmatpush1.msra.mxu0 %v614
    %1576 = vmatprep.subr.mxu0 %v623
    %1577 = vmatpush1.msra.mxu0 %v622
    %1578 = vmatprep.subr.mxu0 %v631
    %1579 = vmatpush1.msra.mxu0 %v630
    %1580 = vmatprep.subr.mxu0 %v639
    %1581 = vmatpush1.msra.mxu0 %v638
    %1582 = vmatprep.subr.mxu0 %v647
    %1583 = vmatpush1.msra.mxu0 %v646
    %1584 = vmatprep.subr.mxu0 %v655
    %1585 = vmatpush1.msra.mxu0 %v654
    %1586 = vmatprep.subr.mxu0 %v663
    %1587 = vmatpush1.msra.mxu0 %v662
    %1588 = vmatprep.mubr.f32.mxu0 %v1523
    %1589 = vmatmul.mubr.f32.gmra.mrb[0].mxu0 %v1499
    %v1590 = vpop.f32.mrb[0].mxu0
    %v1591 = vadd.f32 %v377, %v1590
    %v1592 = vpop.f32.mrb[0].mxu0
    %v1593 = vadd.f32 %v381, %v1592
    %1594 = vdwg.mxu0
    %1595 = vmatprep.subr.mxu0 %v417
    %1596 = vmatpush1.msra.mxu0 %v416
    %1597 = vmatprep.subr.mxu0 %v425
    %1598 = vmatpush1.msra.mxu0 %v424
    %1599 = vmatprep.subr.mxu0 %v433
    %1600 = vmatpush1.msra.mxu0 %v432
    %1601 = vmatprep.subr.mxu0 %v441
    %1602 = vmatpush1.msra.mxu0 %v440
    %1603 = vmatprep.subr.mxu0 %v449
    %1604 = vmatpush1.msra.mxu0 %v448
    %1605 = vmatprep.subr.mxu0 %v457
    %1606 = vmatpush1.msra.mxu0 %v456
    %1607 = vmatprep.subr.mxu0 %v465
    %1608 = vmatpush1.msra.mxu0 %v464
    %1609 = vmatprep.subr.mxu0 %v473
    %1610 = vmatpush1.msra.mxu0 %v472
    %1611 = vmatprep.subr.mxu0 %v481
    %1612 = vmatpush1.msra.mxu0 %v480
    %1613 = vmatprep.subr.mxu0 %v489
    %1614 = vmatpush1.msra.mxu0 %v488
    %1615 = vmatprep.subr.mxu0 %v497
    %1616 = vmatpush1.msra.mxu0 %v496
    %1617 = vmatprep.subr.mxu0 %v505
    %1618 = vmatpush1.msra.mxu0 %v504
    %1619 = vmatprep.subr.mxu0 %v513
    %1620 = vmatpush1.msra.mxu0 %v512
    %1621 = vmatprep.subr.mxu0 %v521
    %1622 = vmatpush1.msra.mxu0 %v520
    %1623 = vmatprep.subr.mxu0 %v529
    %1624 = vmatpush1.msra.mxu0 %v528
    %1625 = vmatprep.subr.mxu0 %v537
    %1626 = vmatpush1.msra.mxu0 %v536
    %1627 = vmatprep.subr.mxu0 %v545
    %1628 = vmatpush1.msra.mxu0 %v544
    %1629 = vmatprep.subr.mxu0 %v553
    %1630 = vmatpush1.msra.mxu0 %v552
    %1631 = vmatprep.subr.mxu0 %v561
    %1632 = vmatpush1.msra.mxu0 %v560
    %1633 = vmatprep.subr.mxu0 %v569
    %1634 = vmatpush1.msra.mxu0 %v568
    %1635 = vmatprep.subr.mxu0 %v577
    %1636 = vmatpush1.msra.mxu0 %v576
    %1637 = vmatprep.subr.mxu0 %v585
    %1638 = vmatpush1.msra.mxu0 %v584
    %1639 = vmatprep.subr.mxu0 %v593
    %1640 = vmatpush1.msra.mxu0 %v592
    %1641 = vmatprep.subr.mxu0 %v601
    %1642 = vmatpush1.msra.mxu0 %v600
    %1643 = vmatprep.subr.mxu0 %v609
    %1644 = vmatpush1.msra.mxu0 %v608
    %1645 = vmatprep.subr.mxu0 %v617
    %1646 = vmatpush1.msra.mxu0 %v616
    %1647 = vmatprep.subr.mxu0 %v625
    %1648 = vmatpush1.msra.mxu0 %v624
    %1649 = vmatprep.subr.mxu0 %v633
    %1650 = vmatpush1.msra.mxu0 %v632
    %1651 = vmatprep.subr.mxu0 %v641
    %1652 = vmatpush1.msra.mxu0 %v640
    %1653 = vmatprep.subr.mxu0 %v649
    %1654 = vmatpush1.msra.mxu0 %v648
    %1655 = vmatprep.subr.mxu0 %v657
    %1656 = vmatpush1.msra.mxu0 %v656
    %1657 = vmatprep.subr.mxu0 %v665
    %1658 = vmatpush1.msra.mxu0 %v664
    %1659 = vmatprep.mubr.f32.mxu0 %v1523
    %1660 = vmatmul.mubr.f32.gmra.mrb[0].mxu0 %v1499
    %v1661 = vpop.f32.mrb[0].mxu0
    %v1662 = vadd.f32 %v385, %v1661
    %v1663 = vpop.f32.mrb[0].mxu0
    %v1664 = vadd.f32 %v389, %v1663
    %1665 = vdwg.mxu0
    %1666 = vmatprep.subr.mxu0 %v419
    %1667 = vmatpush1.msra.mxu0 %v418
    %1668 = vmatprep.subr.mxu0 %v427
    %1669 = vmatpush1.msra.mxu0 %v426
    %1670 = vmatprep.subr.mxu0 %v435
    %1671 = vmatpush1.msra.mxu0 %v434
    %1672 = vmatprep.subr.mxu0 %v443
    %1673 = vmatpush1.msra.mxu0 %v442
    %1674 = vmatprep.subr.mxu0 %v451
    %1675 = vmatpush1.msra.mxu0 %v450
    %1676 = vmatprep.subr.mxu0 %v459
    %1677 = vmatpush1.msra.mxu0 %v458
    %1678 = vmatprep.subr.mxu0 %v467
    %1679 = vmatpush1.msra.mxu0 %v466
    %1680 = vmatprep.subr.mxu0 %v475
    %1681 = vmatpush1.msra.mxu0 %v474
    %1682 = vmatprep.subr.mxu0 %v483
    %1683 = vmatpush1.msra.mxu0 %v482
    %1684 = vmatprep.subr.mxu0 %v491
    %1685 = vmatpush1.msra.mxu0 %v490
    %1686 = vmatprep.subr.mxu0 %v499
    %1687 = vmatpush1.msra.mxu0 %v498
    %1688 = vmatprep.subr.mxu0 %v507
    %1689 = vmatpush1.msra.mxu0 %v506
    %1690 = vmatprep.subr.mxu0 %v515
    %1691 = vmatpush1.msra.mxu0 %v514
    %1692 = vmatprep.subr.mxu0 %v523
    %1693 = vmatpush1.msra.mxu0 %v522
    %1694 = vmatprep.subr.mxu0 %v531
    %1695 = vmatpush1.msra.mxu0 %v530
    %1696 = vmatprep.subr.mxu0 %v539
    %1697 = vmatpush1.msra.mxu0 %v538
    %1698 = vmatprep.subr.mxu0 %v547
    %1699 = vmatpush1.msra.mxu0 %v546
    %1700 = vmatprep.subr.mxu0 %v555
    %1701 = vmatpush1.msra.mxu0 %v554
    %1702 = vmatprep.subr.mxu0 %v563
    %1703 = vmatpush1.msra.mxu0 %v562
    %1704 = vmatprep.subr.mxu0 %v571
    %1705 = vmatpush1.msra.mxu0 %v570
    %1706 = vmatprep.subr.mxu0 %v579
    %1707 = vmatpush1.msra.mxu0 %v578
    %1708 = vmatprep.subr.mxu0 %v587
    %1709 = vmatpush1.msra.mxu0 %v586
    %1710 = vmatprep.subr.mxu0 %v595
    %1711 = vmatpush1.msra.mxu0 %v594
    %1712 = vmatprep.subr.mxu0 %v603
    %1713 = vmatpush1.msra.mxu0 %v602
    %1714 = vmatprep.subr.mxu0 %v611
    %1715 = vmatpush1.msra.mxu0 %v610
    %1716 = vmatprep.subr.mxu0 %v619
    %1717 = vmatpush1.msra.mxu0 %v618
    %1718 = vmatprep.subr.mxu0 %v627
    %1719 = vmatpush1.msra.mxu0 %v626
    %1720 = vmatprep.subr.mxu0 %v635
    %1721 = vmatpush1.msra.mxu0 %v634
    %1722 = vmatprep.subr.mxu0 %v643
    %1723 = vmatpush1.msra.mxu0 %v642
    %1724 = vmatprep.subr.mxu0 %v651
    %1725 = vmatpush1.msra.mxu0 %v650
    %1726 = vmatprep.subr.mxu0 %v659
    %1727 = vmatpush1.msra.mxu0 %v658
    %1728 = vmatprep.subr.mxu0 %v667
    %1729 = vmatpush1.msra.mxu0 %v666
    %1730 = vmatprep.mubr.f32.mxu0 %v1523
    %1731 = vmatmul.mubr.f32.gmra.mrb[0].mxu0 %v1499
    %v1732 = vpop.f32.mrb[0].mxu0
    %v1733 = vadd.f32 %v393, %v1732
    %v1734 = vpop.f32.mrb[0].mxu0
    %v1735 = vadd.f32 %v397, %v1734
    %1736 = vdwg.mxu0
    %1737 = vmatprep.subr.mxu0 %v421
    %1738 = vmatpush1.msra.mxu0 %v420
    %1739 = vmatprep.subr.mxu0 %v429
    %1740 = vmatpush1.msra.mxu0 %v428
    %1741 = vmatprep.subr.mxu0 %v437
    %1742 = vmatpush1.msra.mxu0 %v436
    %1743 = vmatprep.subr.mxu0 %v445
    %1744 = vmatpush1.msra.mxu0 %v444
    %1745 = vmatprep.subr.mxu0 %v453
    %1746 = vmatpush1.msra.mxu0 %v452
    %1747 = vmatprep.subr.mxu0 %v461
    %1748 = vmatpush1.msra.mxu0 %v460
    %1749 = vmatprep.subr.mxu0 %v469
    %1750 = vmatpush1.msra.mxu0 %v468
    %1751 = vmatprep.subr.mxu0 %v477
    %1752 = vmatpush1.msra.mxu0 %v476
    %1753 = vmatprep.subr.mxu0 %v485
    %1754 = vmatpush1.msra.mxu0 %v484
    %1755 = vmatprep.subr.mxu0 %v493
    %1756 = vmatpush1.msra.mxu0 %v492
    %1757 = vmatprep.subr.mxu0 %v501
    %1758 = vmatpush1.msra.mxu0 %v500
    %1759 = vmatprep.subr.mxu0 %v509
    %1760 = vmatpush1.msra.mxu0 %v508
    %1761 = vmatprep.subr.mxu0 %v517
    %1762 = vmatpush1.msra.mxu0 %v516
    %1763 = vmatprep.subr.mxu0 %v525
    %1764 = vmatpush1.msra.mxu0 %v524
    %1765 = vmatprep.subr.mxu0 %v533
    %1766 = vmatpush1.msra.mxu0 %v532
    %1767 = vmatprep.subr.mxu0 %v541
    %1768 = vmatpush1.msra.mxu0 %v540
    %1769 = vmatprep.subr.mxu0 %v549
    %1770 = vmatpush1.msra.mxu0 %v548
    %1771 = vmatprep.subr.mxu0 %v557
    %1772 = vmatpush1.msra.mxu0 %v556
    %1773 = vmatprep.subr.mxu0 %v565
    %1774 = vmatpush1.msra.mxu0 %v564
    %1775 = vmatprep.subr.mxu0 %v573
    %1776 = vmatpush1.msra.mxu0 %v572
    %1777 = vmatprep.subr.mxu0 %v581
    %1778 = vmatpush1.msra.mxu0 %v580
    %1779 = vmatprep.subr.mxu0 %v589
    %1780 = vmatpush1.msra.mxu0 %v588
    %1781 = vmatprep.subr.mxu0 %v597
    %1782 = vmatpush1.msra.mxu0 %v596
    %1783 = vmatprep.subr.mxu0 %v605
    %1784 = vmatpush1.msra.mxu0 %v604
    %1785 = vmatprep.subr.mxu0 %v613
    %1786 = vmatpush1.msra.mxu0 %v612
    %1787 = vmatprep.subr.mxu0 %v621
    %1788 = vmatpush1.msra.mxu0 %v620
    %1789 = vmatprep.subr.mxu0 %v629
    %1790 = vmatpush1.msra.mxu0 %v628
    %1791 = vmatprep.subr.mxu0 %v637
    %1792 = vmatpush1.msra.mxu0 %v636
    %1793 = vmatprep.subr.mxu0 %v645
    %1794 = vmatpush1.msra.mxu0 %v644
    %1795 = vmatprep.subr.mxu0 %v653
    %1796 = vmatpush1.msra.mxu0 %v652
    %1797 = vmatprep.subr.mxu0 %v661
    %1798 = vmatpush1.msra.mxu0 %v660
    %1799 = vmatprep.subr.mxu0 %v669
    %1800 = vmatpush1.msra.mxu0 %v668
    %1801 = vmatprep.mubr.f32.mxu0 %v1523
    %1802 = vmatmul.mubr.f32.gmra.mrb[0].mxu0 %v1499
    %v1803 = vpop.f32.mrb[0].mxu0
    %v1804 = vadd.f32 %v401, %v1803
    %v1805 = vpop.f32.mrb[0].mxu0
    %v1806 = vadd.f32 %v405, %v1805
    %1807 = vdwg.mxu0
    %v1808 = vld [vmem:[#allocation2 + $0x60] sm:$0xff]
    %v1809 = vld [vmem:[#allocation2 + $0x68] sm:$0xff]
    %v1810 = vld [vmem:[#allocation2 + $0x70] sm:$0xff]
    %v1811 = vld [vmem:[#allocation2 + $0x78] sm:$0xff]
    %v1812 = vadd.f32 %v1591, %v1808
    %v1813 = vadd.f32 %v1593, %v1809
    %v1814 = vadd.f32 %v1662, %v1810
    %v1815 = vadd.f32 %v1664, %v1811
    %v1816 = vxor.u32 %v1812, 2147483648
    %v1817 = vmul.f32 %v1816, 1.442695
    %v1818 = vpow.pop %v1817
    %v1819 = vadd.f32 %v1818, 1.0
    %v1820 = vrcp.pop %v1819
    %v1821 = vmul.f32 1.0, %v1820
    %v1822 = vxor.u32 %v1813, 2147483648
    %v1823 = vmul.f32 %v1822, 1.442695
    %v1824 = vpow.pop %v1823
    %v1825 = vadd.f32 %v1824, 1.0
    %v1826 = vrcp.pop %v1825
    %v1827 = vmul.f32 1.0, %v1826
    %v1828 = vtanh.pop %v1814
    %v1829 = vxor.u32 %v1815, 2147483648
    %v1830 = vmul.f32 %v1829, 1.442695
    %v1831 = vpow.pop %v1830
    %v1832 = vadd.f32 %v1831, 1.0
    %v1833 = vrcp.pop %v1832
    %v1834 = vmul.f32 1.0, %v1833
    %v1835 = vmul.f32 %v1827, %v1497
    %v1836 = vmul.f32 %v1821, %v1828
    %v1837 = vadd.f32 %v1835, %v1836
    %v1838 = vtanh.pop %v1837
    %v1839 = vmul.f32 %v1834, %v1838
    %v1840 = vxor.u32 %v1733, 2147483648
    %v1841 = vmul.f32 %v1840, 1.442695
    %v1842 = vpow.pop %v1841
    %v1843 = vadd.f32 %v1842, 1.0
    %v1844 = vrcp.pop %v1843
    %v1845 = vmul.f32 1.0, %v1844
    %v1846 = vxor.u32 %v1735, 2147483648
    %v1847 = vmul.f32 %v1846, 1.442695
    %v1848 = vpow.pop %v1847
    %v1849 = vadd.f32 %v1848, 1.0
    %v1850 = vrcp.pop %v1849
    %v1851 = vmul.f32 1.0, %v1850
    %v1852 = vtanh.pop %v1804
    %v1853 = vxor.u32 %v1806, 2147483648
    %v1854 = vmul.f32 %v1853, 1.442695
    %v1855 = vpow.pop %v1854
    %v1856 = vadd.f32 %v1855, 1.0
    %v1857 = vrcp.pop %v1856
    %v1858 = vmul.f32 1.0, %v1857
    %v1859 = vmul.f32 %v1851, %v1521
    %v1860 = vmul.f32 %v1845, %v1852
    %v1861 = vadd.f32 %v1859, %v1860
    %v1862 = vtanh.pop %v1861
    %v1863 = vmul.f32 %v1858, %v1862
    %1864 = vmatprep.subr.mxu0 %v415
    %1865 = vmatpush1.msra.mxu0 %v414
    %1866 = vmatprep.subr.mxu0 %v423
    %1867 = vmatpush1.msra.mxu0 %v422
    %1868 = vmatprep.subr.mxu0 %v431
    %1869 = vmatpush1.msra.mxu0 %v430
    %1870 = vmatprep.subr.mxu0 %v439
    %1871 = vmatpush1.msra.mxu0 %v438
    %1872 = vmatprep.subr.mxu0 %v447
    %1873 = vmatpush1.msra.mxu0 %v446
    %1874 = vmatprep.subr.mxu0 %v455
    %1875 = vmatpush1.msra.mxu0 %v454
    %1876 = vmatprep.subr.mxu0 %v463
    %1877 = vmatpush1.msra.mxu0 %v462
    %1878 = vmatprep.subr.mxu0 %v471
    %1879 = vmatpush1.msra.mxu0 %v470
    %1880 = vmatprep.subr.mxu0 %v479
    %1881 = vmatpush1.msra.mxu0 %v478
    %1882 = vmatprep.subr.mxu0 %v487
    %1883 = vmatpush1.msra.mxu0 %v486
    %1884 = vmatprep.subr.mxu0 %v495
    %1885 = vmatpush1.msra.mxu0 %v494
    %1886 = vmatprep.subr.mxu0 %v503
    %1887 = vmatpush1.msra.mxu0 %v502
    %1888 = vmatprep.subr.mxu0 %v511
    %1889 = vmatpush1.msra.mxu0 %v510
    %1890 = vmatprep.subr.mxu0 %v519
    %1891 = vmatpush1.msra.mxu0 %v518
    %1892 = vmatprep.subr.mxu0 %v527
    %1893 = vmatpush1.msra.mxu0 %v526
    %1894 = vmatprep.subr.mxu0 %v535
    %1895 = vmatpush1.msra.mxu0 %v534
    %1896 = vmatprep.subr.mxu0 %v543
    %1897 = vmatpush1.msra.mxu0 %v542
    %1898 = vmatprep.subr.mxu0 %v551
    %1899 = vmatpush1.msra.mxu0 %v550
    %1900 = vmatprep.subr.mxu0 %v559
    %1901 = vmatpush1.msra.mxu0 %v558
    %1902 = vmatprep.subr.mxu0 %v567
    %1903 = vmatpush1.msra.mxu0 %v566
    %1904 = vmatprep.subr.mxu0 %v575
    %1905 = vmatpush1.msra.mxu0 %v574
    %1906 = vmatprep.subr.mxu0 %v583
    %1907 = vmatpush1.msra.mxu0 %v582
    %1908 = vmatprep.subr.mxu0 %v591
    %1909 = vmatpush1.msra.mxu0 %v590
    %1910 = vmatprep.subr.mxu0 %v599
    %1911 = vmatpush1.msra.mxu0 %v598
    %1912 = vmatprep.subr.mxu0 %v607
    %1913 = vmatpush1.msra.mxu0 %v606
    %1914 = vmatprep.subr.mxu0 %v615
    %1915 = vmatpush1.msra.mxu0 %v614
    %1916 = vmatprep.subr.mxu0 %v623
    %1917 = vmatpush1.msra.mxu0 %v622
    %1918 = vmatprep.subr.mxu0 %v631
    %1919 = vmatpush1.msra.mxu0 %v630
    %1920 = vmatprep.subr.mxu0 %v639
    %1921 = vmatpush1.msra.mxu0 %v638
    %1922 = vmatprep.subr.mxu0 %v647
    %1923 = vmatpush1.msra.mxu0 %v646
    %1924 = vmatprep.subr.mxu0 %v655
    %1925 = vmatpush1.msra.mxu0 %v654
    %1926 = vmatprep.subr.mxu0 %v663
    %1927 = vmatpush1.msra.mxu0 %v662
    %1928 = vmatprep.mubr.f32.mxu0 %v1863
    %1929 = vmatmul.mubr.f32.gmra.mrb[0].mxu0 %v1839
    %v1930 = vpop.f32.mrb[0].mxu0
    %v1931 = vadd.f32 %v377, %v1930
    %v1932 = vpop.f32.mrb[0].mxu0
    %v1933 = vadd.f32 %v381, %v1932
    %1934 = vdwg.mxu0
    %1935 = vmatprep.subr.mxu0 %v417
    %1936 = vmatpush1.msra.mxu0 %v416
    %1937 = vmatprep.subr.mxu0 %v425
    %1938 = vmatpush1.msra.mxu0 %v424
    %1939 = vmatprep.subr.mxu0 %v433
    %1940 = vmatpush1.msra.mxu0 %v432
    %1941 = vmatprep.subr.mxu0 %v441
    %1942 = vmatpush1.msra.mxu0 %v440
    %1943 = vmatprep.subr.mxu0 %v449
    %1944 = vmatpush1.msra.mxu0 %v448
    %1945 = vmatprep.subr.mxu0 %v457
    %1946 = vmatpush1.msra.mxu0 %v456
    %1947 = vmatprep.subr.mxu0 %v465
    %1948 = vmatpush1.msra.mxu0 %v464
    %1949 = vmatprep.subr.mxu0 %v473
    %1950 = vmatpush1.msra.mxu0 %v472
    %1951 = vmatprep.subr.mxu0 %v481
    %1952 = vmatpush1.msra.mxu0 %v480
    %1953 = vmatprep.subr.mxu0 %v489
    %1954 = vmatpush1.msra.mxu0 %v488
    %1955 = vmatprep.subr.mxu0 %v497
    %1956 = vmatpush1.msra.mxu0 %v496
    %1957 = vmatprep.subr.mxu0 %v505
    %1958 = vmatpush1.msra.mxu0 %v504
    %1959 = vmatprep.subr.mxu0 %v513
    %1960 = vmatpush1.msra.mxu0 %v512
    %1961 = vmatprep.subr.mxu0 %v521
    %1962 = vmatpush1.msra.mxu0 %v520
    %1963 = vmatprep.subr.mxu0 %v529
    %1964 = vmatpush1.msra.mxu0 %v528
    %1965 = vmatprep.subr.mxu0 %v537
    %1966 = vmatpush1.msra.mxu0 %v536
    %1967 = vmatprep.subr.mxu0 %v545
    %1968 = vmatpush1.msra.mxu0 %v544
    %1969 = vmatprep.subr.mxu0 %v553
    %1970 = vmatpush1.msra.mxu0 %v552
    %1971 = vmatprep.subr.mxu0 %v561
    %1972 = vmatpush1.msra.mxu0 %v560
    %1973 = vmatprep.subr.mxu0 %v569
    %1974 = vmatpush1.msra.mxu0 %v568
    %1975 = vmatprep.subr.mxu0 %v577
    %1976 = vmatpush1.msra.mxu0 %v576
    %1977 = vmatprep.subr.mxu0 %v585
    %1978 = vmatpush1.msra.mxu0 %v584
    %1979 = vmatprep.subr.mxu0 %v593
    %1980 = vmatpush1.msra.mxu0 %v592
    %1981 = vmatprep.subr.mxu0 %v601
    %1982 = vmatpush1.msra.mxu0 %v600
    %1983 = vmatprep.subr.mxu0 %v609
    %1984 = vmatpush1.msra.mxu0 %v608
    %1985 = vmatprep.subr.mxu0 %v617
    %1986 = vmatpush1.msra.mxu0 %v616
    %1987 = vmatprep.subr.mxu0 %v625
    %1988 = vmatpush1.msra.mxu0 %v624
    %1989 = vmatprep.subr.mxu0 %v633
    %1990 = vmatpush1.msra.mxu0 %v632
    %1991 = vmatprep.subr.mxu0 %v641
    %1992 = vmatpush1.msra.mxu0 %v640
    %1993 = vmatprep.subr.mxu0 %v649
    %1994 = vmatpush1.msra.mxu0 %v648
    %1995 = vmatprep.subr.mxu0 %v657
    %1996 = vmatpush1.msra.mxu0 %v656
    %1997 = vmatprep.subr.mxu0 %v665
    %1998 = vmatpush1.msra.mxu0 %v664
    %1999 = vmatprep.mubr.f32.mxu0 %v1863
    %2000 = vmatmul.mubr.f32.gmra.mrb[0].mxu0 %v1839
    %v2001 = vpop.f32.mrb[0].mxu0
    %v2002 = vadd.f32 %v385, %v2001
    %v2003 = vpop.f32.mrb[0].mxu0
    %v2004 = vadd.f32 %v389, %v2003
    %2005 = vdwg.mxu0
    %2006 = vmatprep.subr.mxu0 %v419
    %2007 = vmatpush1.msra.mxu0 %v418
    %2008 = vmatprep.subr.mxu0 %v427
    %2009 = vmatpush1.msra.mxu0 %v426
    %2010 = vmatprep.subr.mxu0 %v435
    %2011 = vmatpush1.msra.mxu0 %v434
    %2012 = vmatprep.subr.mxu0 %v443
    %2013 = vmatpush1.msra.mxu0 %v442
    %2014 = vmatprep.subr.mxu0 %v451
    %2015 = vmatpush1.msra.mxu0 %v450
    %2016 = vmatprep.subr.mxu0 %v459
    %2017 = vmatpush1.msra.mxu0 %v458
    %2018 = vmatprep.subr.mxu0 %v467
    %2019 = vmatpush1.msra.mxu0 %v466
    %2020 = vmatprep.subr.mxu0 %v475
    %2021 = vmatpush1.msra.mxu0 %v474
    %2022 = vmatprep.subr.mxu0 %v483
    %2023 = vmatpush1.msra.mxu0 %v482
    %2024 = vmatprep.subr.mxu0 %v491
    %2025 = vmatpush1.msra.mxu0 %v490
    %2026 = vmatprep.subr.mxu0 %v499
    %2027 = vmatpush1.msra.mxu0 %v498
    %2028 = vmatprep.subr.mxu0 %v507
    %2029 = vmatpush1.msra.mxu0 %v506
    %2030 = vmatprep.subr.mxu0 %v515
    %2031 = vmatpush1.msra.mxu0 %v514
    %2032 = vmatprep.subr.mxu0 %v523
    %2033 = vmatpush1.msra.mxu0 %v522
    %2034 = vmatprep.subr.mxu0 %v531
    %2035 = vmatpush1.msra.mxu0 %v530
    %2036 = vmatprep.subr.mxu0 %v539
    %2037 = vmatpush1.msra.mxu0 %v538
    %2038 = vmatprep.subr.mxu0 %v547
    %2039 = vmatpush1.msra.mxu0 %v546
    %2040 = vmatprep.subr.mxu0 %v555
    %2041 = vmatpush1.msra.mxu0 %v554
    %2042 = vmatprep.subr.mxu0 %v563
    %2043 = vmatpush1.msra.mxu0 %v562
    %2044 = vmatprep.subr.mxu0 %v571
    %2045 = vmatpush1.msra.mxu0 %v570
    %2046 = vmatprep.subr.mxu0 %v579
    %2047 = vmatpush1.msra.mxu0 %v578
    %2048 = vmatprep.subr.mxu0 %v587
    %2049 = vmatpush1.msra.mxu0 %v586
    %2050 = vmatprep.subr.mxu0 %v595
    %2051 = vmatpush1.msra.mxu0 %v594
    %2052 = vmatprep.subr.mxu0 %v603
    %2053 = vmatpush1.msra.mxu0 %v602
    %2054 = vmatprep.subr.mxu0 %v611
    %2055 = vmatpush1.msra.mxu0 %v610
    %2056 = vmatprep.subr.mxu0 %v619
    %2057 = vmatpush1.msra.mxu0 %v618
    %2058 = vmatprep.subr.mxu0 %v627
    %2059 = vmatpush1.msra.mxu0 %v626
    %2060 = vmatprep.subr.mxu0 %v635
    %2061 = vmatpush1.msra.mxu0 %v634
    %2062 = vmatprep.subr.mxu0 %v643
    %2063 = vmatpush1.msra.mxu0 %v642
    %2064 = vmatprep.subr.mxu0 %v651
    %2065 = vmatpush1.msra.mxu0 %v650
    %2066 = vmatprep.subr.mxu0 %v659
    %2067 = vmatpush1.msra.mxu0 %v658
    %2068 = vmatprep.subr.mxu0 %v667
    %2069 = vmatpush1.msra.mxu0 %v666
    %2070 = vmatprep.mubr.f32.mxu0 %v1863
    %2071 = vmatmul.mubr.f32.gmra.mrb[0].mxu0 %v1839
    %v2072 = vpop.f32.mrb[0].mxu0
    %v2073 = vadd.f32 %v393, %v2072
    %v2074 = vpop.f32.mrb[0].mxu0
    %v2075 = vadd.f32 %v397, %v2074
    %2076 = vdwg.mxu0
    %2077 = vmatprep.subr.mxu0 %v421
    %2078 = vmatpush1.msra.mxu0 %v420
    %2079 = vmatprep.subr.mxu0 %v429
    %2080 = vmatpush1.msra.mxu0 %v428
    %2081 = vmatprep.subr.mxu0 %v437
    %2082 = vmatpush1.msra.mxu0 %v436
    %2083 = vmatprep.subr.mxu0 %v445
    %2084 = vmatpush1.msra.mxu0 %v444
    %2085 = vmatprep.subr.mxu0 %v453
    %2086 = vmatpush1.msra.mxu0 %v452
    %2087 = vmatprep.subr.mxu0 %v461
    %2088 = vmatpush1.msra.mxu0 %v460
    %2089 = vmatprep.subr.mxu0 %v469
    %2090 = vmatpush1.msra.mxu0 %v468
    %2091 = vmatprep.subr.mxu0 %v477
    %2092 = vmatpush1.msra.mxu0 %v476
    %2093 = vmatprep.subr.mxu0 %v485
    %2094 = vmatpush1.msra.mxu0 %v484
    %2095 = vmatprep.subr.mxu0 %v493
    %2096 = vmatpush1.msra.mxu0 %v492
    %2097 = vmatprep.subr.mxu0 %v501
    %2098 = vmatpush1.msra.mxu0 %v500
    %2099 = vmatprep.subr.mxu0 %v509
    %2100 = vmatpush1.msra.mxu0 %v508
    %2101 = vmatprep.subr.mxu0 %v517
    %2102 = vmatpush1.msra.mxu0 %v516
    %2103 = vmatprep.subr.mxu0 %v525
    %2104 = vmatpush1.msra.mxu0 %v524
    %2105 = vmatprep.subr.mxu0 %v533
    %2106 = vmatpush1.msra.mxu0 %v532
    %2107 = vmatprep.subr.mxu0 %v541
    %2108 = vmatpush1.msra.mxu0 %v540
    %2109 = vmatprep.subr.mxu0 %v549
    %2110 = vmatpush1.msra.mxu0 %v548
    %2111 = vmatprep.subr.mxu0 %v557
    %2112 = vmatpush1.msra.mxu0 %v556
    %2113 = vmatprep.subr.mxu0 %v565
    %2114 = vmatpush1.msra.mxu0 %v564
    %2115 = vmatprep.subr.mxu0 %v573
    %2116 = vmatpush1.msra.mxu0 %v572
    %2117 = vmatprep.subr.mxu0 %v581
    %2118 = vmatpush1.msra.mxu0 %v580
    %2119 = vmatprep.subr.mxu0 %v589
    %2120 = vmatpush1.msra.mxu0 %v588
    %2121 = vmatprep.subr.mxu0 %v597
    %2122 = vmatpush1.msra.mxu0 %v596
    %2123 = vmatprep.subr.mxu0 %v605
    %2124 = vmatpush1.msra.mxu0 %v604
    %2125 = vmatprep.subr.mxu0 %v613
    %2126 = vmatpush1.msra.mxu0 %v612
    %2127 = vmatprep.subr.mxu0 %v621
    %2128 = vmatpush1.msra.mxu0 %v620
    %2129 = vmatprep.subr.mxu0 %v629
    %2130 = vmatpush1.msra.mxu0 %v628
    %2131 = vmatprep.subr.mxu0 %v637
    %2132 = vmatpush1.msra.mxu0 %v636
    %2133 = vmatprep.subr.mxu0 %v645
    %2134 = vmatpush1.msra.mxu0 %v644
    %2135 = vmatprep.subr.mxu0 %v653
    %2136 = vmatpush1.msra.mxu0 %v652
    %2137 = vmatprep.subr.mxu0 %v661
    %2138 = vmatpush1.msra.mxu0 %v660
    %2139 = vmatprep.subr.mxu0 %v669
    %2140 = vmatpush1.msra.mxu0 %v668
    %2141 = vmatprep.mubr.f32.mxu0 %v1863
    %2142 = vmatmul.mubr.f32.gmra.mrb[0].mxu0 %v1839
    %v2143 = vpop.f32.mrb[0].mxu0
    %v2144 = vadd.f32 %v401, %v2143
    %v2145 = vpop.f32.mrb[0].mxu0
    %v2146 = vadd.f32 %v405, %v2145
    %2147 = vdwg.mxu0
    %v2148 = vld [vmem:[#allocation2 + $0x80] sm:$0xff]
    %v2149 = vld [vmem:[#allocation2 + $0x88] sm:$0xff]
    %v2150 = vld [vmem:[#allocation2 + $0x90] sm:$0xff]
    %v2151 = vld [vmem:[#allocation2 + $0x98] sm:$0xff]
    %v2152 = vadd.f32 %v1931, %v2148
    %v2153 = vadd.f32 %v1933, %v2149
    %v2154 = vadd.f32 %v2002, %v2150
    %v2155 = vadd.f32 %v2004, %v2151
    %v2156 = vxor.u32 %v2152, 2147483648
    %v2157 = vmul.f32 %v2156, 1.442695
    %v2158 = vpow.pop %v2157
    %v2159 = vadd.f32 %v2158, 1.0
    %v2160 = vrcp.pop %v2159
    %v2161 = vmul.f32 1.0, %v2160
    %v2162 = vxor.u32 %v2153, 2147483648
    %v2163 = vmul.f32 %v2162, 1.442695
    %v2164 = vpow.pop %v2163
    %v2165 = vadd.f32 %v2164, 1.0
    %v2166 = vrcp.pop %v2165
    %v2167 = vmul.f32 1.0, %v2166
    %v2168 = vtanh.pop %v2154
    %v2169 = vxor.u32 %v2155, 2147483648
    %v2170 = vmul.f32 %v2169, 1.442695
    %v2171 = vpow.pop %v2170
    %v2172 = vadd.f32 %v2171, 1.0
    %v2173 = vrcp.pop %v2172
    %v2174 = vmul.f32 1.0, %v2173
    %v2175 = vmul.f32 %v2167, %v1837
    %v2176 = vmul.f32 %v2161, %v2168
    %v2177 = vadd.f32 %v2175, %v2176
    %v2178 = vtanh.pop %v2177
    %v2179 = vmul.f32 %v2174, %v2178
    %v2180 = vxor.u32 %v2073, 2147483648
    %v2181 = vmul.f32 %v2180, 1.442695
    %v2182 = vpow.pop %v2181
    %v2183 = vadd.f32 %v2182, 1.0
    %v2184 = vrcp.pop %v2183
    %v2185 = vmul.f32 1.0, %v2184
    %v2186 = vxor.u32 %v2075, 2147483648
    %v2187 = vmul.f32 %v2186, 1.442695
    %v2188 = vpow.pop %v2187
    %v2189 = vadd.f32 %v2188, 1.0
    %v2190 = vrcp.pop %v2189
    %v2191 = vmul.f32 1.0, %v2190
    %v2192 = vtanh.pop %v2144
    %v2193 = vxor.u32 %v2146, 2147483648
    %v2194 = vmul.f32 %v2193, 1.442695
    %v2195 = vpow.pop %v2194
    %v2196 = vadd.f32 %v2195, 1.0
    %v2197 = vrcp.pop %v2196
    %v2198 = vmul.f32 1.0, %v2197
    %v2199 = vmul.f32 %v2191, %v1861
    %v2200 = vmul.f32 %v2185, %v2192
    %v2201 = vadd.f32 %v2199, %v2200
    %v2202 = vtanh.pop %v2201
    %v2203 = vmul.f32 %v2198, %v2202
    %2204 = vst [vmem:[#allocation3] sm:$0xff] %v2203
    %v2205 = vld [vmem:[#allocation4] sm:$0xff]
    %v2206 = vld [vmem:[#allocation4 + $0x8] sm:$0xff]
    %v2207 = vld [vmem:[#allocation4 + $0x10] sm:$0xff]
    %v2208 = vld [vmem:[#allocation4 + $0x18] sm:$0xff]
    %v2209 = vld [vmem:[#allocation4 + $0x20] sm:$0xff]
    %v2210 = vld [vmem:[#allocation4 + $0x28] sm:$0xff]
    %v2211 = vld [vmem:[#allocation4 + $0x30] sm:$0xff]
    %v2212 = vld [vmem:[#allocation4 + $0x38] sm:$0xff]
    %v2213 = vld [vmem:[#allocation4 + $0x40] sm:$0xff]
    %v2214 = vld [vmem:[#allocation4 + $0x48] sm:$0xff]
    %v2215 = vld [vmem:[#allocation4 + $0x50] sm:$0xff]
    %v2216 = vld [vmem:[#allocation4 + $0x58] sm:$0xff]
    %v2217 = vld [vmem:[#allocation4 + $0x60] sm:$0xff]
    %v2218 = vld [vmem:[#allocation4 + $0x68] sm:$0xff]
    %v2219 = vld [vmem:[#allocation4 + $0x70] sm:$0xff]
    %v2220 = vld [vmem:[#allocation4 + $0x78] sm:$0xff]
    %v2221 = vld [vmem:[#allocation4 + $0x80] sm:$0xff]
    %v2222 = vld [vmem:[#allocation4 + $0x88] sm:$0xff]
    %v2223 = vld [vmem:[#allocation4 + $0x90] sm:$0xff]
    %v2224 = vld [vmem:[#allocation4 + $0x98] sm:$0xff]
    %v2225 = vld [vmem:[#allocation4 + $0xa0] sm:$0xff]
    %v2226 = vld [vmem:[#allocation4 + $0xa8] sm:$0xff]
    %v2227 = vld [vmem:[#allocation4 + $0xb0] sm:$0xff]
    %v2228 = vld [vmem:[#allocation4 + $0xb8] sm:$0xff]
    %v2229 = vld [vmem:[#allocation4 + $0xc0] sm:$0xff]
    %v2230 = vld [vmem:[#allocation4 + $0xc8] sm:$0xff]
    %v2231 = vld [vmem:[#allocation4 + $0xd0] sm:$0xff]
    %v2232 = vld [vmem:[#allocation4 + $0xd8] sm:$0xff]
    %v2233 = vld [vmem:[#allocation4 + $0xe0] sm:$0xff]
    %v2234 = vld [vmem:[#allocation4 + $0xe8] sm:$0xff]
    %v2235 = vld [vmem:[#allocation4 + $0xf0] sm:$0xff]
    %v2236 = vld [vmem:[#allocation4 + $0xf8] sm:$0xff]
    %v2237 = vld [vmem:[#allocation4 + $0x100] sm:$0xff]
    %v2238 = vld [vmem:[#allocation4 + $0x108] sm:$0xff]
    %v2239 = vld [vmem:[#allocation4 + $0x110] sm:$0xff]
    %v2240 = vld [vmem:[#allocation4 + $0x118] sm:$0xff]
    %v2241 = vld [vmem:[#allocation4 + $0x120] sm:$0xff]
    %v2242 = vld [vmem:[#allocation4 + $0x128] sm:$0xff]
    %v2243 = vld [vmem:[#allocation4 + $0x130] sm:$0xff]
    %v2244 = vld [vmem:[#allocation4 + $0x138] sm:$0xff]
    %v2245 = vld [vmem:[#allocation4 + $0x140] sm:$0xff]
    %v2246 = vld [vmem:[#allocation4 + $0x148] sm:$0xff]
    %v2247 = vld [vmem:[#allocation4 + $0x150] sm:$0xff]
    %v2248 = vld [vmem:[#allocation4 + $0x158] sm:$0xff]
    %v2249 = vld [vmem:[#allocation4 + $0x160] sm:$0xff]
    %v2250 = vld [vmem:[#allocation4 + $0x168] sm:$0xff]
    %v2251 = vld [vmem:[#allocation4 + $0x170] sm:$0xff]
    %v2252 = vld [vmem:[#allocation4 + $0x178] sm:$0xff]
    %v2253 = vld [vmem:[#allocation4 + $0x180] sm:$0xff]
    %v2254 = vld [vmem:[#allocation4 + $0x188] sm:$0xff]
    %v2255 = vld [vmem:[#allocation4 + $0x190] sm:$0xff]
    %v2256 = vld [vmem:[#allocation4 + $0x198] sm:$0xff]
    %v2257 = vld [vmem:[#allocation4 + $0x1a0] sm:$0xff]
    %v2258 = vld [vmem:[#allocation4 + $0x1a8] sm:$0xff]
    %v2259 = vld [vmem:[#allocation4 + $0x1b0] sm:$0xff]
    %v2260 = vld [vmem:[#allocation4 + $0x1b8] sm:$0xff]
    %v2261 = vld [vmem:[#allocation4 + $0x1c0] sm:$0xff]
    %v2262 = vld [vmem:[#allocation4 + $0x1c8] sm:$0xff]
    %v2263 = vld [vmem:[#allocation4 + $0x1d0] sm:$0xff]
    %v2264 = vld [vmem:[#allocation4 + $0x1d8] sm:$0xff]
    %v2265 = vld [vmem:[#allocation4 + $0x1e0] sm:$0xff]
    %v2266 = vld [vmem:[#allocation4 + $0x1e8] sm:$0xff]
    %v2267 = vld [vmem:[#allocation4 + $0x1f0] sm:$0xff]
    %v2268 = vld [vmem:[#allocation4 + $0x1f8] sm:$0xff]
    %v2269 = vld [vmem:[#allocation4 + $0x200] sm:$0xff]
    %v2270 = vld [vmem:[#allocation4 + $0x208] sm:$0xff]
    %v2271 = vld [vmem:[#allocation4 + $0x210] sm:$0xff]
    %v2272 = vld [vmem:[#allocation4 + $0x218] sm:$0xff]
    %v2273 = vld [vmem:[#allocation4 + $0x220] sm:$0xff]
    %v2274 = vld [vmem:[#allocation4 + $0x228] sm:$0xff]
    %v2275 = vld [vmem:[#allocation4 + $0x230] sm:$0xff]
    %v2276 = vld [vmem:[#allocation4 + $0x238] sm:$0xff]
    %v2277 = vld [vmem:[#allocation4 + $0x240] sm:$0xff]
    %v2278 = vld [vmem:[#allocation4 + $0x248] sm:$0xff]
    %v2279 = vld [vmem:[#allocation4 + $0x250] sm:$0xff]
    %v2280 = vld [vmem:[#allocation4 + $0x258] sm:$0xff]
    %v2281 = vld [vmem:[#allocation4 + $0x260] sm:$0xff]
    %v2282 = vld [vmem:[#allocation4 + $0x268] sm:$0xff]
    %v2283 = vld [vmem:[#allocation4 + $0x270] sm:$0xff]
    %v2284 = vld [vmem:[#allocation4 + $0x278] sm:$0xff]
    %v2285 = vld [vmem:[#allocation4 + $0x280] sm:$0xff]
    %v2286 = vld [vmem:[#allocation4 + $0x288] sm:$0xff]
    %v2287 = vld [vmem:[#allocation4 + $0x290] sm:$0xff]
    %v2288 = vld [vmem:[#allocation4 + $0x298] sm:$0xff]
    %v2289 = vld [vmem:[#allocation4 + $0x2a0] sm:$0xff]
    %v2290 = vld [vmem:[#allocation4 + $0x2a8] sm:$0xff]
    %v2291 = vld [vmem:[#allocation4 + $0x2b0] sm:$0xff]
    %v2292 = vld [vmem:[#allocation4 + $0x2b8] sm:$0xff]
    %v2293 = vld [vmem:[#allocation4 + $0x2c0] sm:$0xff]
    %v2294 = vld [vmem:[#allocation4 + $0x2c8] sm:$0xff]
    %v2295 = vld [vmem:[#allocation4 + $0x2d0] sm:$0xff]
    %v2296 = vld [vmem:[#allocation4 + $0x2d8] sm:$0xff]
    %v2297 = vld [vmem:[#allocation4 + $0x2e0] sm:$0xff]
    %v2298 = vld [vmem:[#allocation4 + $0x2e8] sm:$0xff]
    %v2299 = vld [vmem:[#allocation4 + $0x2f0] sm:$0xff]
    %v2300 = vld [vmem:[#allocation4 + $0x2f8] sm:$0xff]
    %v2301 = vld [vmem:[#allocation4 + $0x300] sm:$0xff]
    %v2302 = vld [vmem:[#allocation4 + $0x308] sm:$0xff]
    %v2303 = vld [vmem:[#allocation4 + $0x310] sm:$0xff]
    %v2304 = vld [vmem:[#allocation4 + $0x318] sm:$0xff]
    %v2305 = vld [vmem:[#allocation4 + $0x320] sm:$0xff]
    %v2306 = vld [vmem:[#allocation4 + $0x328] sm:$0xff]
    %v2307 = vld [vmem:[#allocation4 + $0x330] sm:$0xff]
    %v2308 = vld [vmem:[#allocation4 + $0x338] sm:$0xff]
    %v2309 = vld [vmem:[#allocation4 + $0x340] sm:$0xff]
    %v2310 = vld [vmem:[#allocation4 + $0x348] sm:$0xff]
    %v2311 = vld [vmem:[#allocation4 + $0x350] sm:$0xff]
    %v2312 = vld [vmem:[#allocation4 + $0x358] sm:$0xff]
    %v2313 = vld [vmem:[#allocation4 + $0x360] sm:$0xff]
    %v2314 = vld [vmem:[#allocation4 + $0x368] sm:$0xff]
    %v2315 = vld [vmem:[#allocation4 + $0x370] sm:$0xff]
    %v2316 = vld [vmem:[#allocation4 + $0x378] sm:$0xff]
    %v2317 = vld [vmem:[#allocation4 + $0x380] sm:$0xff]
    %v2318 = vld [vmem:[#allocation4 + $0x388] sm:$0xff]
    %v2319 = vld [vmem:[#allocation4 + $0x390] sm:$0xff]
    %v2320 = vld [vmem:[#allocation4 + $0x398] sm:$0xff]
    %v2321 = vld [vmem:[#allocation4 + $0x3a0] sm:$0xff]
    %v2322 = vld [vmem:[#allocation4 + $0x3a8] sm:$0xff]
    %v2323 = vld [vmem:[#allocation4 + $0x3b0] sm:$0xff]
    %v2324 = vld [vmem:[#allocation4 + $0x3b8] sm:$0xff]
    %v2325 = vld [vmem:[#allocation4 + $0x3c0] sm:$0xff]
    %v2326 = vld [vmem:[#allocation4 + $0x3c8] sm:$0xff]
    %v2327 = vld [vmem:[#allocation4 + $0x3d0] sm:$0xff]
    %v2328 = vld [vmem:[#allocation4 + $0x3d8] sm:$0xff]
    %v2329 = vld [vmem:[#allocation4 + $0x3e0] sm:$0xff]
    %v2330 = vld [vmem:[#allocation4 + $0x3e8] sm:$0xff]
    %v2331 = vld [vmem:[#allocation4 + $0x3f0] sm:$0xff]
    %v2332 = vld [vmem:[#allocation4 + $0x3f8] sm:$0xff]
    %v2333 = vld [vmem:[#allocation4 + $0x400] sm:$0xff]
    %v2334 = vld [vmem:[#allocation4 + $0x408] sm:$0xff]
    %v2335 = vld [vmem:[#allocation4 + $0x410] sm:$0xff]
    %v2336 = vld [vmem:[#allocation4 + $0x418] sm:$0xff]
    %v2337 = vld [vmem:[#allocation4 + $0x420] sm:$0xff]
    %v2338 = vld [vmem:[#allocation4 + $0x428] sm:$0xff]
    %v2339 = vld [vmem:[#allocation4 + $0x430] sm:$0xff]
    %v2340 = vld [vmem:[#allocation4 + $0x438] sm:$0xff]
    %v2341 = vld [vmem:[#allocation4 + $0x440] sm:$0xff]
    %v2342 = vld [vmem:[#allocation4 + $0x448] sm:$0xff]
    %v2343 = vld [vmem:[#allocation4 + $0x450] sm:$0xff]
    %v2344 = vld [vmem:[#allocation4 + $0x458] sm:$0xff]
    %v2345 = vld [vmem:[#allocation4 + $0x460] sm:$0xff]
    %v2346 = vld [vmem:[#allocation4 + $0x468] sm:$0xff]
    %v2347 = vld [vmem:[#allocation4 + $0x470] sm:$0xff]
    %v2348 = vld [vmem:[#allocation4 + $0x478] sm:$0xff]
    %v2349 = vld [vmem:[#allocation4 + $0x480] sm:$0xff]
    %v2350 = vld [vmem:[#allocation4 + $0x488] sm:$0xff]
    %v2351 = vld [vmem:[#allocation4 + $0x490] sm:$0xff]
    %v2352 = vld [vmem:[#allocation4 + $0x498] sm:$0xff]
    %v2353 = vld [vmem:[#allocation4 + $0x4a0] sm:$0xff]
    %v2354 = vld [vmem:[#allocation4 + $0x4a8] sm:$0xff]
    %v2355 = vld [vmem:[#allocation4 + $0x4b0] sm:$0xff]
    %v2356 = vld [vmem:[#allocation4 + $0x4b8] sm:$0xff]
    %v2357 = vld [vmem:[#allocation4 + $0x4c0] sm:$0xff]
    %v2358 = vld [vmem:[#allocation4 + $0x4c8] sm:$0xff]
    %v2359 = vld [vmem:[#allocation4 + $0x4d0] sm:$0xff]
    %v2360 = vld [vmem:[#allocation4 + $0x4d8] sm:$0xff]
    %v2361 = vld [vmem:[#allocation4 + $0x4e0] sm:$0xff]
    %v2362 = vld [vmem:[#allocation4 + $0x4e8] sm:$0xff]
    %v2363 = vld [vmem:[#allocation4 + $0x4f0] sm:$0xff]
    %v2364 = vld [vmem:[#allocation4 + $0x4f8] sm:$0xff]
    %v2365 = vld [vmem:[#allocation4 + $0x500] sm:$0xff]
    %v2366 = vld [vmem:[#allocation4 + $0x508] sm:$0xff]
    %v2367 = vld [vmem:[#allocation4 + $0x510] sm:$0xff]
    %v2368 = vld [vmem:[#allocation4 + $0x518] sm:$0xff]
    %v2369 = vld [vmem:[#allocation4 + $0x520] sm:$0xff]
    %v2370 = vld [vmem:[#allocation4 + $0x528] sm:$0xff]
    %v2371 = vld [vmem:[#allocation4 + $0x530] sm:$0xff]
    %v2372 = vld [vmem:[#allocation4 + $0x538] sm:$0xff]
    %v2373 = vld [vmem:[#allocation4 + $0x540] sm:$0xff]
    %v2374 = vld [vmem:[#allocation4 + $0x548] sm:$0xff]
    %v2375 = vld [vmem:[#allocation4 + $0x550] sm:$0xff]
    %v2376 = vld [vmem:[#allocation4 + $0x558] sm:$0xff]
    %v2377 = vld [vmem:[#allocation4 + $0x560] sm:$0xff]
    %v2378 = vld [vmem:[#allocation4 + $0x568] sm:$0xff]
    %v2379 = vld [vmem:[#allocation4 + $0x570] sm:$0xff]
    %v2380 = vld [vmem:[#allocation4 + $0x578] sm:$0xff]
    %v2381 = vld [vmem:[#allocation4 + $0x580] sm:$0xff]
    %v2382 = vld [vmem:[#allocation4 + $0x588] sm:$0xff]
    %v2383 = vld [vmem:[#allocation4 + $0x590] sm:$0xff]
    %v2384 = vld [vmem:[#allocation4 + $0x598] sm:$0xff]
    %v2385 = vld [vmem:[#allocation4 + $0x5a0] sm:$0xff]
    %v2386 = vld [vmem:[#allocation4 + $0x5a8] sm:$0xff]
    %v2387 = vld [vmem:[#allocation4 + $0x5b0] sm:$0xff]
    %v2388 = vld [vmem:[#allocation4 + $0x5b8] sm:$0xff]
    %v2389 = vld [vmem:[#allocation4 + $0x5c0] sm:$0xff]
    %v2390 = vld [vmem:[#allocation4 + $0x5c8] sm:$0xff]
    %v2391 = vld [vmem:[#allocation4 + $0x5d0] sm:$0xff]
    %v2392 = vld [vmem:[#allocation4 + $0x5d8] sm:$0xff]
    %v2393 = vld [vmem:[#allocation4 + $0x5e0] sm:$0xff]
    %v2394 = vld [vmem:[#allocation4 + $0x5e8] sm:$0xff]
    %v2395 = vld [vmem:[#allocation4 + $0x5f0] sm:$0xff]
    %v2396 = vld [vmem:[#allocation4 + $0x5f8] sm:$0xff]
    %v2397 = vld [vmem:[#allocation4 + $0x600] sm:$0xff]
    %v2398 = vld [vmem:[#allocation4 + $0x608] sm:$0xff]
    %v2399 = vld [vmem:[#allocation4 + $0x610] sm:$0xff]
    %v2400 = vld [vmem:[#allocation4 + $0x618] sm:$0xff]
    %v2401 = vld [vmem:[#allocation4 + $0x620] sm:$0xff]
    %v2402 = vld [vmem:[#allocation4 + $0x628] sm:$0xff]
    %v2403 = vld [vmem:[#allocation4 + $0x630] sm:$0xff]
    %v2404 = vld [vmem:[#allocation4 + $0x638] sm:$0xff]
    %v2405 = vld [vmem:[#allocation4 + $0x640] sm:$0xff]
    %v2406 = vld [vmem:[#allocation4 + $0x648] sm:$0xff]
    %v2407 = vld [vmem:[#allocation4 + $0x650] sm:$0xff]
    %v2408 = vld [vmem:[#allocation4 + $0x658] sm:$0xff]
    %v2409 = vld [vmem:[#allocation4 + $0x660] sm:$0xff]
    %v2410 = vld [vmem:[#allocation4 + $0x668] sm:$0xff]
    %v2411 = vld [vmem:[#allocation4 + $0x670] sm:$0xff]
    %v2412 = vld [vmem:[#allocation4 + $0x678] sm:$0xff]
    %v2413 = vld [vmem:[#allocation4 + $0x680] sm:$0xff]
    %v2414 = vld [vmem:[#allocation4 + $0x688] sm:$0xff]
    %v2415 = vld [vmem:[#allocation4 + $0x690] sm:$0xff]
    %v2416 = vld [vmem:[#allocation4 + $0x698] sm:$0xff]
    %v2417 = vld [vmem:[#allocation4 + $0x6a0] sm:$0xff]
    %v2418 = vld [vmem:[#allocation4 + $0x6a8] sm:$0xff]
    %v2419 = vld [vmem:[#allocation4 + $0x6b0] sm:$0xff]
    %v2420 = vld [vmem:[#allocation4 + $0x6b8] sm:$0xff]
    %v2421 = vld [vmem:[#allocation4 + $0x6c0] sm:$0xff]
    %v2422 = vld [vmem:[#allocation4 + $0x6c8] sm:$0xff]
    %v2423 = vld [vmem:[#allocation4 + $0x6d0] sm:$0xff]
    %v2424 = vld [vmem:[#allocation4 + $0x6d8] sm:$0xff]
    %v2425 = vld [vmem:[#allocation4 + $0x6e0] sm:$0xff]
    %v2426 = vld [vmem:[#allocation4 + $0x6e8] sm:$0xff]
    %v2427 = vld [vmem:[#allocation4 + $0x6f0] sm:$0xff]
    %v2428 = vld [vmem:[#allocation4 + $0x6f8] sm:$0xff]
    %v2429 = vld [vmem:[#allocation4 + $0x700] sm:$0xff]
    %v2430 = vld [vmem:[#allocation4 + $0x708] sm:$0xff]
    %v2431 = vld [vmem:[#allocation4 + $0x710] sm:$0xff]
    %v2432 = vld [vmem:[#allocation4 + $0x718] sm:$0xff]
    %v2433 = vld [vmem:[#allocation4 + $0x720] sm:$0xff]
    %v2434 = vld [vmem:[#allocation4 + $0x728] sm:$0xff]
    %v2435 = vld [vmem:[#allocation4 + $0x730] sm:$0xff]
    %v2436 = vld [vmem:[#allocation4 + $0x738] sm:$0xff]
    %v2437 = vld [vmem:[#allocation4 + $0x740] sm:$0xff]
    %v2438 = vld [vmem:[#allocation4 + $0x748] sm:$0xff]
    %v2439 = vld [vmem:[#allocation4 + $0x750] sm:$0xff]
    %v2440 = vld [vmem:[#allocation4 + $0x758] sm:$0xff]
    %v2441 = vld [vmem:[#allocation4 + $0x760] sm:$0xff]
    %v2442 = vld [vmem:[#allocation4 + $0x768] sm:$0xff]
    %v2443 = vld [vmem:[#allocation4 + $0x770] sm:$0xff]
    %v2444 = vld [vmem:[#allocation4 + $0x778] sm:$0xff]
    %v2445 = vld [vmem:[#allocation4 + $0x780] sm:$0xff]
    %v2446 = vld [vmem:[#allocation4 + $0x788] sm:$0xff]
    %v2447 = vld [vmem:[#allocation4 + $0x790] sm:$0xff]
    %v2448 = vld [vmem:[#allocation4 + $0x798] sm:$0xff]
    %v2449 = vld [vmem:[#allocation4 + $0x7a0] sm:$0xff]
    %v2450 = vld [vmem:[#allocation4 + $0x7a8] sm:$0xff]
    %v2451 = vld [vmem:[#allocation4 + $0x7b0] sm:$0xff]
    %v2452 = vld [vmem:[#allocation4 + $0x7b8] sm:$0xff]
    %v2453 = vld [vmem:[#allocation4 + $0x7c0] sm:$0xff]
    %v2454 = vld [vmem:[#allocation4 + $0x7c8] sm:$0xff]
    %v2455 = vld [vmem:[#allocation4 + $0x7d0] sm:$0xff]
    %v2456 = vld [vmem:[#allocation4 + $0x7d8] sm:$0xff]
    %v2457 = vld [vmem:[#allocation4 + $0x7e0] sm:$0xff]
    %v2458 = vld [vmem:[#allocation4 + $0x7e8] sm:$0xff]
    %v2459 = vld [vmem:[#allocation4 + $0x7f0] sm:$0xff]
    %v2460 = vld [vmem:[#allocation4 + $0x7f8] sm:$0xff]
    %2461 = vmatprep.subr.mxu0 %v2206
    %2462 = vmatpush1.msra.mxu0 %v2205
    %2463 = vmatprep.subr.mxu0 %v2214
    %2464 = vmatpush1.msra.mxu0 %v2213
    %2465 = vmatprep.subr.mxu0 %v2222
    %2466 = vmatpush1.msra.mxu0 %v2221
    %2467 = vmatprep.subr.mxu0 %v2230
    %2468 = vmatpush1.msra.mxu0 %v2229
    %2469 = vmatprep.subr.mxu0 %v2238
    %2470 = vmatpush1.msra.mxu0 %v2237
    %2471 = vmatprep.subr.mxu0 %v2246
    %2472 = vmatpush1.msra.mxu0 %v2245
    %2473 = vmatprep.subr.mxu0 %v2254
    %2474 = vmatpush1.msra.mxu0 %v2253
    %2475 = vmatprep.subr.mxu0 %v2262
    %2476 = vmatpush1.msra.mxu0 %v2261
    %2477 = vmatprep.subr.mxu0 %v2270
    %2478 = vmatpush1.msra.mxu0 %v2269
    %2479 = vmatprep.subr.mxu0 %v2278
    %2480 = vmatpush1.msra.mxu0 %v2277
    %2481 = vmatprep.subr.mxu0 %v2286
    %2482 = vmatpush1.msra.mxu0 %v2285
    %2483 = vmatprep.subr.mxu0 %v2294
    %2484 = vmatpush1.msra.mxu0 %v2293
    %2485 = vmatprep.subr.mxu0 %v2302
    %2486 = vmatpush1.msra.mxu0 %v2301
    %2487 = vmatprep.subr.mxu0 %v2310
    %2488 = vmatpush1.msra.mxu0 %v2309
    %2489 = vmatprep.subr.mxu0 %v2318
    %2490 = vmatpush1.msra.mxu0 %v2317
    %2491 = vmatprep.subr.mxu0 %v2326
    %2492 = vmatpush1.msra.mxu0 %v2325
    %2493 = vmatprep.subr.mxu0 %v2334
    %2494 = vmatpush1.msra.mxu0 %v2333
    %2495 = vmatprep.subr.mxu0 %v2342
    %2496 = vmatpush1.msra.mxu0 %v2341
    %2497 = vmatprep.subr.mxu0 %v2350
    %2498 = vmatpush1.msra.mxu0 %v2349
    %2499 = vmatprep.subr.mxu0 %v2358
    %2500 = vmatpush1.msra.mxu0 %v2357
    %2501 = vmatprep.subr.mxu0 %v2366
    %2502 = vmatpush1.msra.mxu0 %v2365
    %2503 = vmatprep.subr.mxu0 %v2374
    %2504 = vmatpush1.msra.mxu0 %v2373
    %2505 = vmatprep.subr.mxu0 %v2382
    %2506 = vmatpush1.msra.mxu0 %v2381
    %2507 = vmatprep.subr.mxu0 %v2390
    %2508 = vmatpush1.msra.mxu0 %v2389
    %2509 = vmatprep.subr.mxu0 %v2398
    %2510 = vmatpush1.msra.mxu0 %v2397
    %2511 = vmatprep.subr.mxu0 %v2406
    %2512 = vmatpush1.msra.mxu0 %v2405
    %2513 = vmatprep.subr.mxu0 %v2414
    %2514 = vmatpush1.msra.mxu0 %v2413
    %2515 = vmatprep.subr.mxu0 %v2422
    %2516 = vmatpush1.msra.mxu0 %v2421
    %2517 = vmatprep.subr.mxu0 %v2430
    %2518 = vmatpush1.msra.mxu0 %v2429
    %2519 = vmatprep.subr.mxu0 %v2438
    %2520 = vmatpush1.msra.mxu0 %v2437
    %2521 = vmatprep.subr.mxu0 %v2446
    %2522 = vmatpush1.msra.mxu0 %v2445
    %2523 = vmatprep.subr.mxu0 %v2454
    %2524 = vmatpush1.msra.mxu0 %v2453
    %2525 = vmatprep.mubr.f32.mxu0 %v2203
    %2526 = vmatmul.mubr.f32.gmra.mrb[0].mxu0 %v2179
    %v2527 = vpop.f32.mrb[0].mxu0
    %v2528 = vadd.f32 %v377, %v2527
    %v2529 = vpop.f32.mrb[0].mxu0
    %v2530 = vadd.f32 %v381, %v2529
    %2531 = vdwg.mxu0
    %2532 = vmatprep.subr.mxu0 %v2208
    %2533 = vmatpush1.msra.mxu0 %v2207
    %2534 = vmatprep.subr.mxu0 %v2216
    %2535 = vmatpush1.msra.mxu0 %v2215
    %2536 = vmatprep.subr.mxu0 %v2224
    %2537 = vmatpush1.msra.mxu0 %v2223
    %2538 = vmatprep.subr.mxu0 %v2232
    %2539 = vmatpush1.msra.mxu0 %v2231
    %2540 = vmatprep.subr.mxu0 %v2240
    %2541 = vmatpush1.msra.mxu0 %v2239
    %2542 = vmatprep.subr.mxu0 %v2248
    %2543 = vmatpush1.msra.mxu0 %v2247
    %2544 = vmatprep.subr.mxu0 %v2256
    %2545 = vmatpush1.msra.mxu0 %v2255
    %2546 = vmatprep.subr.mxu0 %v2264
    %2547 = vmatpush1.msra.mxu0 %v2263
    %2548 = vmatprep.subr.mxu0 %v2272
    %2549 = vmatpush1.msra.mxu0 %v2271
    %2550 = vmatprep.subr.mxu0 %v2280
    %2551 = vmatpush1.msra.mxu0 %v2279
    %2552 = vmatprep.subr.mxu0 %v2288
    %2553 = vmatpush1.msra.mxu0 %v2287
    %2554 = vmatprep.subr.mxu0 %v2296
    %2555 = vmatpush1.msra.mxu0 %v2295
    %2556 = vmatprep.subr.mxu0 %v2304
    %2557 = vmatpush1.msra.mxu0 %v2303
    %2558 = vmatprep.subr.mxu0 %v2312
    %2559 = vmatpush1.msra.mxu0 %v2311
    %2560 = vmatprep.subr.mxu0 %v2320
    %2561 = vmatpush1.msra.mxu0 %v2319
    %2562 = vmatprep.subr.mxu0 %v2328
    %2563 = vmatpush1.msra.mxu0 %v2327
    %2564 = vmatprep.subr.mxu0 %v2336
    %2565 = vmatpush1.msra.mxu0 %v2335
    %2566 = vmatprep.subr.mxu0 %v2344
    %2567 = vmatpush1.msra.mxu0 %v2343
    %2568 = vmatprep.subr.mxu0 %v2352
    %2569 = vmatpush1.msra.mxu0 %v2351
    %2570 = vmatprep.subr.mxu0 %v2360
    %2571 = vmatpush1.msra.mxu0 %v2359
    %2572 = vmatprep.subr.mxu0 %v2368
    %2573 = vmatpush1.msra.mxu0 %v2367
    %2574 = vmatprep.subr.mxu0 %v2376
    %2575 = vmatpush1.msra.mxu0 %v2375
    %2576 = vmatprep.subr.mxu0 %v2384
    %2577 = vmatpush1.msra.mxu0 %v2383
    %2578 = vmatprep.subr.mxu0 %v2392
    %2579 = vmatpush1.msra.mxu0 %v2391
    %2580 = vmatprep.subr.mxu0 %v2400
    %2581 = vmatpush1.msra.mxu0 %v2399
    %2582 = vmatprep.subr.mxu0 %v2408
    %2583 = vmatpush1.msra.mxu0 %v2407
    %2584 = vmatprep.subr.mxu0 %v2416
    %2585 = vmatpush1.msra.mxu0 %v2415
    %2586 = vmatprep.subr.mxu0 %v2424
    %2587 = vmatpush1.msra.mxu0 %v2423
    %2588 = vmatprep.subr.mxu0 %v2432
    %2589 = vmatpush1.msra.mxu0 %v2431
    %2590 = vmatprep.subr.mxu0 %v2440
    %2591 = vmatpush1.msra.mxu0 %v2439
    %2592 = vmatprep.subr.mxu0 %v2448
    %2593 = vmatpush1.msra.mxu0 %v2447
    %2594 = vmatprep.subr.mxu0 %v2456
    %2595 = vmatpush1.msra.mxu0 %v2455
    %2596 = vmatprep.mubr.f32.mxu0 %v2203
    %2597 = vmatmul.mubr.f32.gmra.mrb[0].mxu0 %v2179
    %v2598 = vpop.f32.mrb[0].mxu0
    %v2599 = vadd.f32 %v385, %v2598
    %v2600 = vpop.f32.mrb[0].mxu0
    %v2601 = vadd.f32 %v389, %v2600
    %2602 = vdwg.mxu0
    %2603 = vmatprep.subr.mxu0 %v2210
    %2604 = vmatpush1.msra.mxu0 %v2209
    %2605 = vmatprep.subr.mxu0 %v2218
    %2606 = vmatpush1.msra.mxu0 %v2217
    %2607 = vmatprep.subr.mxu0 %v2226
    %2608 = vmatpush1.msra.mxu0 %v2225
    %2609 = vmatprep.subr.mxu0 %v2234
    %2610 = vmatpush1.msra.mxu0 %v2233
    %2611 = vmatprep.subr.mxu0 %v2242
    %2612 = vmatpush1.msra.mxu0 %v2241
    %2613 = vmatprep.subr.mxu0 %v2250
    %2614 = vmatpush1.msra.mxu0 %v2249
    %2615 = vmatprep.subr.mxu0 %v2258
    %2616 = vmatpush1.msra.mxu0 %v2257
    %2617 = vmatprep.subr.mxu0 %v2266
    %2618 = vmatpush1.msra.mxu0 %v2265
    %2619 = vmatprep.subr.mxu0 %v2274
    %2620 = vmatpush1.msra.mxu0 %v2273
    %2621 = vmatprep.subr.mxu0 %v2282
    %2622 = vmatpush1.msra.mxu0 %v2281
    %2623 = vmatprep.subr.mxu0 %v2290
    %2624 = vmatpush1.msra.mxu0 %v2289
    %2625 = vmatprep.subr.mxu0 %v2298
    %2626 = vmatpush1.msra.mxu0 %v2297
    %2627 = vmatprep.subr.mxu0 %v2306
    %2628 = vmatpush1.msra.mxu0 %v2305
    %2629 = vmatprep.subr.mxu0 %v2314
    %2630 = vmatpush1.msra.mxu0 %v2313
    %2631 = vmatprep.subr.mxu0 %v2322
    %2632 = vmatpush1.msra.mxu0 %v2321
    %2633 = vmatprep.subr.mxu0 %v2330
    %2634 = vmatpush1.msra.mxu0 %v2329
    %2635 = vmatprep.subr.mxu0 %v2338
    %2636 = vmatpush1.msra.mxu0 %v2337
    %2637 = vmatprep.subr.mxu0 %v2346
    %2638 = vmatpush1.msra.mxu0 %v2345
    %2639 = vmatprep.subr.mxu0 %v2354
    %2640 = vmatpush1.msra.mxu0 %v2353
    %2641 = vmatprep.subr.mxu0 %v2362
    %2642 = vmatpush1.msra.mxu0 %v2361
    %2643 = vmatprep.subr.mxu0 %v2370
    %2644 = vmatpush1.msra.mxu0 %v2369
    %2645 = vmatprep.subr.mxu0 %v2378
    %2646 = vmatpush1.msra.mxu0 %v2377
    %2647 = vmatprep.subr.mxu0 %v2386
    %2648 = vmatpush1.msra.mxu0 %v2385
    %2649 = vmatprep.subr.mxu0 %v2394
    %2650 = vmatpush1.msra.mxu0 %v2393
    %2651 = vmatprep.subr.mxu0 %v2402
    %2652 = vmatpush1.msra.mxu0 %v2401
    %2653 = vmatprep.subr.mxu0 %v2410
    %2654 = vmatpush1.msra.mxu0 %v2409
    %2655 = vmatprep.subr.mxu0 %v2418
    %2656 = vmatpush1.msra.mxu0 %v2417
    %2657 = vmatprep.subr.mxu0 %v2426
    %2658 = vmatpush1.msra.mxu0 %v2425
    %2659 = vmatprep.subr.mxu0 %v2434
    %2660 = vmatpush1.msra.mxu0 %v2433
    %2661 = vmatprep.subr.mxu0 %v2442
    %2662 = vmatpush1.msra.mxu0 %v2441
    %2663 = vmatprep.subr.mxu0 %v2450
    %2664 = vmatpush1.msra.mxu0 %v2449
    %2665 = vmatprep.subr.mxu0 %v2458
    %2666 = vmatpush1.msra.mxu0 %v2457
    %2667 = vmatprep.mubr.f32.mxu0 %v2203
    %2668 = vmatmul.mubr.f32.gmra.mrb[0].mxu0 %v2179
    %v2669 = vpop.f32.mrb[0].mxu0
    %v2670 = vadd.f32 %v393, %v2669
    %v2671 = vpop.f32.mrb[0].mxu0
    %v2672 = vadd.f32 %v397, %v2671
    %2673 = vdwg.mxu0
    %2674 = vmatprep.subr.mxu0 %v2212
    %2675 = vmatpush1.msra.mxu0 %v2211
    %2676 = vmatprep.subr.mxu0 %v2220
    %2677 = vmatpush1.msra.mxu0 %v2219
    %2678 = vmatprep.subr.mxu0 %v2228
    %2679 = vmatpush1.msra.mxu0 %v2227
    %2680 = vmatprep.subr.mxu0 %v2236
    %2681 = vmatpush1.msra.mxu0 %v2235
    %2682 = vmatprep.subr.mxu0 %v2244
    %2683 = vmatpush1.msra.mxu0 %v2243
    %2684 = vmatprep.subr.mxu0 %v2252
    %2685 = vmatpush1.msra.mxu0 %v2251
    %2686 = vmatprep.subr.mxu0 %v2260
    %2687 = vmatpush1.msra.mxu0 %v2259
    %2688 = vmatprep.subr.mxu0 %v2268
    %2689 = vmatpush1.msra.mxu0 %v2267
    %2690 = vmatprep.subr.mxu0 %v2276
    %2691 = vmatpush1.msra.mxu0 %v2275
    %2692 = vmatprep.subr.mxu0 %v2284
    %2693 = vmatpush1.msra.mxu0 %v2283
    %2694 = vmatprep.subr.mxu0 %v2292
    %2695 = vmatpush1.msra.mxu0 %v2291
    %2696 = vmatprep.subr.mxu0 %v2300
    %2697 = vmatpush1.msra.mxu0 %v2299
    %2698 = vmatprep.subr.mxu0 %v2308
    %2699 = vmatpush1.msra.mxu0 %v2307
    %2700 = vmatprep.subr.mxu0 %v2316
    %2701 = vmatpush1.msra.mxu0 %v2315
    %2702 = vmatprep.subr.mxu0 %v2324
    %2703 = vmatpush1.msra.mxu0 %v2323
    %2704 = vmatprep.subr.mxu0 %v2332
    %2705 = vmatpush1.msra.mxu0 %v2331
    %2706 = vmatprep.subr.mxu0 %v2340
    %2707 = vmatpush1.msra.mxu0 %v2339
    %2708 = vmatprep.subr.mxu0 %v2348
    %2709 = vmatpush1.msra.mxu0 %v2347
    %2710 = vmatprep.subr.mxu0 %v2356
    %2711 = vmatpush1.msra.mxu0 %v2355
    %2712 = vmatprep.subr.mxu0 %v2364
    %2713 = vmatpush1.msra.mxu0 %v2363
    %2714 = vmatprep.subr.mxu0 %v2372
    %2715 = vmatpush1.msra.mxu0 %v2371
    %2716 = vmatprep.subr.mxu0 %v2380
    %2717 = vmatpush1.msra.mxu0 %v2379
    %2718 = vmatprep.subr.mxu0 %v2388
    %2719 = vmatpush1.msra.mxu0 %v2387
    %2720 = vmatprep.subr.mxu0 %v2396
    %2721 = vmatpush1.msra.mxu0 %v2395
    %2722 = vmatprep.subr.mxu0 %v2404
    %2723 = vmatpush1.msra.mxu0 %v2403
    %2724 = vmatprep.subr.mxu0 %v2412
    %2725 = vmatpush1.msra.mxu0 %v2411
    %2726 = vmatprep.subr.mxu0 %v2420
    %2727 = vmatpush1.msra.mxu0 %v2419
    %2728 = vmatprep.subr.mxu0 %v2428
    %2729 = vmatpush1.msra.mxu0 %v2427
    %2730 = vmatprep.subr.mxu0 %v2436
    %2731 = vmatpush1.msra.mxu0 %v2435
    %2732 = vmatprep.subr.mxu0 %v2444
    %2733 = vmatpush1.msra.mxu0 %v2443
    %2734 = vmatprep.subr.mxu0 %v2452
    %2735 = vmatpush1.msra.mxu0 %v2451
    %2736 = vmatprep.subr.mxu0 %v2460
    %2737 = vmatpush1.msra.mxu0 %v2459
    %2738 = vmatprep.mubr.f32.mxu0 %v2203
    %2739 = vmatmul.mubr.f32.gmra.mrb[0].mxu0 %v2179
    %v2740 = vpop.f32.mrb[0].mxu0
    %v2741 = vadd.f32 %v401, %v2740
    %v2742 = vpop.f32.mrb[0].mxu0
    %v2743 = vadd.f32 %v405, %v2742
    %2744 = vdwg.mxu0
    %v2745 = vld [vmem:[#allocation2 + $0xa0] sm:$0xff]
    %v2746 = vld [vmem:[#allocation2 + $0xa8] sm:$0xff]
    %v2747 = vld [vmem:[#allocation2 + $0xb0] sm:$0xff]
    %v2748 = vld [vmem:[#allocation2 + $0xb8] sm:$0xff]
    %v2749 = vadd.f32 %v2528, %v2745
    %v2750 = vadd.f32 %v2530, %v2746
    %v2751 = vadd.f32 %v2599, %v2747
    %v2752 = vadd.f32 %v2601, %v2748
    %v2753 = vxor.u32 %v2749, 2147483648
    %v2754 = vmul.f32 %v2753, 1.442695
    %v2755 = vpow.pop %v2754
    %v2756 = vadd.f32 %v2755, 1.0
    %v2757 = vrcp.pop %v2756
    %v2758 = vmul.f32 1.0, %v2757
    %v2759 = vxor.u32 %v2750, 2147483648
    %v2760 = vmul.f32 %v2759, 1.442695
    %v2761 = vpow.pop %v2760
    %v2762 = vadd.f32 %v2761, 1.0
    %v2763 = vrcp.pop %v2762
    %v2764 = vmul.f32 1.0, %v2763
    %v2765 = vtanh.pop %v2751
    %v2766 = vxor.u32 %v2752, 2147483648
    %v2767 = vmul.f32 %v2766, 1.442695
    %v2768 = vpow.pop %v2767
    %v2769 = vadd.f32 %v2768, 1.0
    %v2770 = vrcp.pop %v2769
    %v2771 = vmul.f32 1.0, %v2770
    %v2772 = vmul.f32 %v2764, %v2177
    %v2773 = vmul.f32 %v2758, %v2765
    %v2774 = vadd.f32 %v2772, %v2773
    %v2775 = vtanh.pop %v2774
    %v2776 = vmul.f32 %v2771, %v2775
    %v2777 = vxor.u32 %v2670, 2147483648
    %v2778 = vmul.f32 %v2777, 1.442695
    %v2779 = vpow.pop %v2778
    %v2780 = vadd.f32 %v2779, 1.0
    %v2781 = vrcp.pop %v2780
    %v2782 = vmul.f32 1.0, %v2781
    %v2783 = vxor.u32 %v2672, 2147483648
    %v2784 = vmul.f32 %v2783, 1.442695
    %v2785 = vpow.pop %v2784
    %v2786 = vadd.f32 %v2785, 1.0
    %v2787 = vrcp.pop %v2786
    %v2788 = vmul.f32 1.0, %v2787
    %v2789 = vtanh.pop %v2741
    %v2790 = vxor.u32 %v2743, 2147483648
    %v2791 = vmul.f32 %v2790, 1.442695
    %v2792 = vpow.pop %v2791
    %v2793 = vadd.f32 %v2792, 1.0
    %v2794 = vrcp.pop %v2793
    %v2795 = vmul.f32 1.0, %v2794
    %v2796 = vmul.f32 %v2788, %v2201
    %v2797 = vmul.f32 %v2782, %v2789
    %v2798 = vadd.f32 %v2796, %v2797
    %v2799 = vtanh.pop %v2798
    %v2800 = vmul.f32 %v2795, %v2799
    %2801 = vst [vmem:[#allocation3 + $0x8] sm:$0xff] %v2800
    %v2802 = vld [vmem:[#allocation4] sm:$0xff]
    %v2803 = vld [vmem:[#allocation4 + $0x8] sm:$0xff]
    %v2804 = vld [vmem:[#allocation4 + $0x10] sm:$0xff]
    %v2805 = vld [vmem:[#allocation4 + $0x18] sm:$0xff]
    %v2806 = vld [vmem:[#allocation4 + $0x20] sm:$0xff]
    %v2807 = vld [vmem:[#allocation4 + $0x28] sm:$0xff]
    %v2808 = vld [vmem:[#allocation4 + $0x30] sm:$0xff]
    %v2809 = vld [vmem:[#allocation4 + $0x38] sm:$0xff]
    %v2810 = vld [vmem:[#allocation4 + $0x40] sm:$0xff]
    %v2811 = vld [vmem:[#allocation4 + $0x48] sm:$0xff]
    %v2812 = vld [vmem:[#allocation4 + $0x50] sm:$0xff]
    %v2813 = vld [vmem:[#allocation4 + $0x58] sm:$0xff]
    %v2814 = vld [vmem:[#allocation4 + $0x60] sm:$0xff]
    %v2815 = vld [vmem:[#allocation4 + $0x68] sm:$0xff]
    %v2816 = vld [vmem:[#allocation4 + $0x70] sm:$0xff]
    %v2817 = vld [vmem:[#allocation4 + $0x78] sm:$0xff]
    %v2818 = vld [vmem:[#allocation4 + $0x80] sm:$0xff]
    %v2819 = vld [vmem:[#allocation4 + $0x88] sm:$0xff]
    %v2820 = vld [vmem:[#allocation4 + $0x90] sm:$0xff]
    %v2821 = vld [vmem:[#allocation4 + $0x98] sm:$0xff]
    %v2822 = vld [vmem:[#allocation4 + $0xa0] sm:$0xff]
    %v2823 = vld [vmem:[#allocation4 + $0xa8] sm:$0xff]
    %v2824 = vld [vmem:[#allocation4 + $0xb0] sm:$0xff]
    %v2825 = vld [vmem:[#allocation4 + $0xb8] sm:$0xff]
    %v2826 = vld [vmem:[#allocation4 + $0xc0] sm:$0xff]
    %v2827 = vld [vmem:[#allocation4 + $0xc8] sm:$0xff]
    %v2828 = vld [vmem:[#allocation4 + $0xd0] sm:$0xff]
    %v2829 = vld [vmem:[#allocation4 + $0xd8] sm:$0xff]
    %v2830 = vld [vmem:[#allocation4 + $0xe0] sm:$0xff]
    %v2831 = vld [vmem:[#allocation4 + $0xe8] sm:$0xff]
    %v2832 = vld [vmem:[#allocation4 + $0xf0] sm:$0xff]
    %v2833 = vld [vmem:[#allocation4 + $0xf8] sm:$0xff]
    %v2834 = vld [vmem:[#allocation4 + $0x100] sm:$0xff]
    %v2835 = vld [vmem:[#allocation4 + $0x108] sm:$0xff]
    %v2836 = vld [vmem:[#allocation4 + $0x110] sm:$0xff]
    %v2837 = vld [vmem:[#allocation4 + $0x118] sm:$0xff]
    %v2838 = vld [vmem:[#allocation4 + $0x120] sm:$0xff]
    %v2839 = vld [vmem:[#allocation4 + $0x128] sm:$0xff]
    %v2840 = vld [vmem:[#allocation4 + $0x130] sm:$0xff]
    %v2841 = vld [vmem:[#allocation4 + $0x138] sm:$0xff]
    %v2842 = vld [vmem:[#allocation4 + $0x140] sm:$0xff]
    %v2843 = vld [vmem:[#allocation4 + $0x148] sm:$0xff]
    %v2844 = vld [vmem:[#allocation4 + $0x150] sm:$0xff]
    %v2845 = vld [vmem:[#allocation4 + $0x158] sm:$0xff]
    %v2846 = vld [vmem:[#allocation4 + $0x160] sm:$0xff]
    %v2847 = vld [vmem:[#allocation4 + $0x168] sm:$0xff]
    %v2848 = vld [vmem:[#allocation4 + $0x170] sm:$0xff]
    %v2849 = vld [vmem:[#allocation4 + $0x178] sm:$0xff]
    %v2850 = vld [vmem:[#allocation4 + $0x180] sm:$0xff]
    %v2851 = vld [vmem:[#allocation4 + $0x188] sm:$0xff]
    %v2852 = vld [vmem:[#allocation4 + $0x190] sm:$0xff]
    %v2853 = vld [vmem:[#allocation4 + $0x198] sm:$0xff]
    %v2854 = vld [vmem:[#allocation4 + $0x1a0] sm:$0xff]
    %v2855 = vld [vmem:[#allocation4 + $0x1a8] sm:$0xff]
    %v2856 = vld [vmem:[#allocation4 + $0x1b0] sm:$0xff]
    %v2857 = vld [vmem:[#allocation4 + $0x1b8] sm:$0xff]
    %v2858 = vld [vmem:[#allocation4 + $0x1c0] sm:$0xff]
    %v2859 = vld [vmem:[#allocation4 + $0x1c8] sm:$0xff]
    %v2860 = vld [vmem:[#allocation4 + $0x1d0] sm:$0xff]
    %v2861 = vld [vmem:[#allocation4 + $0x1d8] sm:$0xff]
    %v2862 = vld [vmem:[#allocation4 + $0x1e0] sm:$0xff]
    %v2863 = vld [vmem:[#allocation4 + $0x1e8] sm:$0xff]
    %v2864 = vld [vmem:[#allocation4 + $0x1f0] sm:$0xff]
    %v2865 = vld [vmem:[#allocation4 + $0x1f8] sm:$0xff]
    %v2866 = vld [vmem:[#allocation4 + $0x200] sm:$0xff]
    %v2867 = vld [vmem:[#allocation4 + $0x208] sm:$0xff]
    %v2868 = vld [vmem:[#allocation4 + $0x210] sm:$0xff]
    %v2869 = vld [vmem:[#allocation4 + $0x218] sm:$0xff]
    %v2870 = vld [vmem:[#allocation4 + $0x220] sm:$0xff]
    %v2871 = vld [vmem:[#allocation4 + $0x228] sm:$0xff]
    %v2872 = vld [vmem:[#allocation4 + $0x230] sm:$0xff]
    %v2873 = vld [vmem:[#allocation4 + $0x238] sm:$0xff]
    %v2874 = vld [vmem:[#allocation4 + $0x240] sm:$0xff]
    %v2875 = vld [vmem:[#allocation4 + $0x248] sm:$0xff]
    %v2876 = vld [vmem:[#allocation4 + $0x250] sm:$0xff]
    %v2877 = vld [vmem:[#allocation4 + $0x258] sm:$0xff]
    %v2878 = vld [vmem:[#allocation4 + $0x260] sm:$0xff]
    %v2879 = vld [vmem:[#allocation4 + $0x268] sm:$0xff]
    %v2880 = vld [vmem:[#allocation4 + $0x270] sm:$0xff]
    %v2881 = vld [vmem:[#allocation4 + $0x278] sm:$0xff]
    %v2882 = vld [vmem:[#allocation4 + $0x280] sm:$0xff]
    %v2883 = vld [vmem:[#allocation4 + $0x288] sm:$0xff]
    %v2884 = vld [vmem:[#allocation4 + $0x290] sm:$0xff]
    %v2885 = vld [vmem:[#allocation4 + $0x298] sm:$0xff]
    %v2886 = vld [vmem:[#allocation4 + $0x2a0] sm:$0xff]
    %v2887 = vld [vmem:[#allocation4 + $0x2a8] sm:$0xff]
    %v2888 = vld [vmem:[#allocation4 + $0x2b0] sm:$0xff]
    %v2889 = vld [vmem:[#allocation4 + $0x2b8] sm:$0xff]
    %v2890 = vld [vmem:[#allocation4 + $0x2c0] sm:$0xff]
    %v2891 = vld [vmem:[#allocation4 + $0x2c8] sm:$0xff]
    %v2892 = vld [vmem:[#allocation4 + $0x2d0] sm:$0xff]
    %v2893 = vld [vmem:[#allocation4 + $0x2d8] sm:$0xff]
    %v2894 = vld [vmem:[#allocation4 + $0x2e0] sm:$0xff]
    %v2895 = vld [vmem:[#allocation4 + $0x2e8] sm:$0xff]
    %v2896 = vld [vmem:[#allocation4 + $0x2f0] sm:$0xff]
    %v2897 = vld [vmem:[#allocation4 + $0x2f8] sm:$0xff]
    %v2898 = vld [vmem:[#allocation4 + $0x300] sm:$0xff]
    %v2899 = vld [vmem:[#allocation4 + $0x308] sm:$0xff]
    %v2900 = vld [vmem:[#allocation4 + $0x310] sm:$0xff]
    %v2901 = vld [vmem:[#allocation4 + $0x318] sm:$0xff]
    %v2902 = vld [vmem:[#allocation4 + $0x320] sm:$0xff]
    %v2903 = vld [vmem:[#allocation4 + $0x328] sm:$0xff]
    %v2904 = vld [vmem:[#allocation4 + $0x330] sm:$0xff]
    %v2905 = vld [vmem:[#allocation4 + $0x338] sm:$0xff]
    %v2906 = vld [vmem:[#allocation4 + $0x340] sm:$0xff]
    %v2907 = vld [vmem:[#allocation4 + $0x348] sm:$0xff]
    %v2908 = vld [vmem:[#allocation4 + $0x350] sm:$0xff]
    %v2909 = vld [vmem:[#allocation4 + $0x358] sm:$0xff]
    %v2910 = vld [vmem:[#allocation4 + $0x360] sm:$0xff]
    %v2911 = vld [vmem:[#allocation4 + $0x368] sm:$0xff]
    %v2912 = vld [vmem:[#allocation4 + $0x370] sm:$0xff]
    %v2913 = vld [vmem:[#allocation4 + $0x378] sm:$0xff]
    %v2914 = vld [vmem:[#allocation4 + $0x380] sm:$0xff]
    %v2915 = vld [vmem:[#allocation4 + $0x388] sm:$0xff]
    %v2916 = vld [vmem:[#allocation4 + $0x390] sm:$0xff]
    %v2917 = vld [vmem:[#allocation4 + $0x398] sm:$0xff]
    %v2918 = vld [vmem:[#allocation4 + $0x3a0] sm:$0xff]
    %v2919 = vld [vmem:[#allocation4 + $0x3a8] sm:$0xff]
    %v2920 = vld [vmem:[#allocation4 + $0x3b0] sm:$0xff]
    %v2921 = vld [vmem:[#allocation4 + $0x3b8] sm:$0xff]
    %v2922 = vld [vmem:[#allocation4 + $0x3c0] sm:$0xff]
    %v2923 = vld [vmem:[#allocation4 + $0x3c8] sm:$0xff]
    %v2924 = vld [vmem:[#allocation4 + $0x3d0] sm:$0xff]
    %v2925 = vld [vmem:[#allocation4 + $0x3d8] sm:$0xff]
    %v2926 = vld [vmem:[#allocation4 + $0x3e0] sm:$0xff]
    %v2927 = vld [vmem:[#allocation4 + $0x3e8] sm:$0xff]
    %v2928 = vld [vmem:[#allocation4 + $0x3f0] sm:$0xff]
    %v2929 = vld [vmem:[#allocation4 + $0x3f8] sm:$0xff]
    %v2930 = vld [vmem:[#allocation4 + $0x400] sm:$0xff]
    %v2931 = vld [vmem:[#allocation4 + $0x408] sm:$0xff]
    %v2932 = vld [vmem:[#allocation4 + $0x410] sm:$0xff]
    %v2933 = vld [vmem:[#allocation4 + $0x418] sm:$0xff]
    %v2934 = vld [vmem:[#allocation4 + $0x420] sm:$0xff]
    %v2935 = vld [vmem:[#allocation4 + $0x428] sm:$0xff]
    %v2936 = vld [vmem:[#allocation4 + $0x430] sm:$0xff]
    %v2937 = vld [vmem:[#allocation4 + $0x438] sm:$0xff]
    %v2938 = vld [vmem:[#allocation4 + $0x440] sm:$0xff]
    %v2939 = vld [vmem:[#allocation4 + $0x448] sm:$0xff]
    %v2940 = vld [vmem:[#allocation4 + $0x450] sm:$0xff]
    %v2941 = vld [vmem:[#allocation4 + $0x458] sm:$0xff]
    %v2942 = vld [vmem:[#allocation4 + $0x460] sm:$0xff]
    %v2943 = vld [vmem:[#allocation4 + $0x468] sm:$0xff]
    %v2944 = vld [vmem:[#allocation4 + $0x470] sm:$0xff]
    %v2945 = vld [vmem:[#allocation4 + $0x478] sm:$0xff]
    %v2946 = vld [vmem:[#allocation4 + $0x480] sm:$0xff]
    %v2947 = vld [vmem:[#allocation4 + $0x488] sm:$0xff]
    %v2948 = vld [vmem:[#allocation4 + $0x490] sm:$0xff]
    %v2949 = vld [vmem:[#allocation4 + $0x498] sm:$0xff]
    %v2950 = vld [vmem:[#allocation4 + $0x4a0] sm:$0xff]
    %v2951 = vld [vmem:[#allocation4 + $0x4a8] sm:$0xff]
    %v2952 = vld [vmem:[#allocation4 + $0x4b0] sm:$0xff]
    %v2953 = vld [vmem:[#allocation4 + $0x4b8] sm:$0xff]
    %v2954 = vld [vmem:[#allocation4 + $0x4c0] sm:$0xff]
    %v2955 = vld [vmem:[#allocation4 + $0x4c8] sm:$0xff]
    %v2956 = vld [vmem:[#allocation4 + $0x4d0] sm:$0xff]
    %v2957 = vld [vmem:[#allocation4 + $0x4d8] sm:$0xff]
    %v2958 = vld [vmem:[#allocation4 + $0x4e0] sm:$0xff]
    %v2959 = vld [vmem:[#allocation4 + $0x4e8] sm:$0xff]
    %v2960 = vld [vmem:[#allocation4 + $0x4f0] sm:$0xff]
    %v2961 = vld [vmem:[#allocation4 + $0x4f8] sm:$0xff]
    %v2962 = vld [vmem:[#allocation4 + $0x500] sm:$0xff]
    %v2963 = vld [vmem:[#allocation4 + $0x508] sm:$0xff]
    %v2964 = vld [vmem:[#allocation4 + $0x510] sm:$0xff]
    %v2965 = vld [vmem:[#allocation4 + $0x518] sm:$0xff]
    %v2966 = vld [vmem:[#allocation4 + $0x520] sm:$0xff]
    %v2967 = vld [vmem:[#allocation4 + $0x528] sm:$0xff]
    %v2968 = vld [vmem:[#allocation4 + $0x530] sm:$0xff]
    %v2969 = vld [vmem:[#allocation4 + $0x538] sm:$0xff]
    %v2970 = vld [vmem:[#allocation4 + $0x540] sm:$0xff]
    %v2971 = vld [vmem:[#allocation4 + $0x548] sm:$0xff]
    %v2972 = vld [vmem:[#allocation4 + $0x550] sm:$0xff]
    %v2973 = vld [vmem:[#allocation4 + $0x558] sm:$0xff]
    %v2974 = vld [vmem:[#allocation4 + $0x560] sm:$0xff]
    %v2975 = vld [vmem:[#allocation4 + $0x568] sm:$0xff]
    %v2976 = vld [vmem:[#allocation4 + $0x570] sm:$0xff]
    %v2977 = vld [vmem:[#allocation4 + $0x578] sm:$0xff]
    %v2978 = vld [vmem:[#allocation4 + $0x580] sm:$0xff]
    %v2979 = vld [vmem:[#allocation4 + $0x588] sm:$0xff]
    %v2980 = vld [vmem:[#allocation4 + $0x590] sm:$0xff]
    %v2981 = vld [vmem:[#allocation4 + $0x598] sm:$0xff]
    %v2982 = vld [vmem:[#allocation4 + $0x5a0] sm:$0xff]
    %v2983 = vld [vmem:[#allocation4 + $0x5a8] sm:$0xff]
    %v2984 = vld [vmem:[#allocation4 + $0x5b0] sm:$0xff]
    %v2985 = vld [vmem:[#allocation4 + $0x5b8] sm:$0xff]
    %v2986 = vld [vmem:[#allocation4 + $0x5c0] sm:$0xff]
    %v2987 = vld [vmem:[#allocation4 + $0x5c8] sm:$0xff]
    %v2988 = vld [vmem:[#allocation4 + $0x5d0] sm:$0xff]
    %v2989 = vld [vmem:[#allocation4 + $0x5d8] sm:$0xff]
    %v2990 = vld [vmem:[#allocation4 + $0x5e0] sm:$0xff]
    %v2991 = vld [vmem:[#allocation4 + $0x5e8] sm:$0xff]
    %v2992 = vld [vmem:[#allocation4 + $0x5f0] sm:$0xff]
    %v2993 = vld [vmem:[#allocation4 + $0x5f8] sm:$0xff]
    %v2994 = vld [vmem:[#allocation4 + $0x600] sm:$0xff]
    %v2995 = vld [vmem:[#allocation4 + $0x608] sm:$0xff]
    %v2996 = vld [vmem:[#allocation4 + $0x610] sm:$0xff]
    %v2997 = vld [vmem:[#allocation4 + $0x618] sm:$0xff]
    %v2998 = vld [vmem:[#allocation4 + $0x620] sm:$0xff]
    %v2999 = vld [vmem:[#allocation4 + $0x628] sm:$0xff]
    %v3000 = vld [vmem:[#allocation4 + $0x630] sm:$0xff]
    %v3001 = vld [vmem:[#allocation4 + $0x638] sm:$0xff]
    %v3002 = vld [vmem:[#allocation4 + $0x640] sm:$0xff]
    %v3003 = vld [vmem:[#allocation4 + $0x648] sm:$0xff]
    %v3004 = vld [vmem:[#allocation4 + $0x650] sm:$0xff]
    %v3005 = vld [vmem:[#allocation4 + $0x658] sm:$0xff]
    %v3006 = vld [vmem:[#allocation4 + $0x660] sm:$0xff]
    %v3007 = vld [vmem:[#allocation4 + $0x668] sm:$0xff]
    %v3008 = vld [vmem:[#allocation4 + $0x670] sm:$0xff]
    %v3009 = vld [vmem:[#allocation4 + $0x678] sm:$0xff]
    %v3010 = vld [vmem:[#allocation4 + $0x680] sm:$0xff]
    %v3011 = vld [vmem:[#allocation4 + $0x688] sm:$0xff]
    %v3012 = vld [vmem:[#allocation4 + $0x690] sm:$0xff]
    %v3013 = vld [vmem:[#allocation4 + $0x698] sm:$0xff]
    %v3014 = vld [vmem:[#allocation4 + $0x6a0] sm:$0xff]
    %v3015 = vld [vmem:[#allocation4 + $0x6a8] sm:$0xff]
    %v3016 = vld [vmem:[#allocation4 + $0x6b0] sm:$0xff]
    %v3017 = vld [vmem:[#allocation4 + $0x6b8] sm:$0xff]
    %v3018 = vld [vmem:[#allocation4 + $0x6c0] sm:$0xff]
    %v3019 = vld [vmem:[#allocation4 + $0x6c8] sm:$0xff]
    %v3020 = vld [vmem:[#allocation4 + $0x6d0] sm:$0xff]
    %v3021 = vld [vmem:[#allocation4 + $0x6d8] sm:$0xff]
    %v3022 = vld [vmem:[#allocation4 + $0x6e0] sm:$0xff]
    %v3023 = vld [vmem:[#allocation4 + $0x6e8] sm:$0xff]
    %v3024 = vld [vmem:[#allocation4 + $0x6f0] sm:$0xff]
    %v3025 = vld [vmem:[#allocation4 + $0x6f8] sm:$0xff]
    %v3026 = vld [vmem:[#allocation4 + $0x700] sm:$0xff]
    %v3027 = vld [vmem:[#allocation4 + $0x708] sm:$0xff]
    %v3028 = vld [vmem:[#allocation4 + $0x710] sm:$0xff]
    %v3029 = vld [vmem:[#allocation4 + $0x718] sm:$0xff]
    %v3030 = vld [vmem:[#allocation4 + $0x720] sm:$0xff]
    %v3031 = vld [vmem:[#allocation4 + $0x728] sm:$0xff]
    %v3032 = vld [vmem:[#allocation4 + $0x730] sm:$0xff]
    %v3033 = vld [vmem:[#allocation4 + $0x738] sm:$0xff]
    %v3034 = vld [vmem:[#allocation4 + $0x740] sm:$0xff]
    %v3035 = vld [vmem:[#allocation4 + $0x748] sm:$0xff]
    %v3036 = vld [vmem:[#allocation4 + $0x750] sm:$0xff]
    %v3037 = vld [vmem:[#allocation4 + $0x758] sm:$0xff]
    %v3038 = vld [vmem:[#allocation4 + $0x760] sm:$0xff]
    %v3039 = vld [vmem:[#allocation4 + $0x768] sm:$0xff]
    %v3040 = vld [vmem:[#allocation4 + $0x770] sm:$0xff]
    %v3041 = vld [vmem:[#allocation4 + $0x778] sm:$0xff]
    %v3042 = vld [vmem:[#allocation4 + $0x780] sm:$0xff]
    %v3043 = vld [vmem:[#allocation4 + $0x788] sm:$0xff]
    %v3044 = vld [vmem:[#allocation4 + $0x790] sm:$0xff]
    %v3045 = vld [vmem:[#allocation4 + $0x798] sm:$0xff]
    %v3046 = vld [vmem:[#allocation4 + $0x7a0] sm:$0xff]
    %v3047 = vld [vmem:[#allocation4 + $0x7a8] sm:$0xff]
    %v3048 = vld [vmem:[#allocation4 + $0x7b0] sm:$0xff]
    %v3049 = vld [vmem:[#allocation4 + $0x7b8] sm:$0xff]
    %v3050 = vld [vmem:[#allocation4 + $0x7c0] sm:$0xff]
    %v3051 = vld [vmem:[#allocation4 + $0x7c8] sm:$0xff]
    %v3052 = vld [vmem:[#allocation4 + $0x7d0] sm:$0xff]
    %v3053 = vld [vmem:[#allocation4 + $0x7d8] sm:$0xff]
    %v3054 = vld [vmem:[#allocation4 + $0x7e0] sm:$0xff]
    %v3055 = vld [vmem:[#allocation4 + $0x7e8] sm:$0xff]
    %v3056 = vld [vmem:[#allocation4 + $0x7f0] sm:$0xff]
    %v3057 = vld [vmem:[#allocation4 + $0x7f8] sm:$0xff]
    %3058 = vmatprep.subr.mxu0 %v2803
    %3059 = vmatpush1.msra.mxu0 %v2802
    %3060 = vmatprep.subr.mxu0 %v2811
    %3061 = vmatpush1.msra.mxu0 %v2810
    %3062 = vmatprep.subr.mxu0 %v2819
    %3063 = vmatpush1.msra.mxu0 %v2818
    %3064 = vmatprep.subr.mxu0 %v2827
    %3065 = vmatpush1.msra.mxu0 %v2826
    %3066 = vmatprep.subr.mxu0 %v2835
    %3067 = vmatpush1.msra.mxu0 %v2834
    %3068 = vmatprep.subr.mxu0 %v2843
    %3069 = vmatpush1.msra.mxu0 %v2842
    %3070 = vmatprep.subr.mxu0 %v2851
    %3071 = vmatpush1.msra.mxu0 %v2850
    %3072 = vmatprep.subr.mxu0 %v2859
    %3073 = vmatpush1.msra.mxu0 %v2858
    %3074 = vmatprep.subr.mxu0 %v2867
    %3075 = vmatpush1.msra.mxu0 %v2866
    %3076 = vmatprep.subr.mxu0 %v2875
    %3077 = vmatpush1.msra.mxu0 %v2874
    %3078 = vmatprep.subr.mxu0 %v2883
    %3079 = vmatpush1.msra.mxu0 %v2882
    %3080 = vmatprep.subr.mxu0 %v2891
    %3081 = vmatpush1.msra.mxu0 %v2890
    %3082 = vmatprep.subr.mxu0 %v2899
    %3083 = vmatpush1.msra.mxu0 %v2898
    %3084 = vmatprep.subr.mxu0 %v2907
    %3085 = vmatpush1.msra.mxu0 %v2906
    %3086 = vmatprep.subr.mxu0 %v2915
    %3087 = vmatpush1.msra.mxu0 %v2914
    %3088 = vmatprep.subr.mxu0 %v2923
    %3089 = vmatpush1.msra.mxu0 %v2922
    %3090 = vmatprep.subr.mxu0 %v2931
    %3091 = vmatpush1.msra.mxu0 %v2930
    %3092 = vmatprep.subr.mxu0 %v2939
    %3093 = vmatpush1.msra.mxu0 %v2938
    %3094 = vmatprep.subr.mxu0 %v2947
    %3095 = vmatpush1.msra.mxu0 %v2946
    %3096 = vmatprep.subr.mxu0 %v2955
    %3097 = vmatpush1.msra.mxu0 %v2954
    %3098 = vmatprep.subr.mxu0 %v2963
    %3099 = vmatpush1.msra.mxu0 %v2962
    %3100 = vmatprep.subr.mxu0 %v2971
    %3101 = vmatpush1.msra.mxu0 %v2970
    %3102 = vmatprep.subr.mxu0 %v2979
    %3103 = vmatpush1.msra.mxu0 %v2978
    %3104 = vmatprep.subr.mxu0 %v2987
    %3105 = vmatpush1.msra.mxu0 %v2986
    %3106 = vmatprep.subr.mxu0 %v2995
    %3107 = vmatpush1.msra.mxu0 %v2994
    %3108 = vmatprep.subr.mxu0 %v3003
    %3109 = vmatpush1.msra.mxu0 %v3002
    %3110 = vmatprep.subr.mxu0 %v3011
    %3111 = vmatpush1.msra.mxu0 %v3010
    %3112 = vmatprep.subr.mxu0 %v3019
    %3113 = vmatpush1.msra.mxu0 %v3018
    %3114 = vmatprep.subr.mxu0 %v3027
    %3115 = vmatpush1.msra.mxu0 %v3026
    %3116 = vmatprep.subr.mxu0 %v3035
    %3117 = vmatpush1.msra.mxu0 %v3034
    %3118 = vmatprep.subr.mxu0 %v3043
    %3119 = vmatpush1.msra.mxu0 %v3042
    %3120 = vmatprep.subr.mxu0 %v3051
    %3121 = vmatpush1.msra.mxu0 %v3050
    %3122 = vmatprep.mubr.f32.mxu0 %v2800
    %3123 = vmatmul.mubr.f32.gmra.mrb[0].mxu0 %v2776
    %v3124 = vpop.f32.mrb[0].mxu0
    %v3125 = vadd.f32 %v377, %v3124
    %v3126 = vpop.f32.mrb[0].mxu0
    %v3127 = vadd.f32 %v381, %v3126
    %3128 = vdwg.mxu0
    %3129 = vmatprep.subr.mxu0 %v2805
    %3130 = vmatpush1.msra.mxu0 %v2804
    %3131 = vmatprep.subr.mxu0 %v2813
    %3132 = vmatpush1.msra.mxu0 %v2812
    %3133 = vmatprep.subr.mxu0 %v2821
    %3134 = vmatpush1.msra.mxu0 %v2820
    %3135 = vmatprep.subr.mxu0 %v2829
    %3136 = vmatpush1.msra.mxu0 %v2828
    %3137 = vmatprep.subr.mxu0 %v2837
    %3138 = vmatpush1.msra.mxu0 %v2836
    %3139 = vmatprep.subr.mxu0 %v2845
    %3140 = vmatpush1.msra.mxu0 %v2844
    %3141 = vmatprep.subr.mxu0 %v2853
    %3142 = vmatpush1.msra.mxu0 %v2852
    %3143 = vmatprep.subr.mxu0 %v2861
    %3144 = vmatpush1.msra.mxu0 %v2860
    %3145 = vmatprep.subr.mxu0 %v2869
    %3146 = vmatpush1.msra.mxu0 %v2868
    %3147 = vmatprep.subr.mxu0 %v2877
    %3148 = vmatpush1.msra.mxu0 %v2876
    %3149 = vmatprep.subr.mxu0 %v2885
    %3150 = vmatpush1.msra.mxu0 %v2884
    %3151 = vmatprep.subr.mxu0 %v2893
    %3152 = vmatpush1.msra.mxu0 %v2892
    %3153 = vmatprep.subr.mxu0 %v2901
    %3154 = vmatpush1.msra.mxu0 %v2900
    %3155 = vmatprep.subr.mxu0 %v2909
    %3156 = vmatpush1.msra.mxu0 %v2908
    %3157 = vmatprep.subr.mxu0 %v2917
    %3158 = vmatpush1.msra.mxu0 %v2916
    %3159 = vmatprep.subr.mxu0 %v2925
    %3160 = vmatpush1.msra.mxu0 %v2924
    %3161 = vmatprep.subr.mxu0 %v2933
    %3162 = vmatpush1.msra.mxu0 %v2932
    %3163 = vmatprep.subr.mxu0 %v2941
    %3164 = vmatpush1.msra.mxu0 %v2940
    %3165 = vmatprep.subr.mxu0 %v2949
    %3166 = vmatpush1.msra.mxu0 %v2948
    %3167 = vmatprep.subr.mxu0 %v2957
    %3168 = vmatpush1.msra.mxu0 %v2956
    %3169 = vmatprep.subr.mxu0 %v2965
    %3170 = vmatpush1.msra.mxu0 %v2964
    %3171 = vmatprep.subr.mxu0 %v2973
    %3172 = vmatpush1.msra.mxu0 %v2972
    %3173 = vmatprep.subr.mxu0 %v2981
    %3174 = vmatpush1.msra.mxu0 %v2980
    %3175 = vmatprep.subr.mxu0 %v2989
    %3176 = vmatpush1.msra.mxu0 %v2988
    %3177 = vmatprep.subr.mxu0 %v2997
    %3178 = vmatpush1.msra.mxu0 %v2996
    %3179 = vmatprep.subr.mxu0 %v3005
    %3180 = vmatpush1.msra.mxu0 %v3004
    %3181 = vmatprep.subr.mxu0 %v3013
    %3182 = vmatpush1.msra.mxu0 %v3012
    %3183 = vmatprep.subr.mxu0 %v3021
    %3184 = vmatpush1.msra.mxu0 %v3020
    %3185 = vmatprep.subr.mxu0 %v3029
    %3186 = vmatpush1.msra.mxu0 %v3028
    %3187 = vmatprep.subr.mxu0 %v3037
    %3188 = vmatpush1.msra.mxu0 %v3036
    %3189 = vmatprep.subr.mxu0 %v3045
    %3190 = vmatpush1.msra.mxu0 %v3044
    %3191 = vmatprep.subr.mxu0 %v3053
    %3192 = vmatpush1.msra.mxu0 %v3052
    %3193 = vmatprep.mubr.f32.mxu0 %v2800
    %3194 = vmatmul.mubr.f32.gmra.mrb[0].mxu0 %v2776
    %v3195 = vpop.f32.mrb[0].mxu0
    %v3196 = vadd.f32 %v385, %v3195
    %v3197 = vpop.f32.mrb[0].mxu0
    %v3198 = vadd.f32 %v389, %v3197
    %3199 = vdwg.mxu0
    %3200 = vmatprep.subr.mxu0 %v2807
    %3201 = vmatpush1.msra.mxu0 %v2806
    %3202 = vmatprep.subr.mxu0 %v2815
    %3203 = vmatpush1.msra.mxu0 %v2814
    %3204 = vmatprep.subr.mxu0 %v2823
    %3205 = vmatpush1.msra.mxu0 %v2822
    %3206 = vmatprep.subr.mxu0 %v2831
    %3207 = vmatpush1.msra.mxu0 %v2830
    %3208 = vmatprep.subr.mxu0 %v2839
    %3209 = vmatpush1.msra.mxu0 %v2838
    %3210 = vmatprep.subr.mxu0 %v2847
    %3211 = vmatpush1.msra.mxu0 %v2846
    %3212 = vmatprep.subr.mxu0 %v2855
    %3213 = vmatpush1.msra.mxu0 %v2854
    %3214 = vmatprep.subr.mxu0 %v2863
    %3215 = vmatpush1.msra.mxu0 %v2862
    %3216 = vmatprep.subr.mxu0 %v2871
    %3217 = vmatpush1.msra.mxu0 %v2870
    %3218 = vmatprep.subr.mxu0 %v2879
    %3219 = vmatpush1.msra.mxu0 %v2878
    %3220 = vmatprep.subr.mxu0 %v2887
    %3221 = vmatpush1.msra.mxu0 %v2886
    %3222 = vmatprep.subr.mxu0 %v2895
    %3223 = vmatpush1.msra.mxu0 %v2894
    %3224 = vmatprep.subr.mxu0 %v2903
    %3225 = vmatpush1.msra.mxu0 %v2902
    %3226 = vmatprep.subr.mxu0 %v2911
    %3227 = vmatpush1.msra.mxu0 %v2910
    %3228 = vmatprep.subr.mxu0 %v2919
    %3229 = vmatpush1.msra.mxu0 %v2918
    %3230 = vmatprep.subr.mxu0 %v2927
    %3231 = vmatpush1.msra.mxu0 %v2926
    %3232 = vmatprep.subr.mxu0 %v2935
    %3233 = vmatpush1.msra.mxu0 %v2934
    %3234 = vmatprep.subr.mxu0 %v2943
    %3235 = vmatpush1.msra.mxu0 %v2942
    %3236 = vmatprep.subr.mxu0 %v2951
    %3237 = vmatpush1.msra.mxu0 %v2950
    %3238 = vmatprep.subr.mxu0 %v2959
    %3239 = vmatpush1.msra.mxu0 %v2958
    %3240 = vmatprep.subr.mxu0 %v2967
    %3241 = vmatpush1.msra.mxu0 %v2966
    %3242 = vmatprep.subr.mxu0 %v2975
    %3243 = vmatpush1.msra.mxu0 %v2974
    %3244 = vmatprep.subr.mxu0 %v2983
    %3245 = vmatpush1.msra.mxu0 %v2982
    %3246 = vmatprep.subr.mxu0 %v2991
    %3247 = vmatpush1.msra.mxu0 %v2990
    %3248 = vmatprep.subr.mxu0 %v2999
    %3249 = vmatpush1.msra.mxu0 %v2998
    %3250 = vmatprep.subr.mxu0 %v3007
    %3251 = vmatpush1.msra.mxu0 %v3006
    %3252 = vmatprep.subr.mxu0 %v3015
    %3253 = vmatpush1.msra.mxu0 %v3014
    %3254 = vmatprep.subr.mxu0 %v3023
    %3255 = vmatpush1.msra.mxu0 %v3022
    %3256 = vmatprep.subr.mxu0 %v3031
    %3257 = vmatpush1.msra.mxu0 %v3030
    %3258 = vmatprep.subr.mxu0 %v3039
    %3259 = vmatpush1.msra.mxu0 %v3038
    %3260 = vmatprep.subr.mxu0 %v3047
    %3261 = vmatpush1.msra.mxu0 %v3046
    %3262 = vmatprep.subr.mxu0 %v3055
    %3263 = vmatpush1.msra.mxu0 %v3054
    %3264 = vmatprep.mubr.f32.mxu0 %v2800
    %3265 = vmatmul.mubr.f32.gmra.mrb[0].mxu0 %v2776
    %v3266 = vpop.f32.mrb[0].mxu0
    %v3267 = vadd.f32 %v393, %v3266
    %v3268 = vpop.f32.mrb[0].mxu0
    %v3269 = vadd.f32 %v397, %v3268
    %3270 = vdwg.mxu0
    %3271 = vmatprep.subr.mxu0 %v2809
    %3272 = vmatpush1.msra.mxu0 %v2808
    %3273 = vmatprep.subr.mxu0 %v2817
    %3274 = vmatpush1.msra.mxu0 %v2816
    %3275 = vmatprep.subr.mxu0 %v2825
    %3276 = vmatpush1.msra.mxu0 %v2824
    %3277 = vmatprep.subr.mxu0 %v2833
    %3278 = vmatpush1.msra.mxu0 %v2832
    %3279 = vmatprep.subr.mxu0 %v2841
    %3280 = vmatpush1.msra.mxu0 %v2840
    %3281 = vmatprep.subr.mxu0 %v2849
    %3282 = vmatpush1.msra.mxu0 %v2848
    %3283 = vmatprep.subr.mxu0 %v2857
    %3284 = vmatpush1.msra.mxu0 %v2856
    %3285 = vmatprep.subr.mxu0 %v2865
    %3286 = vmatpush1.msra.mxu0 %v2864
    %3287 = vmatprep.subr.mxu0 %v2873
    %3288 = vmatpush1.msra.mxu0 %v2872
    %3289 = vmatprep.subr.mxu0 %v2881
    %3290 = vmatpush1.msra.mxu0 %v2880
    %3291 = vmatprep.subr.mxu0 %v2889
    %3292 = vmatpush1.msra.mxu0 %v2888
    %3293 = vmatprep.subr.mxu0 %v2897
    %3294 = vmatpush1.msra.mxu0 %v2896
    %3295 = vmatprep.subr.mxu0 %v2905
    %3296 = vmatpush1.msra.mxu0 %v2904
    %3297 = vmatprep.subr.mxu0 %v2913
    %3298 = vmatpush1.msra.mxu0 %v2912
    %3299 = vmatprep.subr.mxu0 %v2921
    %3300 = vmatpush1.msra.mxu0 %v2920
    %3301 = vmatprep.subr.mxu0 %v2929
    %3302 = vmatpush1.msra.mxu0 %v2928
    %3303 = vmatprep.subr.mxu0 %v2937
    %3304 = vmatpush1.msra.mxu0 %v2936
    %3305 = vmatprep.subr.mxu0 %v2945
    %3306 = vmatpush1.msra.mxu0 %v2944
    %3307 = vmatprep.subr.mxu0 %v2953
    %3308 = vmatpush1.msra.mxu0 %v2952
    %3309 = vmatprep.subr.mxu0 %v2961
    %3310 = vmatpush1.msra.mxu0 %v2960
    %3311 = vmatprep.subr.mxu0 %v2969
    %3312 = vmatpush1.msra.mxu0 %v2968
    %3313 = vmatprep.subr.mxu0 %v2977
    %3314 = vmatpush1.msra.mxu0 %v2976
    %3315 = vmatprep.subr.mxu0 %v2985
    %3316 = vmatpush1.msra.mxu0 %v2984
    %3317 = vmatprep.subr.mxu0 %v2993
    %3318 = vmatpush1.msra.mxu0 %v2992
    %3319 = vmatprep.subr.mxu0 %v3001
    %3320 = vmatpush1.msra.mxu0 %v3000
    %3321 = vmatprep.subr.mxu0 %v3009
    %3322 = vmatpush1.msra.mxu0 %v3008
    %3323 = vmatprep.subr.mxu0 %v3017
    %3324 = vmatpush1.msra.mxu0 %v3016
    %3325 = vmatprep.subr.mxu0 %v3025
    %3326 = vmatpush1.msra.mxu0 %v3024
    %3327 = vmatprep.subr.mxu0 %v3033
    %3328 = vmatpush1.msra.mxu0 %v3032
    %3329 = vmatprep.subr.mxu0 %v3041
    %3330 = vmatpush1.msra.mxu0 %v3040
    %3331 = vmatprep.subr.mxu0 %v3049
    %3332 = vmatpush1.msra.mxu0 %v3048
    %3333 = vmatprep.subr.mxu0 %v3057
    %3334 = vmatpush1.msra.mxu0 %v3056
    %3335 = vmatprep.mubr.f32.mxu0 %v2800
    %3336 = vmatmul.mubr.f32.gmra.mrb[0].mxu0 %v2776
    %v3337 = vpop.f32.mrb[0].mxu0
    %v3338 = vadd.f32 %v401, %v3337
    %v3339 = vpop.f32.mrb[0].mxu0
    %v3340 = vadd.f32 %v405, %v3339
    %3341 = vdwg.mxu0
    %v3342 = vld [vmem:[#allocation2 + $0xc0] sm:$0xff]
    %v3343 = vld [vmem:[#allocation2 + $0xc8] sm:$0xff]
    %v3344 = vld [vmem:[#allocation2 + $0xd0] sm:$0xff]
    %v3345 = vld [vmem:[#allocation2 + $0xd8] sm:$0xff]
    %v3346 = vadd.f32 %v3125, %v3342
    %v3347 = vadd.f32 %v3127, %v3343
    %v3348 = vadd.f32 %v3196, %v3344
    %v3349 = vadd.f32 %v3198, %v3345
    %v3350 = vxor.u32 %v3346, 2147483648
    %v3351 = vmul.f32 %v3350, 1.442695
    %v3352 = vpow.pop %v3351
    %v3353 = vadd.f32 %v3352, 1.0
    %v3354 = vrcp.pop %v3353
    %v3355 = vmul.f32 1.0, %v3354
    %v3356 = vxor.u32 %v3347, 2147483648
    %v3357 = vmul.f32 %v3356, 1.442695
    %v3358 = vpow.pop %v3357
    %v3359 = vadd.f32 %v3358, 1.0
    %v3360 = vrcp.pop %v3359
    %v3361 = vmul.f32 1.0, %v3360
    %v3362 = vtanh.pop %v3348
    %v3363 = vxor.u32 %v3349, 2147483648
    %v3364 = vmul.f32 %v3363, 1.442695
    %v3365 = vpow.pop %v3364
    %v3366 = vadd.f32 %v3365, 1.0
    %v3367 = vrcp.pop %v3366
    %v3368 = vmul.f32 1.0, %v3367
    %v3369 = vmul.f32 %v3361, %v2774
    %v3370 = vmul.f32 %v3355, %v3362
    %v3371 = vadd.f32 %v3369, %v3370
    %v3372 = vtanh.pop %v3371
    %v3373 = vmul.f32 %v3368, %v3372
    %v3374 = vxor.u32 %v3267, 2147483648
    %v3375 = vmul.f32 %v3374, 1.442695
    %v3376 = vpow.pop %v3375
    %v3377 = vadd.f32 %v3376, 1.0
    %v3378 = vrcp.pop %v3377
    %v3379 = vmul.f32 1.0, %v3378
    %v3380 = vxor.u32 %v3269, 2147483648
    %v3381 = vmul.f32 %v3380, 1.442695
    %v3382 = vpow.pop %v3381
    %v3383 = vadd.f32 %v3382, 1.0
    %v3384 = vrcp.pop %v3383
    %v3385 = vmul.f32 1.0, %v3384
    %v3386 = vtanh.pop %v3338
    %v3387 = vxor.u32 %v3340, 2147483648
    %v3388 = vmul.f32 %v3387, 1.442695
    %v3389 = vpow.pop %v3388
    %v3390 = vadd.f32 %v3389, 1.0
    %v3391 = vrcp.pop %v3390
    %v3392 = vmul.f32 1.0, %v3391
    %v3393 = vmul.f32 %v3385, %v2798
    %v3394 = vmul.f32 %v3379, %v3386
    %v3395 = vadd.f32 %v3393, %v3394
    %v3396 = vtanh.pop %v3395
    %v3397 = vmul.f32 %v3392, %v3396
    %3398 = vst [vmem:[#allocation3 + $0x10] sm:$0xff] %v3397
    %v3399 = vld [vmem:[#allocation4] sm:$0xff]
    %v3400 = vld [vmem:[#allocation4 + $0x8] sm:$0xff]
    %v3401 = vld [vmem:[#allocation4 + $0x10] sm:$0xff]
    %v3402 = vld [vmem:[#allocation4 + $0x18] sm:$0xff]
    %v3403 = vld [vmem:[#allocation4 + $0x20] sm:$0xff]
    %v3404 = vld [vmem:[#allocation4 + $0x28] sm:$0xff]
    %v3405 = vld [vmem:[#allocation4 + $0x30] sm:$0xff]
    %v3406 = vld [vmem:[#allocation4 + $0x38] sm:$0xff]
    %v3407 = vld [vmem:[#allocation4 + $0x40] sm:$0xff]
    %v3408 = vld [vmem:[#allocation4 + $0x48] sm:$0xff]
    %v3409 = vld [vmem:[#allocation4 + $0x50] sm:$0xff]
    %v3410 = vld [vmem:[#allocation4 + $0x58] sm:$0xff]
    %v3411 = vld [vmem:[#allocation4 + $0x60] sm:$0xff]
    %v3412 = vld [vmem:[#allocation4 + $0x68] sm:$0xff]
    %v3413 = vld [vmem:[#allocation4 + $0x70] sm:$0xff]
    %v3414 = vld [vmem:[#allocation4 + $0x78] sm:$0xff]
    %v3415 = vld [vmem:[#allocation4 + $0x80] sm:$0xff]
    %v3416 = vld [vmem:[#allocation4 + $0x88] sm:$0xff]
    %v3417 = vld [vmem:[#allocation4 + $0x90] sm:$0xff]
    %v3418 = vld [vmem:[#allocation4 + $0x98] sm:$0xff]
    %v3419 = vld [vmem:[#allocation4 + $0xa0] sm:$0xff]
    %v3420 = vld [vmem:[#allocation4 + $0xa8] sm:$0xff]
    %v3421 = vld [vmem:[#allocation4 + $0xb0] sm:$0xff]
    %v3422 = vld [vmem:[#allocation4 + $0xb8] sm:$0xff]
    %v3423 = vld [vmem:[#allocation4 + $0xc0] sm:$0xff]
    %v3424 = vld [vmem:[#allocation4 + $0xc8] sm:$0xff]
    %v3425 = vld [vmem:[#allocation4 + $0xd0] sm:$0xff]
    %v3426 = vld [vmem:[#allocation4 + $0xd8] sm:$0xff]
    %v3427 = vld [vmem:[#allocation4 + $0xe0] sm:$0xff]
    %v3428 = vld [vmem:[#allocation4 + $0xe8] sm:$0xff]
    %v3429 = vld [vmem:[#allocation4 + $0xf0] sm:$0xff]
    %v3430 = vld [vmem:[#allocation4 + $0xf8] sm:$0xff]
    %v3431 = vld [vmem:[#allocation4 + $0x100] sm:$0xff]
    %v3432 = vld [vmem:[#allocation4 + $0x108] sm:$0xff]
    %v3433 = vld [vmem:[#allocation4 + $0x110] sm:$0xff]
    %v3434 = vld [vmem:[#allocation4 + $0x118] sm:$0xff]
    %v3435 = vld [vmem:[#allocation4 + $0x120] sm:$0xff]
    %v3436 = vld [vmem:[#allocation4 + $0x128] sm:$0xff]
    %v3437 = vld [vmem:[#allocation4 + $0x130] sm:$0xff]
    %v3438 = vld [vmem:[#allocation4 + $0x138] sm:$0xff]
    %v3439 = vld [vmem:[#allocation4 + $0x140] sm:$0xff]
    %v3440 = vld [vmem:[#allocation4 + $0x148] sm:$0xff]
    %v3441 = vld [vmem:[#allocation4 + $0x150] sm:$0xff]
    %v3442 = vld [vmem:[#allocation4 + $0x158] sm:$0xff]
    %v3443 = vld [vmem:[#allocation4 + $0x160] sm:$0xff]
    %v3444 = vld [vmem:[#allocation4 + $0x168] sm:$0xff]
    %v3445 = vld [vmem:[#allocation4 + $0x170] sm:$0xff]
    %v3446 = vld [vmem:[#allocation4 + $0x178] sm:$0xff]
    %v3447 = vld [vmem:[#allocation4 + $0x180] sm:$0xff]
    %v3448 = vld [vmem:[#allocation4 + $0x188] sm:$0xff]
    %v3449 = vld [vmem:[#allocation4 + $0x190] sm:$0xff]
    %v3450 = vld [vmem:[#allocation4 + $0x198] sm:$0xff]
    %v3451 = vld [vmem:[#allocation4 + $0x1a0] sm:$0xff]
    %v3452 = vld [vmem:[#allocation4 + $0x1a8] sm:$0xff]
    %v3453 = vld [vmem:[#allocation4 + $0x1b0] sm:$0xff]
    %v3454 = vld [vmem:[#allocation4 + $0x1b8] sm:$0xff]
    %v3455 = vld [vmem:[#allocation4 + $0x1c0] sm:$0xff]
    %v3456 = vld [vmem:[#allocation4 + $0x1c8] sm:$0xff]
    %v3457 = vld [vmem:[#allocation4 + $0x1d0] sm:$0xff]
    %v3458 = vld [vmem:[#allocation4 + $0x1d8] sm:$0xff]
    %v3459 = vld [vmem:[#allocation4 + $0x1e0] sm:$0xff]
    %v3460 = vld [vmem:[#allocation4 + $0x1e8] sm:$0xff]
    %v3461 = vld [vmem:[#allocation4 + $0x1f0] sm:$0xff]
    %v3462 = vld [vmem:[#allocation4 + $0x1f8] sm:$0xff]
    %v3463 = vld [vmem:[#allocation4 + $0x200] sm:$0xff]
    %v3464 = vld [vmem:[#allocation4 + $0x208] sm:$0xff]
    %v3465 = vld [vmem:[#allocation4 + $0x210] sm:$0xff]
    %v3466 = vld [vmem:[#allocation4 + $0x218] sm:$0xff]
    %v3467 = vld [vmem:[#allocation4 + $0x220] sm:$0xff]
    %v3468 = vld [vmem:[#allocation4 + $0x228] sm:$0xff]
    %v3469 = vld [vmem:[#allocation4 + $0x230] sm:$0xff]
    %v3470 = vld [vmem:[#allocation4 + $0x238] sm:$0xff]
    %v3471 = vld [vmem:[#allocation4 + $0x240] sm:$0xff]
    %v3472 = vld [vmem:[#allocation4 + $0x248] sm:$0xff]
    %v3473 = vld [vmem:[#allocation4 + $0x250] sm:$0xff]
    %v3474 = vld [vmem:[#allocation4 + $0x258] sm:$0xff]
    %v3475 = vld [vmem:[#allocation4 + $0x260] sm:$0xff]
    %v3476 = vld [vmem:[#allocation4 + $0x268] sm:$0xff]
    %v3477 = vld [vmem:[#allocation4 + $0x270] sm:$0xff]
    %v3478 = vld [vmem:[#allocation4 + $0x278] sm:$0xff]
    %v3479 = vld [vmem:[#allocation4 + $0x280] sm:$0xff]
    %v3480 = vld [vmem:[#allocation4 + $0x288] sm:$0xff]
    %v3481 = vld [vmem:[#allocation4 + $0x290] sm:$0xff]
    %v3482 = vld [vmem:[#allocation4 + $0x298] sm:$0xff]
    %v3483 = vld [vmem:[#allocation4 + $0x2a0] sm:$0xff]
    %v3484 = vld [vmem:[#allocation4 + $0x2a8] sm:$0xff]
    %v3485 = vld [vmem:[#allocation4 + $0x2b0] sm:$0xff]
    %v3486 = vld [vmem:[#allocation4 + $0x2b8] sm:$0xff]
    %v3487 = vld [vmem:[#allocation4 + $0x2c0] sm:$0xff]
    %v3488 = vld [vmem:[#allocation4 + $0x2c8] sm:$0xff]
    %v3489 = vld [vmem:[#allocation4 + $0x2d0] sm:$0xff]
    %v3490 = vld [vmem:[#allocation4 + $0x2d8] sm:$0xff]
    %v3491 = vld [vmem:[#allocation4 + $0x2e0] sm:$0xff]
    %v3492 = vld [vmem:[#allocation4 + $0x2e8] sm:$0xff]
    %v3493 = vld [vmem:[#allocation4 + $0x2f0] sm:$0xff]
    %v3494 = vld [vmem:[#allocation4 + $0x2f8] sm:$0xff]
    %v3495 = vld [vmem:[#allocation4 + $0x300] sm:$0xff]
    %v3496 = vld [vmem:[#allocation4 + $0x308] sm:$0xff]
    %v3497 = vld [vmem:[#allocation4 + $0x310] sm:$0xff]
    %v3498 = vld [vmem:[#allocation4 + $0x318] sm:$0xff]
    %v3499 = vld [vmem:[#allocation4 + $0x320] sm:$0xff]
    %v3500 = vld [vmem:[#allocation4 + $0x328] sm:$0xff]
    %v3501 = vld [vmem:[#allocation4 + $0x330] sm:$0xff]
    %v3502 = vld [vmem:[#allocation4 + $0x338] sm:$0xff]
    %v3503 = vld [vmem:[#allocation4 + $0x340] sm:$0xff]
    %v3504 = vld [vmem:[#allocation4 + $0x348] sm:$0xff]
    %v3505 = vld [vmem:[#allocation4 + $0x350] sm:$0xff]
    %v3506 = vld [vmem:[#allocation4 + $0x358] sm:$0xff]
    %v3507 = vld [vmem:[#allocation4 + $0x360] sm:$0xff]
    %v3508 = vld [vmem:[#allocation4 + $0x368] sm:$0xff]
    %v3509 = vld [vmem:[#allocation4 + $0x370] sm:$0xff]
    %v3510 = vld [vmem:[#allocation4 + $0x378] sm:$0xff]
    %v3511 = vld [vmem:[#allocation4 + $0x380] sm:$0xff]
    %v3512 = vld [vmem:[#allocation4 + $0x388] sm:$0xff]
    %v3513 = vld [vmem:[#allocation4 + $0x390] sm:$0xff]
    %v3514 = vld [vmem:[#allocation4 + $0x398] sm:$0xff]
    %v3515 = vld [vmem:[#allocation4 + $0x3a0] sm:$0xff]
    %v3516 = vld [vmem:[#allocation4 + $0x3a8] sm:$0xff]
    %v3517 = vld [vmem:[#allocation4 + $0x3b0] sm:$0xff]
    %v3518 = vld [vmem:[#allocation4 + $0x3b8] sm:$0xff]
    %v3519 = vld [vmem:[#allocation4 + $0x3c0] sm:$0xff]
    %v3520 = vld [vmem:[#allocation4 + $0x3c8] sm:$0xff]
    %v3521 = vld [vmem:[#allocation4 + $0x3d0] sm:$0xff]
    %v3522 = vld [vmem:[#allocation4 + $0x3d8] sm:$0xff]
    %v3523 = vld [vmem:[#allocation4 + $0x3e0] sm:$0xff]
    %v3524 = vld [vmem:[#allocation4 + $0x3e8] sm:$0xff]
    %v3525 = vld [vmem:[#allocation4 + $0x3f0] sm:$0xff]
    %v3526 = vld [vmem:[#allocation4 + $0x3f8] sm:$0xff]
    %v3527 = vld [vmem:[#allocation4 + $0x400] sm:$0xff]
    %v3528 = vld [vmem:[#allocation4 + $0x408] sm:$0xff]
    %v3529 = vld [vmem:[#allocation4 + $0x410] sm:$0xff]
    %v3530 = vld [vmem:[#allocation4 + $0x418] sm:$0xff]
    %v3531 = vld [vmem:[#allocation4 + $0x420] sm:$0xff]
    %v3532 = vld [vmem:[#allocation4 + $0x428] sm:$0xff]
    %v3533 = vld [vmem:[#allocation4 + $0x430] sm:$0xff]
    %v3534 = vld [vmem:[#allocation4 + $0x438] sm:$0xff]
    %v3535 = vld [vmem:[#allocation4 + $0x440] sm:$0xff]
    %v3536 = vld [vmem:[#allocation4 + $0x448] sm:$0xff]
    %v3537 = vld [vmem:[#allocation4 + $0x450] sm:$0xff]
    %v3538 = vld [vmem:[#allocation4 + $0x458] sm:$0xff]
    %v3539 = vld [vmem:[#allocation4 + $0x460] sm:$0xff]
    %v3540 = vld [vmem:[#allocation4 + $0x468] sm:$0xff]
    %v3541 = vld [vmem:[#allocation4 + $0x470] sm:$0xff]
    %v3542 = vld [vmem:[#allocation4 + $0x478] sm:$0xff]
    %v3543 = vld [vmem:[#allocation4 + $0x480] sm:$0xff]
    %v3544 = vld [vmem:[#allocation4 + $0x488] sm:$0xff]
    %v3545 = vld [vmem:[#allocation4 + $0x490] sm:$0xff]
    %v3546 = vld [vmem:[#allocation4 + $0x498] sm:$0xff]
    %v3547 = vld [vmem:[#allocation4 + $0x4a0] sm:$0xff]
    %v3548 = vld [vmem:[#allocation4 + $0x4a8] sm:$0xff]
    %v3549 = vld [vmem:[#allocation4 + $0x4b0] sm:$0xff]
    %v3550 = vld [vmem:[#allocation4 + $0x4b8] sm:$0xff]
    %v3551 = vld [vmem:[#allocation4 + $0x4c0] sm:$0xff]
    %v3552 = vld [vmem:[#allocation4 + $0x4c8] sm:$0xff]
    %v3553 = vld [vmem:[#allocation4 + $0x4d0] sm:$0xff]
    %v3554 = vld [vmem:[#allocation4 + $0x4d8] sm:$0xff]
    %v3555 = vld [vmem:[#allocation4 + $0x4e0] sm:$0xff]
    %v3556 = vld [vmem:[#allocation4 + $0x4e8] sm:$0xff]
    %v3557 = vld [vmem:[#allocation4 + $0x4f0] sm:$0xff]
    %v3558 = vld [vmem:[#allocation4 + $0x4f8] sm:$0xff]
    %v3559 = vld [vmem:[#allocation4 + $0x500] sm:$0xff]
    %v3560 = vld [vmem:[#allocation4 + $0x508] sm:$0xff]
    %v3561 = vld [vmem:[#allocation4 + $0x510] sm:$0xff]
    %v3562 = vld [vmem:[#allocation4 + $0x518] sm:$0xff]
    %v3563 = vld [vmem:[#allocation4 + $0x520] sm:$0xff]
    %v3564 = vld [vmem:[#allocation4 + $0x528] sm:$0xff]
    %v3565 = vld [vmem:[#allocation4 + $0x530] sm:$0xff]
    %v3566 = vld [vmem:[#allocation4 + $0x538] sm:$0xff]
    %v3567 = vld [vmem:[#allocation4 + $0x540] sm:$0xff]
    %v3568 = vld [vmem:[#allocation4 + $0x548] sm:$0xff]
    %v3569 = vld [vmem:[#allocation4 + $0x550] sm:$0xff]
    %v3570 = vld [vmem:[#allocation4 + $0x558] sm:$0xff]
    %v3571 = vld [vmem:[#allocation4 + $0x560] sm:$0xff]
    %v3572 = vld [vmem:[#allocation4 + $0x568] sm:$0xff]
    %v3573 = vld [vmem:[#allocation4 + $0x570] sm:$0xff]
    %v3574 = vld [vmem:[#allocation4 + $0x578] sm:$0xff]
    %v3575 = vld [vmem:[#allocation4 + $0x580] sm:$0xff]
    %v3576 = vld [vmem:[#allocation4 + $0x588] sm:$0xff]
    %v3577 = vld [vmem:[#allocation4 + $0x590] sm:$0xff]
    %v3578 = vld [vmem:[#allocation4 + $0x598] sm:$0xff]
    %v3579 = vld [vmem:[#allocation4 + $0x5a0] sm:$0xff]
    %v3580 = vld [vmem:[#allocation4 + $0x5a8] sm:$0xff]
    %v3581 = vld [vmem:[#allocation4 + $0x5b0] sm:$0xff]
    %v3582 = vld [vmem:[#allocation4 + $0x5b8] sm:$0xff]
    %v3583 = vld [vmem:[#allocation4 + $0x5c0] sm:$0xff]
    %v3584 = vld [vmem:[#allocation4 + $0x5c8] sm:$0xff]
    %v3585 = vld [vmem:[#allocation4 + $0x5d0] sm:$0xff]
    %v3586 = vld [vmem:[#allocation4 + $0x5d8] sm:$0xff]
    %v3587 = vld [vmem:[#allocation4 + $0x5e0] sm:$0xff]
    %v3588 = vld [vmem:[#allocation4 + $0x5e8] sm:$0xff]
    %v3589 = vld [vmem:[#allocation4 + $0x5f0] sm:$0xff]
    %v3590 = vld [vmem:[#allocation4 + $0x5f8] sm:$0xff]
    %v3591 = vld [vmem:[#allocation4 + $0x600] sm:$0xff]
    %v3592 = vld [vmem:[#allocation4 + $0x608] sm:$0xff]
    %v3593 = vld [vmem:[#allocation4 + $0x610] sm:$0xff]
    %v3594 = vld [vmem:[#allocation4 + $0x618] sm:$0xff]
    %v3595 = vld [vmem:[#allocation4 + $0x620] sm:$0xff]
    %v3596 = vld [vmem:[#allocation4 + $0x628] sm:$0xff]
    %v3597 = vld [vmem:[#allocation4 + $0x630] sm:$0xff]
    %v3598 = vld [vmem:[#allocation4 + $0x638] sm:$0xff]
    %v3599 = vld [vmem:[#allocation4 + $0x640] sm:$0xff]
    %v3600 = vld [vmem:[#allocation4 + $0x648] sm:$0xff]
    %v3601 = vld [vmem:[#allocation4 + $0x650] sm:$0xff]
    %v3602 = vld [vmem:[#allocation4 + $0x658] sm:$0xff]
    %v3603 = vld [vmem:[#allocation4 + $0x660] sm:$0xff]
    %v3604 = vld [vmem:[#allocation4 + $0x668] sm:$0xff]
    %v3605 = vld [vmem:[#allocation4 + $0x670] sm:$0xff]
    %v3606 = vld [vmem:[#allocation4 + $0x678] sm:$0xff]
    %v3607 = vld [vmem:[#allocation4 + $0x680] sm:$0xff]
    %v3608 = vld [vmem:[#allocation4 + $0x688] sm:$0xff]
    %v3609 = vld [vmem:[#allocation4 + $0x690] sm:$0xff]
    %v3610 = vld [vmem:[#allocation4 + $0x698] sm:$0xff]
    %v3611 = vld [vmem:[#allocation4 + $0x6a0] sm:$0xff]
    %v3612 = vld [vmem:[#allocation4 + $0x6a8] sm:$0xff]
    %v3613 = vld [vmem:[#allocation4 + $0x6b0] sm:$0xff]
    %v3614 = vld [vmem:[#allocation4 + $0x6b8] sm:$0xff]
    %v3615 = vld [vmem:[#allocation4 + $0x6c0] sm:$0xff]
    %v3616 = vld [vmem:[#allocation4 + $0x6c8] sm:$0xff]
    %v3617 = vld [vmem:[#allocation4 + $0x6d0] sm:$0xff]
    %v3618 = vld [vmem:[#allocation4 + $0x6d8] sm:$0xff]
    %v3619 = vld [vmem:[#allocation4 + $0x6e0] sm:$0xff]
    %v3620 = vld [vmem:[#allocation4 + $0x6e8] sm:$0xff]
    %v3621 = vld [vmem:[#allocation4 + $0x6f0] sm:$0xff]
    %v3622 = vld [vmem:[#allocation4 + $0x6f8] sm:$0xff]
    %v3623 = vld [vmem:[#allocation4 + $0x700] sm:$0xff]
    %v3624 = vld [vmem:[#allocation4 + $0x708] sm:$0xff]
    %v3625 = vld [vmem:[#allocation4 + $0x710] sm:$0xff]
    %v3626 = vld [vmem:[#allocation4 + $0x718] sm:$0xff]
    %v3627 = vld [vmem:[#allocation4 + $0x720] sm:$0xff]
    %v3628 = vld [vmem:[#allocation4 + $0x728] sm:$0xff]
    %v3629 = vld [vmem:[#allocation4 + $0x730] sm:$0xff]
    %v3630 = vld [vmem:[#allocation4 + $0x738] sm:$0xff]
    %v3631 = vld [vmem:[#allocation4 + $0x740] sm:$0xff]
    %v3632 = vld [vmem:[#allocation4 + $0x748] sm:$0xff]
    %v3633 = vld [vmem:[#allocation4 + $0x750] sm:$0xff]
    %v3634 = vld [vmem:[#allocation4 + $0x758] sm:$0xff]
    %v3635 = vld [vmem:[#allocation4 + $0x760] sm:$0xff]
    %v3636 = vld [vmem:[#allocation4 + $0x768] sm:$0xff]
    %v3637 = vld [vmem:[#allocation4 + $0x770] sm:$0xff]
    %v3638 = vld [vmem:[#allocation4 + $0x778] sm:$0xff]
    %v3639 = vld [vmem:[#allocation4 + $0x780] sm:$0xff]
    %v3640 = vld [vmem:[#allocation4 + $0x788] sm:$0xff]
    %v3641 = vld [vmem:[#allocation4 + $0x790] sm:$0xff]
    %v3642 = vld [vmem:[#allocation4 + $0x798] sm:$0xff]
    %v3643 = vld [vmem:[#allocation4 + $0x7a0] sm:$0xff]
    %v3644 = vld [vmem:[#allocation4 + $0x7a8] sm:$0xff]
    %v3645 = vld [vmem:[#allocation4 + $0x7b0] sm:$0xff]
    %v3646 = vld [vmem:[#allocation4 + $0x7b8] sm:$0xff]
    %v3647 = vld [vmem:[#allocation4 + $0x7c0] sm:$0xff]
    %v3648 = vld [vmem:[#allocation4 + $0x7c8] sm:$0xff]
    %v3649 = vld [vmem:[#allocation4 + $0x7d0] sm:$0xff]
    %v3650 = vld [vmem:[#allocation4 + $0x7d8] sm:$0xff]
    %v3651 = vld [vmem:[#allocation4 + $0x7e0] sm:$0xff]
    %v3652 = vld [vmem:[#allocation4 + $0x7e8] sm:$0xff]
    %v3653 = vld [vmem:[#allocation4 + $0x7f0] sm:$0xff]
    %v3654 = vld [vmem:[#allocation4 + $0x7f8] sm:$0xff]
    %3655 = vmatprep.subr.mxu0 %v3400
    %3656 = vmatpush1.msra.mxu0 %v3399
    %3657 = vmatprep.subr.mxu0 %v3408
    %3658 = vmatpush1.msra.mxu0 %v3407
    %3659 = vmatprep.subr.mxu0 %v3416
    %3660 = vmatpush1.msra.mxu0 %v3415
    %3661 = vmatprep.subr.mxu0 %v3424
    %3662 = vmatpush1.msra.mxu0 %v3423
    %3663 = vmatprep.subr.mxu0 %v3432
    %3664 = vmatpush1.msra.mxu0 %v3431
    %3665 = vmatprep.subr.mxu0 %v3440
    %3666 = vmatpush1.msra.mxu0 %v3439
    %3667 = vmatprep.subr.mxu0 %v3448
    %3668 = vmatpush1.msra.mxu0 %v3447
    %3669 = vmatprep.subr.mxu0 %v3456
    %3670 = vmatpush1.msra.mxu0 %v3455
    %3671 = vmatprep.subr.mxu0 %v3464
    %3672 = vmatpush1.msra.mxu0 %v3463
    %3673 = vmatprep.subr.mxu0 %v3472
    %3674 = vmatpush1.msra.mxu0 %v3471
    %3675 = vmatprep.subr.mxu0 %v3480
    %3676 = vmatpush1.msra.mxu0 %v3479
    %3677 = vmatprep.subr.mxu0 %v3488
    %3678 = vmatpush1.msra.mxu0 %v3487
    %3679 = vmatprep.subr.mxu0 %v3496
    %3680 = vmatpush1.msra.mxu0 %v3495
    %3681 = vmatprep.subr.mxu0 %v3504
    %3682 = vmatpush1.msra.mxu0 %v3503
    %3683 = vmatprep.subr.mxu0 %v3512
    %3684 = vmatpush1.msra.mxu0 %v3511
    %3685 = vmatprep.subr.mxu0 %v3520
    %3686 = vmatpush1.msra.mxu0 %v3519
    %3687 = vmatprep.subr.mxu0 %v3528
    %3688 = vmatpush1.msra.mxu0 %v3527
    %3689 = vmatprep.subr.mxu0 %v3536
    %3690 = vmatpush1.msra.mxu0 %v3535
    %3691 = vmatprep.subr.mxu0 %v3544
    %3692 = vmatpush1.msra.mxu0 %v3543
    %3693 = vmatprep.subr.mxu0 %v3552
    %3694 = vmatpush1.msra.mxu0 %v3551
    %3695 = vmatprep.subr.mxu0 %v3560
    %3696 = vmatpush1.msra.mxu0 %v3559
    %3697 = vmatprep.subr.mxu0 %v3568
    %3698 = vmatpush1.msra.mxu0 %v3567
    %3699 = vmatprep.subr.mxu0 %v3576
    %3700 = vmatpush1.msra.mxu0 %v3575
    %3701 = vmatprep.subr.mxu0 %v3584
    %3702 = vmatpush1.msra.mxu0 %v3583
    %3703 = vmatprep.subr.mxu0 %v3592
    %3704 = vmatpush1.msra.mxu0 %v3591
    %3705 = vmatprep.subr.mxu0 %v3600
    %3706 = vmatpush1.msra.mxu0 %v3599
    %3707 = vmatprep.subr.mxu0 %v3608
    %3708 = vmatpush1.msra.mxu0 %v3607
    %3709 = vmatprep.subr.mxu0 %v3616
    %3710 = vmatpush1.msra.mxu0 %v3615
    %3711 = vmatprep.subr.mxu0 %v3624
    %3712 = vmatpush1.msra.mxu0 %v3623
    %3713 = vmatprep.subr.mxu0 %v3632
    %3714 = vmatpush1.msra.mxu0 %v3631
    %3715 = vmatprep.subr.mxu0 %v3640
    %3716 = vmatpush1.msra.mxu0 %v3639
    %3717 = vmatprep.subr.mxu0 %v3648
    %3718 = vmatpush1.msra.mxu0 %v3647
    %3719 = vmatprep.mubr.f32.mxu0 %v3397
    %3720 = vmatmul.mubr.f32.gmra.mrb[0].mxu0 %v3373
    %v3721 = vpop.f32.mrb[0].mxu0
    %v3722 = vadd.f32 %v377, %v3721
    %v3723 = vpop.f32.mrb[0].mxu0
    %v3724 = vadd.f32 %v381, %v3723
    %3725 = vdwg.mxu0
    %3726 = vmatprep.subr.mxu0 %v3402
    %3727 = vmatpush1.msra.mxu0 %v3401
    %3728 = vmatprep.subr.mxu0 %v3410
    %3729 = vmatpush1.msra.mxu0 %v3409
    %3730 = vmatprep.subr.mxu0 %v3418
    %3731 = vmatpush1.msra.mxu0 %v3417
    %3732 = vmatprep.subr.mxu0 %v3426
    %3733 = vmatpush1.msra.mxu0 %v3425
    %3734 = vmatprep.subr.mxu0 %v3434
    %3735 = vmatpush1.msra.mxu0 %v3433
    %3736 = vmatprep.subr.mxu0 %v3442
    %3737 = vmatpush1.msra.mxu0 %v3441
    %3738 = vmatprep.subr.mxu0 %v3450
    %3739 = vmatpush1.msra.mxu0 %v3449
    %3740 = vmatprep.subr.mxu0 %v3458
    %3741 = vmatpush1.msra.mxu0 %v3457
    %3742 = vmatprep.subr.mxu0 %v3466
    %3743 = vmatpush1.msra.mxu0 %v3465
    %3744 = vmatprep.subr.mxu0 %v3474
    %3745 = vmatpush1.msra.mxu0 %v3473
    %3746 = vmatprep.subr.mxu0 %v3482
    %3747 = vmatpush1.msra.mxu0 %v3481
    %3748 = vmatprep.subr.mxu0 %v3490
    %3749 = vmatpush1.msra.mxu0 %v3489
    %3750 = vmatprep.subr.mxu0 %v3498
    %3751 = vmatpush1.msra.mxu0 %v3497
    %3752 = vmatprep.subr.mxu0 %v3506
    %3753 = vmatpush1.msra.mxu0 %v3505
    %3754 = vmatprep.subr.mxu0 %v3514
    %3755 = vmatpush1.msra.mxu0 %v3513
    %3756 = vmatprep.subr.mxu0 %v3522
    %3757 = vmatpush1.msra.mxu0 %v3521
    %3758 = vmatprep.subr.mxu0 %v3530
    %3759 = vmatpush1.msra.mxu0 %v3529
    %3760 = vmatprep.subr.mxu0 %v3538
    %3761 = vmatpush1.msra.mxu0 %v3537
    %3762 = vmatprep.subr.mxu0 %v3546
    %3763 = vmatpush1.msra.mxu0 %v3545
    %3764 = vmatprep.subr.mxu0 %v3554
    %3765 = vmatpush1.msra.mxu0 %v3553
    %3766 = vmatprep.subr.mxu0 %v3562
    %3767 = vmatpush1.msra.mxu0 %v3561
    %3768 = vmatprep.subr.mxu0 %v3570
    %3769 = vmatpush1.msra.mxu0 %v3569
    %3770 = vmatprep.subr.mxu0 %v3578
    %3771 = vmatpush1.msra.mxu0 %v3577
    %3772 = vmatprep.subr.mxu0 %v3586
    %3773 = vmatpush1.msra.mxu0 %v3585
    %3774 = vmatprep.subr.mxu0 %v3594
    %3775 = vmatpush1.msra.mxu0 %v3593
    %3776 = vmatprep.subr.mxu0 %v3602
    %3777 = vmatpush1.msra.mxu0 %v3601
    %3778 = vmatprep.subr.mxu0 %v3610
    %3779 = vmatpush1.msra.mxu0 %v3609
    %3780 = vmatprep.subr.mxu0 %v3618
    %3781 = vmatpush1.msra.mxu0 %v3617
    %3782 = vmatprep.subr.mxu0 %v3626
    %3783 = vmatpush1.msra.mxu0 %v3625
    %3784 = vmatprep.subr.mxu0 %v3634
    %3785 = vmatpush1.msra.mxu0 %v3633
    %3786 = vmatprep.subr.mxu0 %v3642
    %3787 = vmatpush1.msra.mxu0 %v3641
    %3788 = vmatprep.subr.mxu0 %v3650
    %3789 = vmatpush1.msra.mxu0 %v3649
    %3790 = vmatprep.mubr.f32.mxu0 %v3397
    %3791 = vmatmul.mubr.f32.gmra.mrb[0].mxu0 %v3373
    %v3792 = vpop.f32.mrb[0].mxu0
    %v3793 = vadd.f32 %v385, %v3792
    %v3794 = vpop.f32.mrb[0].mxu0
    %v3795 = vadd.f32 %v389, %v3794
    %3796 = vdwg.mxu0
    %3797 = vmatprep.subr.mxu0 %v3404
    %3798 = vmatpush1.msra.mxu0 %v3403
    %3799 = vmatprep.subr.mxu0 %v3412
    %3800 = vmatpush1.msra.mxu0 %v3411
    %3801 = vmatprep.subr.mxu0 %v3420
    %3802 = vmatpush1.msra.mxu0 %v3419
    %3803 = vmatprep.subr.mxu0 %v3428
    %3804 = vmatpush1.msra.mxu0 %v3427
    %3805 = vmatprep.subr.mxu0 %v3436
    %3806 = vmatpush1.msra.mxu0 %v3435
    %3807 = vmatprep.subr.mxu0 %v3444
    %3808 = vmatpush1.msra.mxu0 %v3443
    %3809 = vmatprep.subr.mxu0 %v3452
    %3810 = vmatpush1.msra.mxu0 %v3451
    %3811 = vmatprep.subr.mxu0 %v3460
    %3812 = vmatpush1.msra.mxu0 %v3459
    %3813 = vmatprep.subr.mxu0 %v3468
    %3814 = vmatpush1.msra.mxu0 %v3467
    %3815 = vmatprep.subr.mxu0 %v3476
    %3816 = vmatpush1.msra.mxu0 %v3475
    %3817 = vmatprep.subr.mxu0 %v3484
    %3818 = vmatpush1.msra.mxu0 %v3483
    %3819 = vmatprep.subr.mxu0 %v3492
    %3820 = vmatpush1.msra.mxu0 %v3491
    %3821 = vmatprep.subr.mxu0 %v3500
    %3822 = vmatpush1.msra.mxu0 %v3499
    %3823 = vmatprep.subr.mxu0 %v3508
    %3824 = vmatpush1.msra.mxu0 %v3507
    %3825 = vmatprep.subr.mxu0 %v3516
    %3826 = vmatpush1.msra.mxu0 %v3515
    %3827 = vmatprep.subr.mxu0 %v3524
    %3828 = vmatpush1.msra.mxu0 %v3523
    %3829 = vmatprep.subr.mxu0 %v3532
    %3830 = vmatpush1.msra.mxu0 %v3531
    %3831 = vmatprep.subr.mxu0 %v3540
    %3832 = vmatpush1.msra.mxu0 %v3539
    %3833 = vmatprep.subr.mxu0 %v3548
    %3834 = vmatpush1.msra.mxu0 %v3547
    %3835 = vmatprep.subr.mxu0 %v3556
    %3836 = vmatpush1.msra.mxu0 %v3555
    %3837 = vmatprep.subr.mxu0 %v3564
    %3838 = vmatpush1.msra.mxu0 %v3563
    %3839 = vmatprep.subr.mxu0 %v3572
    %3840 = vmatpush1.msra.mxu0 %v3571
    %3841 = vmatprep.subr.mxu0 %v3580
    %3842 = vmatpush1.msra.mxu0 %v3579
    %3843 = vmatprep.subr.mxu0 %v3588
    %3844 = vmatpush1.msra.mxu0 %v3587
    %3845 = vmatprep.subr.mxu0 %v3596
    %3846 = vmatpush1.msra.mxu0 %v3595
    %3847 = vmatprep.subr.mxu0 %v3604
    %3848 = vmatpush1.msra.mxu0 %v3603
    %3849 = vmatprep.subr.mxu0 %v3612
    %3850 = vmatpush1.msra.mxu0 %v3611
    %3851 = vmatprep.subr.mxu0 %v3620
    %3852 = vmatpush1.msra.mxu0 %v3619
    %3853 = vmatprep.subr.mxu0 %v3628
    %3854 = vmatpush1.msra.mxu0 %v3627
    %3855 = vmatprep.subr.mxu0 %v3636
    %3856 = vmatpush1.msra.mxu0 %v3635
    %3857 = vmatprep.subr.mxu0 %v3644
    %3858 = vmatpush1.msra.mxu0 %v3643
    %3859 = vmatprep.subr.mxu0 %v3652
    %3860 = vmatpush1.msra.mxu0 %v3651
    %3861 = vmatprep.mubr.f32.mxu0 %v3397
    %3862 = vmatmul.mubr.f32.gmra.mrb[0].mxu0 %v3373
    %v3863 = vpop.f32.mrb[0].mxu0
    %v3864 = vadd.f32 %v393, %v3863
    %v3865 = vpop.f32.mrb[0].mxu0
    %v3866 = vadd.f32 %v397, %v3865
    %3867 = vdwg.mxu0
    %3868 = vmatprep.subr.mxu0 %v3406
    %3869 = vmatpush1.msra.mxu0 %v3405
    %3870 = vmatprep.subr.mxu0 %v3414
    %3871 = vmatpush1.msra.mxu0 %v3413
    %3872 = vmatprep.subr.mxu0 %v3422
    %3873 = vmatpush1.msra.mxu0 %v3421
    %3874 = vmatprep.subr.mxu0 %v3430
    %3875 = vmatpush1.msra.mxu0 %v3429
    %3876 = vmatprep.subr.mxu0 %v3438
    %3877 = vmatpush1.msra.mxu0 %v3437
    %3878 = vmatprep.subr.mxu0 %v3446
    %3879 = vmatpush1.msra.mxu0 %v3445
    %3880 = vmatprep.subr.mxu0 %v3454
    %3881 = vmatpush1.msra.mxu0 %v3453
    %3882 = vmatprep.subr.mxu0 %v3462
    %3883 = vmatpush1.msra.mxu0 %v3461
    %3884 = vmatprep.subr.mxu0 %v3470
    %3885 = vmatpush1.msra.mxu0 %v3469
    %3886 = vmatprep.subr.mxu0 %v3478
    %3887 = vmatpush1.msra.mxu0 %v3477
    %3888 = vmatprep.subr.mxu0 %v3486
    %3889 = vmatpush1.msra.mxu0 %v3485
    %3890 = vmatprep.subr.mxu0 %v3494
    %3891 = vmatpush1.msra.mxu0 %v3493
    %3892 = vmatprep.subr.mxu0 %v3502
    %3893 = vmatpush1.msra.mxu0 %v3501
    %3894 = vmatprep.subr.mxu0 %v3510
    %3895 = vmatpush1.msra.mxu0 %v3509
    %3896 = vmatprep.subr.mxu0 %v3518
    %3897 = vmatpush1.msra.mxu0 %v3517
    %3898 = vmatprep.subr.mxu0 %v3526
    %3899 = vmatpush1.msra.mxu0 %v3525
    %3900 = vmatprep.subr.mxu0 %v3534
    %3901 = vmatpush1.msra.mxu0 %v3533
    %3902 = vmatprep.subr.mxu0 %v3542
    %3903 = vmatpush1.msra.mxu0 %v3541
    %3904 = vmatprep.subr.mxu0 %v3550
    %3905 = vmatpush1.msra.mxu0 %v3549
    %3906 = vmatprep.subr.mxu0 %v3558
    %3907 = vmatpush1.msra.mxu0 %v3557
    %3908 = vmatprep.subr.mxu0 %v3566
    %3909 = vmatpush1.msra.mxu0 %v3565
    %3910 = vmatprep.subr.mxu0 %v3574
    %3911 = vmatpush1.msra.mxu0 %v3573
    %3912 = vmatprep.subr.mxu0 %v3582
    %3913 = vmatpush1.msra.mxu0 %v3581
    %3914 = vmatprep.subr.mxu0 %v3590
    %3915 = vmatpush1.msra.mxu0 %v3589
    %3916 = vmatprep.subr.mxu0 %v3598
    %3917 = vmatpush1.msra.mxu0 %v3597
    %3918 = vmatprep.subr.mxu0 %v3606
    %3919 = vmatpush1.msra.mxu0 %v3605
    %3920 = vmatprep.subr.mxu0 %v3614
    %3921 = vmatpush1.msra.mxu0 %v3613
    %3922 = vmatprep.subr.mxu0 %v3622
    %3923 = vmatpush1.msra.mxu0 %v3621
    %3924 = vmatprep.subr.mxu0 %v3630
    %3925 = vmatpush1.msra.mxu0 %v3629
    %3926 = vmatprep.subr.mxu0 %v3638
    %3927 = vmatpush1.msra.mxu0 %v3637
    %3928 = vmatprep.subr.mxu0 %v3646
    %3929 = vmatpush1.msra.mxu0 %v3645
    %3930 = vmatprep.subr.mxu0 %v3654
    %3931 = vmatpush1.msra.mxu0 %v3653
    %3932 = vmatprep.mubr.f32.mxu0 %v3397
    %3933 = vmatmul.mubr.f32.gmra.mrb[0].mxu0 %v3373
    %v3934 = vpop.f32.mrb[0].mxu0
    %v3935 = vadd.f32 %v401, %v3934
    %v3936 = vpop.f32.mrb[0].mxu0
    %v3937 = vadd.f32 %v405, %v3936
    %3938 = vdwg.mxu0
    %v3939 = vld [vmem:[#allocation2 + $0xe0] sm:$0xff]
    %v3940 = vld [vmem:[#allocation2 + $0xe8] sm:$0xff]
    %v3941 = vld [vmem:[#allocation2 + $0xf0] sm:$0xff]
    %v3942 = vld [vmem:[#allocation2 + $0xf8] sm:$0xff]
    %v3943 = vadd.f32 %v3722, %v3939
    %v3944 = vadd.f32 %v3724, %v3940
    %v3945 = vadd.f32 %v3793, %v3941
    %v3946 = vadd.f32 %v3795, %v3942
    %v3947 = vxor.u32 %v3943, 2147483648
    %v3948 = vmul.f32 %v3947, 1.442695
    %v3949 = vpow.pop %v3948
    %v3950 = vadd.f32 %v3949, 1.0
    %v3951 = vrcp.pop %v3950
    %v3952 = vmul.f32 1.0, %v3951
    %v3953 = vxor.u32 %v3944, 2147483648
    %v3954 = vmul.f32 %v3953, 1.442695
    %v3955 = vpow.pop %v3954
    %v3956 = vadd.f32 %v3955, 1.0
    %v3957 = vrcp.pop %v3956
    %v3958 = vmul.f32 1.0, %v3957
    %v3959 = vtanh.pop %v3945
    %v3960 = vxor.u32 %v3946, 2147483648
    %v3961 = vmul.f32 %v3960, 1.442695
    %v3962 = vpow.pop %v3961
    %v3963 = vadd.f32 %v3962, 1.0
    %v3964 = vrcp.pop %v3963
    %v3965 = vmul.f32 1.0, %v3964
    %v3966 = vmul.f32 %v3958, %v3371
    %v3967 = vmul.f32 %v3952, %v3959
    %v3968 = vadd.f32 %v3966, %v3967
    %v3969 = vtanh.pop %v3968
    %v3970 = vmul.f32 %v3965, %v3969
    %v3971 = vxor.u32 %v3864, 2147483648
    %v3972 = vmul.f32 %v3971, 1.442695
    %v3973 = vpow.pop %v3972
    %v3974 = vadd.f32 %v3973, 1.0
    %v3975 = vrcp.pop %v3974
    %v3976 = vmul.f32 1.0, %v3975
    %v3977 = vxor.u32 %v3866, 2147483648
    %v3978 = vmul.f32 %v3977, 1.442695
    %v3979 = vpow.pop %v3978
    %v3980 = vadd.f32 %v3979, 1.0
    %v3981 = vrcp.pop %v3980
    %v3982 = vmul.f32 1.0, %v3981
    %v3983 = vtanh.pop %v3935
    %v3984 = vxor.u32 %v3937, 2147483648
    %v3985 = vmul.f32 %v3984, 1.442695
    %v3986 = vpow.pop %v3985
    %v3987 = vadd.f32 %v3986, 1.0
    %v3988 = vrcp.pop %v3987
    %v3989 = vmul.f32 1.0, %v3988
    %v3990 = vmul.f32 %v3982, %v3395
    %v3991 = vmul.f32 %v3976, %v3983
    %v3992 = vadd.f32 %v3990, %v3991
    %v3993 = vtanh.pop %v3992
    %v3994 = vmul.f32 %v3989, %v3993
    %3995 = vst [vmem:[#allocation3 + $0x18] sm:$0xff] %v3994
    %v3996 = vld [vmem:[#allocation4 + $0x20] sm:$0xff]
    %v3997 = vld [vmem:[#allocation4 + $0x28] sm:$0xff]
    %v3998 = vld [vmem:[#allocation4 + $0x30] sm:$0xff]
    %v3999 = vld [vmem:[#allocation4 + $0x38] sm:$0xff]
    %v4000 = vld [vmem:[#allocation4 + $0x60] sm:$0xff]
    %v4001 = vld [vmem:[#allocation4 + $0x68] sm:$0xff]
    %v4002 = vld [vmem:[#allocation4 + $0x70] sm:$0xff]
    %v4003 = vld [vmem:[#allocation4 + $0x78] sm:$0xff]
    %v4004 = vld [vmem:[#allocation4 + $0xa0] sm:$0xff]
    %v4005 = vld [vmem:[#allocation4 + $0xa8] sm:$0xff]
    %v4006 = vld [vmem:[#allocation4 + $0xb0] sm:$0xff]
    %v4007 = vld [vmem:[#allocation4 + $0xb8] sm:$0xff]
    %v4008 = vld [vmem:[#allocation4 + $0xe0] sm:$0xff]
    %v4009 = vld [vmem:[#allocation4 + $0xe8] sm:$0xff]
    %v4010 = vld [vmem:[#allocation4 + $0xf0] sm:$0xff]
    %v4011 = vld [vmem:[#allocation4 + $0xf8] sm:$0xff]
    %v4012 = vld [vmem:[#allocation4 + $0x120] sm:$0xff]
    %v4013 = vld [vmem:[#allocation4 + $0x128] sm:$0xff]
    %v4014 = vld [vmem:[#allocation4 + $0x130] sm:$0xff]
    %v4015 = vld [vmem:[#allocation4 + $0x138] sm:$0xff]
    %v4016 = vld [vmem:[#allocation4 + $0x160] sm:$0xff]
    %v4017 = vld [vmem:[#allocation4 + $0x168] sm:$0xff]
    %v4018 = vld [vmem:[#allocation4 + $0x170] sm:$0xff]
    %v4019 = vld [vmem:[#allocation4 + $0x178] sm:$0xff]
    %v4020 = vld [vmem:[#allocation4 + $0x1a0] sm:$0xff]
    %v4021 = vld [vmem:[#allocation4 + $0x1a8] sm:$0xff]
    %v4022 = vld [vmem:[#allocation4 + $0x1b0] sm:$0xff]
    %v4023 = vld [vmem:[#allocation4 + $0x1b8] sm:$0xff]
    %v4024 = vld [vmem:[#allocation4 + $0x1e0] sm:$0xff]
    %v4025 = vld [vmem:[#allocation4 + $0x1e8] sm:$0xff]
    %v4026 = vld [vmem:[#allocation4 + $0x1f0] sm:$0xff]
    %v4027 = vld [vmem:[#allocation4 + $0x1f8] sm:$0xff]
    %v4028 = vld [vmem:[#allocation4 + $0x220] sm:$0xff]
    %v4029 = vld [vmem:[#allocation4 + $0x228] sm:$0xff]
    %v4030 = vld [vmem:[#allocation4 + $0x230] sm:$0xff]
    %v4031 = vld [vmem:[#allocation4 + $0x238] sm:$0xff]
    %v4032 = vld [vmem:[#allocation4 + $0x260] sm:$0xff]
    %v4033 = vld [vmem:[#allocation4 + $0x268] sm:$0xff]
    %v4034 = vld [vmem:[#allocation4 + $0x270] sm:$0xff]
    %v4035 = vld [vmem:[#allocation4 + $0x278] sm:$0xff]
    %v4036 = vld [vmem:[#allocation4 + $0x2a0] sm:$0xff]
    %v4037 = vld [vmem:[#allocation4 + $0x2a8] sm:$0xff]
    %v4038 = vld [vmem:[#allocation4 + $0x2b0] sm:$0xff]
    %v4039 = vld [vmem:[#allocation4 + $0x2b8] sm:$0xff]
    %v4040 = vld [vmem:[#allocation4 + $0x2e0] sm:$0xff]
    %v4041 = vld [vmem:[#allocation4 + $0x2e8] sm:$0xff]
    %v4042 = vld [vmem:[#allocation4 + $0x2f0] sm:$0xff]
    %v4043 = vld [vmem:[#allocation4 + $0x2f8] sm:$0xff]
    %v4044 = vld [vmem:[#allocation4 + $0x320] sm:$0xff]
    %v4045 = vld [vmem:[#allocation4 + $0x328] sm:$0xff]
    %v4046 = vld [vmem:[#allocation4 + $0x330] sm:$0xff]
    %v4047 = vld [vmem:[#allocation4 + $0x338] sm:$0xff]
    %v4048 = vld [vmem:[#allocation4 + $0x360] sm:$0xff]
    %v4049 = vld [vmem:[#allocation4 + $0x368] sm:$0xff]
    %v4050 = vld [vmem:[#allocation4 + $0x370] sm:$0xff]
    %v4051 = vld [vmem:[#allocation4 + $0x378] sm:$0xff]
    %v4052 = vld [vmem:[#allocation4 + $0x3a0] sm:$0xff]
    %v4053 = vld [vmem:[#allocation4 + $0x3a8] sm:$0xff]
    %v4054 = vld [vmem:[#allocation4 + $0x3b0] sm:$0xff]
    %v4055 = vld [vmem:[#allocation4 + $0x3b8] sm:$0xff]
    %v4056 = vld [vmem:[#allocation4 + $0x3e0] sm:$0xff]
    %v4057 = vld [vmem:[#allocation4 + $0x3e8] sm:$0xff]
    %v4058 = vld [vmem:[#allocation4 + $0x3f0] sm:$0xff]
    %v4059 = vld [vmem:[#allocation4 + $0x3f8] sm:$0xff]
    %v4060 = vld [vmem:[#allocation4 + $0x420] sm:$0xff]
    %v4061 = vld [vmem:[#allocation4 + $0x428] sm:$0xff]
    %v4062 = vld [vmem:[#allocation4 + $0x430] sm:$0xff]
    %v4063 = vld [vmem:[#allocation4 + $0x438] sm:$0xff]
    %v4064 = vld [vmem:[#allocation4 + $0x460] sm:$0xff]
    %v4065 = vld [vmem:[#allocation4 + $0x468] sm:$0xff]
    %v4066 = vld [vmem:[#allocation4 + $0x470] sm:$0xff]
    %v4067 = vld [vmem:[#allocation4 + $0x478] sm:$0xff]
    %v4068 = vld [vmem:[#allocation4 + $0x4a0] sm:$0xff]
    %v4069 = vld [vmem:[#allocation4 + $0x4a8] sm:$0xff]
    %v4070 = vld [vmem:[#allocation4 + $0x4b0] sm:$0xff]
    %v4071 = vld [vmem:[#allocation4 + $0x4b8] sm:$0xff]
    %v4072 = vld [vmem:[#allocation4 + $0x4e0] sm:$0xff]
    %v4073 = vld [vmem:[#allocation4 + $0x4e8] sm:$0xff]
    %v4074 = vld [vmem:[#allocation4 + $0x4f0] sm:$0xff]
    %v4075 = vld [vmem:[#allocation4 + $0x4f8] sm:$0xff]
    %v4076 = vld [vmem:[#allocation4 + $0x520] sm:$0xff]
    %v4077 = vld [vmem:[#allocation4 + $0x528] sm:$0xff]
    %v4078 = vld [vmem:[#allocation4 + $0x530] sm:$0xff]
    %v4079 = vld [vmem:[#allocation4 + $0x538] sm:$0xff]
    %v4080 = vld [vmem:[#allocation4 + $0x560] sm:$0xff]
    %v4081 = vld [vmem:[#allocation4 + $0x568] sm:$0xff]
    %v4082 = vld [vmem:[#allocation4 + $0x570] sm:$0xff]
    %v4083 = vld [vmem:[#allocation4 + $0x578] sm:$0xff]
    %v4084 = vld [vmem:[#allocation4 + $0x5a0] sm:$0xff]
    %v4085 = vld [vmem:[#allocation4 + $0x5a8] sm:$0xff]
    %v4086 = vld [vmem:[#allocation4 + $0x5b0] sm:$0xff]
    %v4087 = vld [vmem:[#allocation4 + $0x5b8] sm:$0xff]
    %v4088 = vld [vmem:[#allocation4 + $0x5e0] sm:$0xff]
    %v4089 = vld [vmem:[#allocation4 + $0x5e8] sm:$0xff]
    %v4090 = vld [vmem:[#allocation4 + $0x5f0] sm:$0xff]
    %v4091 = vld [vmem:[#allocation4 + $0x5f8] sm:$0xff]
    %v4092 = vld [vmem:[#allocation4 + $0x620] sm:$0xff]
    %v4093 = vld [vmem:[#allocation4 + $0x628] sm:$0xff]
    %v4094 = vld [vmem:[#allocation4 + $0x630] sm:$0xff]
    %v4095 = vld [vmem:[#allocation4 + $0x638] sm:$0xff]
    %v4096 = vld [vmem:[#allocation4 + $0x660] sm:$0xff]
    %v4097 = vld [vmem:[#allocation4 + $0x668] sm:$0xff]
    %v4098 = vld [vmem:[#allocation4 + $0x670] sm:$0xff]
    %v4099 = vld [vmem:[#allocation4 + $0x678] sm:$0xff]
    %v4100 = vld [vmem:[#allocation4 + $0x6a0] sm:$0xff]
    %v4101 = vld [vmem:[#allocation4 + $0x6a8] sm:$0xff]
    %v4102 = vld [vmem:[#allocation4 + $0x6b0] sm:$0xff]
    %v4103 = vld [vmem:[#allocation4 + $0x6b8] sm:$0xff]
    %v4104 = vld [vmem:[#allocation4 + $0x6e0] sm:$0xff]
    %v4105 = vld [vmem:[#allocation4 + $0x6e8] sm:$0xff]
    %v4106 = vld [vmem:[#allocation4 + $0x6f0] sm:$0xff]
    %v4107 = vld [vmem:[#allocation4 + $0x6f8] sm:$0xff]
    %v4108 = vld [vmem:[#allocation4 + $0x720] sm:$0xff]
    %v4109 = vld [vmem:[#allocation4 + $0x728] sm:$0xff]
    %v4110 = vld [vmem:[#allocation4 + $0x730] sm:$0xff]
    %v4111 = vld [vmem:[#allocation4 + $0x738] sm:$0xff]
    %v4112 = vld [vmem:[#allocation4 + $0x760] sm:$0xff]
    %v4113 = vld [vmem:[#allocation4 + $0x768] sm:$0xff]
    %v4114 = vld [vmem:[#allocation4 + $0x770] sm:$0xff]
    %v4115 = vld [vmem:[#allocation4 + $0x778] sm:$0xff]
    %v4116 = vld [vmem:[#allocation4 + $0x7a0] sm:$0xff]
    %v4117 = vld [vmem:[#allocation4 + $0x7a8] sm:$0xff]
    %v4118 = vld [vmem:[#allocation4 + $0x7b0] sm:$0xff]
    %v4119 = vld [vmem:[#allocation4 + $0x7b8] sm:$0xff]
    %v4120 = vld [vmem:[#allocation4 + $0x7e0] sm:$0xff]
    %v4121 = vld [vmem:[#allocation4 + $0x7e8] sm:$0xff]
    %v4122 = vld [vmem:[#allocation4 + $0x7f0] sm:$0xff]
    %v4123 = vld [vmem:[#allocation4 + $0x7f8] sm:$0xff]
    %4124 = vmatprep.subr.mxu0 %v3997
    %4125 = vmatpush1.msra.mxu0 %v3996
    %4126 = vmatprep.subr.mxu0 %v4001
    %4127 = vmatpush1.msra.mxu0 %v4000
    %4128 = vmatprep.subr.mxu0 %v4005
    %4129 = vmatpush1.msra.mxu0 %v4004
    %4130 = vmatprep.subr.mxu0 %v4009
    %4131 = vmatpush1.msra.mxu0 %v4008
    %4132 = vmatprep.subr.mxu0 %v4013
    %4133 = vmatpush1.msra.mxu0 %v4012
    %4134 = vmatprep.subr.mxu0 %v4017
    %4135 = vmatpush1.msra.mxu0 %v4016
    %4136 = vmatprep.subr.mxu0 %v4021
    %4137 = vmatpush1.msra.mxu0 %v4020
    %4138 = vmatprep.subr.mxu0 %v4025
    %4139 = vmatpush1.msra.mxu0 %v4024
    %4140 = vmatprep.subr.mxu0 %v4029
    %4141 = vmatpush1.msra.mxu0 %v4028
    %4142 = vmatprep.subr.mxu0 %v4033
    %4143 = vmatpush1.msra.mxu0 %v4032
    %4144 = vmatprep.subr.mxu0 %v4037
    %4145 = vmatpush1.msra.mxu0 %v4036
    %4146 = vmatprep.subr.mxu0 %v4041
    %4147 = vmatpush1.msra.mxu0 %v4040
    %4148 = vmatprep.subr.mxu0 %v4045
    %4149 = vmatpush1.msra.mxu0 %v4044
    %4150 = vmatprep.subr.mxu0 %v4049
    %4151 = vmatpush1.msra.mxu0 %v4048
    %4152 = vmatprep.subr.mxu0 %v4053
    %4153 = vmatpush1.msra.mxu0 %v4052
    %4154 = vmatprep.subr.mxu0 %v4057
    %4155 = vmatpush1.msra.mxu0 %v4056
    %4156 = vmatprep.subr.mxu0 %v4061
    %4157 = vmatpush1.msra.mxu0 %v4060
    %4158 = vmatprep.subr.mxu0 %v4065
    %4159 = vmatpush1.msra.mxu0 %v4064
    %4160 = vmatprep.subr.mxu0 %v4069
    %4161 = vmatpush1.msra.mxu0 %v4068
    %4162 = vmatprep.subr.mxu0 %v4073
    %4163 = vmatpush1.msra.mxu0 %v4072
    %4164 = vmatprep.subr.mxu0 %v4077
    %4165 = vmatpush1.msra.mxu0 %v4076
    %4166 = vmatprep.subr.mxu0 %v4081
    %4167 = vmatpush1.msra.mxu0 %v4080
    %4168 = vmatprep.subr.mxu0 %v4085
    %4169 = vmatpush1.msra.mxu0 %v4084
    %4170 = vmatprep.subr.mxu0 %v4089
    %4171 = vmatpush1.msra.mxu0 %v4088
    %4172 = vmatprep.subr.mxu0 %v4093
    %4173 = vmatpush1.msra.mxu0 %v4092
    %4174 = vmatprep.subr.mxu0 %v4097
    %4175 = vmatpush1.msra.mxu0 %v4096
    %4176 = vmatprep.subr.mxu0 %v4101
    %4177 = vmatpush1.msra.mxu0 %v4100
    %4178 = vmatprep.subr.mxu0 %v4105
    %4179 = vmatpush1.msra.mxu0 %v4104
    %4180 = vmatprep.subr.mxu0 %v4109
    %4181 = vmatpush1.msra.mxu0 %v4108
    %4182 = vmatprep.subr.mxu0 %v4113
    %4183 = vmatpush1.msra.mxu0 %v4112
    %4184 = vmatprep.subr.mxu0 %v4117
    %4185 = vmatpush1.msra.mxu0 %v4116
    %4186 = vmatprep.subr.mxu0 %v4121
    %4187 = vmatpush1.msra.mxu0 %v4120
    %4188 = vmatprep.mubr.f32.mxu0 %v3994
    %4189 = vmatmul.mubr.f32.gmra.mrb[0].mxu0 %v3970
    %v4190 = vpop.f32.mrb[0].mxu0
    %v4191 = vadd.f32 %v393, %v4190
    %v4192 = vpop.f32.mrb[0].mxu0
    %v4193 = vadd.f32 %v397, %v4192
    %4194 = vdwg.mxu0
    %4195 = vmatprep.subr.mxu0 %v3999
    %4196 = vmatpush1.msra.mxu0 %v3998
    %4197 = vmatprep.subr.mxu0 %v4003
    %4198 = vmatpush1.msra.mxu0 %v4002
    %4199 = vmatprep.subr.mxu0 %v4007
    %4200 = vmatpush1.msra.mxu0 %v4006
    %4201 = vmatprep.subr.mxu0 %v4011
    %4202 = vmatpush1.msra.mxu0 %v4010
    %4203 = vmatprep.subr.mxu0 %v4015
    %4204 = vmatpush1.msra.mxu0 %v4014
    %4205 = vmatprep.subr.mxu0 %v4019
    %4206 = vmatpush1.msra.mxu0 %v4018
    %4207 = vmatprep.subr.mxu0 %v4023
    %4208 = vmatpush1.msra.mxu0 %v4022
    %4209 = vmatprep.subr.mxu0 %v4027
    %4210 = vmatpush1.msra.mxu0 %v4026
    %4211 = vmatprep.subr.mxu0 %v4031
    %4212 = vmatpush1.msra.mxu0 %v4030
    %4213 = vmatprep.subr.mxu0 %v4035
    %4214 = vmatpush1.msra.mxu0 %v4034
    %4215 = vmatprep.subr.mxu0 %v4039
    %4216 = vmatpush1.msra.mxu0 %v4038
    %4217 = vmatprep.subr.mxu0 %v4043
    %4218 = vmatpush1.msra.mxu0 %v4042
    %4219 = vmatprep.subr.mxu0 %v4047
    %4220 = vmatpush1.msra.mxu0 %v4046
    %4221 = vmatprep.subr.mxu0 %v4051
    %4222 = vmatpush1.msra.mxu0 %v4050
    %4223 = vmatprep.subr.mxu0 %v4055
    %4224 = vmatpush1.msra.mxu0 %v4054
    %4225 = vmatprep.subr.mxu0 %v4059
    %4226 = vmatpush1.msra.mxu0 %v4058
    %4227 = vmatprep.subr.mxu0 %v4063
    %4228 = vmatpush1.msra.mxu0 %v4062
    %4229 = vmatprep.subr.mxu0 %v4067
    %4230 = vmatpush1.msra.mxu0 %v4066
    %4231 = vmatprep.subr.mxu0 %v4071
    %4232 = vmatpush1.msra.mxu0 %v4070
    %4233 = vmatprep.subr.mxu0 %v4075
    %4234 = vmatpush1.msra.mxu0 %v4074
    %4235 = vmatprep.subr.mxu0 %v4079
    %4236 = vmatpush1.msra.mxu0 %v4078
    %4237 = vmatprep.subr.mxu0 %v4083
    %4238 = vmatpush1.msra.mxu0 %v4082
    %4239 = vmatprep.subr.mxu0 %v4087
    %4240 = vmatpush1.msra.mxu0 %v4086
    %4241 = vmatprep.subr.mxu0 %v4091
    %4242 = vmatpush1.msra.mxu0 %v4090
    %4243 = vmatprep.subr.mxu0 %v4095
    %4244 = vmatpush1.msra.mxu0 %v4094
    %4245 = vmatprep.subr.mxu0 %v4099
    %4246 = vmatpush1.msra.mxu0 %v4098
    %4247 = vmatprep.subr.mxu0 %v4103
    %4248 = vmatpush1.msra.mxu0 %v4102
    %4249 = vmatprep.subr.mxu0 %v4107
    %4250 = vmatpush1.msra.mxu0 %v4106
    %4251 = vmatprep.subr.mxu0 %v4111
    %4252 = vmatpush1.msra.mxu0 %v4110
    %4253 = vmatprep.subr.mxu0 %v4115
    %4254 = vmatpush1.msra.mxu0 %v4114
    %4255 = vmatprep.subr.mxu0 %v4119
    %4256 = vmatpush1.msra.mxu0 %v4118
    %4257 = vmatprep.subr.mxu0 %v4123
    %4258 = vmatpush1.msra.mxu0 %v4122
    %4259 = vmatprep.mubr.f32.mxu0 %v3994
    %4260 = vmatmul.mubr.f32.gmra.mrb[0].mxu0 %v3970
    %v4261 = vpop.f32.mrb[0].mxu0
    %v4262 = vadd.f32 %v401, %v4261
    %v4263 = vpop.f32.mrb[0].mxu0
    %v4264 = vadd.f32 %v405, %v4263
    %4265 = vdwg.mxu0
    %v4266 = vxor.u32 %v4191, 2147483648
    %v4267 = vmul.f32 %v4266, 1.442695
    %v4268 = vpow.pop %v4267
    %v4269 = vadd.f32 %v4268, 1.0
    %v4270 = vrcp.pop %v4269
    %v4271 = vmul.f32 1.0, %v4270
    %v4272 = vxor.u32 %v4193, 2147483648
    %v4273 = vmul.f32 %v4272, 1.442695
    %v4274 = vpow.pop %v4273
    %v4275 = vadd.f32 %v4274, 1.0
    %v4276 = vrcp.pop %v4275
    %v4277 = vmul.f32 1.0, %v4276
    %v4278 = vtanh.pop %v4262
    %v4279 = vxor.u32 %v4264, 2147483648
    %v4280 = vmul.f32 %v4279, 1.442695
    %v4281 = vpow.pop %v4280
    %v4282 = vadd.f32 %v4281, 1.0
    %v4283 = vrcp.pop %v4282
    %v4284 = vmul.f32 1.0, %v4283
    %v4285 = vmul.f32 %v4277, %v3992
    %v4286 = vmul.f32 %v4271, %v4278
    %v4287 = vadd.f32 %v4285, %v4286
    %v4288 = vtanh.pop %v4287
    %v4289 = vmul.f32 %v4284, %v4288
    %4290 = vst [vmem:[#allocation3 + $0x20] sm:$0xff] %v4289
    %v4291 = vld [vmem:[#allocation3] sm:$0xff]
    %v4292 = vld [vmem:[#allocation3 + $0x8] sm:$0xff]
    %v4293 = vld [vmem:[#allocation3 + $0x10] sm:$0xff]
    %v4294 = vld [vmem:[#allocation3 + $0x18] sm:$0xff]
    %v4295 = vld [vmem:[#allocation3 + $0x20] sm:$0xff]
    %v4296 = vld [vmem:[#allocation7] sm:$0xff]
    %v4297 = vld [vmem:[#allocation7 + $0x8] sm:$0xff]
    %v4298 = vld [vmem:[#allocation7 + $0x10] sm:$0xff]
    %v4299 = vld [vmem:[#allocation7 + $0x18] sm:$0xff]
    %v4300 = vld [vmem:[#allocation7 + $0x20] sm:$0xff]
    %v4301 = vld [vmem:[#allocation7 + $0x28] sm:$0xff]
    %v4302 = vld [vmem:[#allocation7 + $0x30] sm:$0xff]
    %v4303 = vld [vmem:[#allocation7 + $0x38] sm:$0xff]
    %v4304 = vld [vmem:[#allocation7 + $0x40] sm:$0xff]
    %v4305 = vld [vmem:[#allocation7 + $0x48] sm:$0xff]
    %v4306 = vld [vmem:[#allocation7 + $0x50] sm:$0xff]
    %v4307 = vld [vmem:[#allocation7 + $0x58] sm:$0xff]
    %v4308 = vld [vmem:[#allocation7 + $0x60] sm:$0xff]
    %v4309 = vld [vmem:[#allocation7 + $0x68] sm:$0xff]
    %v4310 = vld [vmem:[#allocation7 + $0x70] sm:$0xff]
    %v4311 = vld [vmem:[#allocation7 + $0x78] sm:$0xff]
    %v4312 = vld [vmem:[%s6] sm:$0x1]
    %v4314 = vlaneseq
    %v4315 = vshrl.u32 %v4314, 7
    %v4316 = vsub.s32 0, %v4315
    %v4317 = vrot.slane %v4312, %v4316
    %4319 = vmatprep.subr.mxu0 0.0
    %4320 = vmatpush1.msra.mxu0 %v4296
    %4321 = vmatprep.subr.mxu0 0.0
    %4322 = vmatpush1.msra.mxu0 %v4297
    %4323 = vmatprep.subr.mxu0 0.0
    %4324 = vmatpush1.msra.mxu0 %v4298
    %4325 = vmatprep.subr.mxu0 0.0
    %4326 = vmatpush1.msra.mxu0 %v4299
    %4327 = vmatprep.subr.mxu0 0.0
    %4328 = vmatpush1.msra.mxu0 %v4300
    %4329 = vmatprep.subr.mxu0 0.0
    %4330 = vmatpush1.msra.mxu0 %v4301
    %4331 = vmatprep.subr.mxu0 0.0
    %4332 = vmatpush1.msra.mxu0 %v4302
    %4333 = vmatprep.subr.mxu0 0.0
    %4334 = vmatpush1.msra.mxu0 %v4303
    %4335 = vmatprep.subr.mxu0 0.0
    %4336 = vmatpush1.msra.mxu0 %v4304
    %4337 = vmatprep.subr.mxu0 0.0
    %4338 = vmatpush1.msra.mxu0 %v4305
    %4339 = vmatprep.subr.mxu0 0.0
    %4340 = vmatpush1.msra.mxu0 %v4306
    %4341 = vmatprep.subr.mxu0 0.0
    %4342 = vmatpush1.msra.mxu0 %v4307
    %4343 = vmatprep.subr.mxu0 0.0
    %4344 = vmatpush1.msra.mxu0 %v4308
    %4345 = vmatprep.subr.mxu0 0.0
    %4346 = vmatpush1.msra.mxu0 %v4309
    %4347 = vmatprep.subr.mxu0 0.0
    %4348 = vmatpush1.msra.mxu0 %v4310
    %4349 = vmatprep.subr.mxu0 0.0
    %4350 = vmatpush1.msra.mxu0 %v4311
    %4351 = vmatprep.subr.mxu0 0.0
    %4352 = vmatpush1.msra.mxu0 0.0
    %4353 = vmatprep.subr.mxu0 0.0
    %4354 = vmatpush1.msra.mxu0 0.0
    %4355 = vmatprep.subr.mxu0 0.0
    %4356 = vmatpush1.msra.mxu0 0.0
    %4357 = vmatprep.subr.mxu0 0.0
    %4358 = vmatpush1.msra.mxu0 0.0
    %4359 = vmatprep.subr.mxu0 0.0
    %4360 = vmatpush1.msra.mxu0 0.0
    %4361 = vmatprep.subr.mxu0 0.0
    %4362 = vmatpush1.msra.mxu0 0.0
    %4363 = vmatprep.subr.mxu0 0.0
    %4364 = vmatpush1.msra.mxu0 0.0
    %4365 = vmatprep.subr.mxu0 0.0
    %4366 = vmatpush1.msra.mxu0 0.0
    %4367 = vmatprep.subr.mxu0 0.0
    %4368 = vmatpush1.msra.mxu0 0.0
    %4369 = vmatprep.subr.mxu0 0.0
    %4370 = vmatpush1.msra.mxu0 0.0
    %4371 = vmatprep.subr.mxu0 0.0
    %4372 = vmatpush1.msra.mxu0 0.0
    %4373 = vmatprep.subr.mxu0 0.0
    %4374 = vmatpush1.msra.mxu0 0.0
    %4375 = vmatprep.subr.mxu0 0.0
    %4376 = vmatpush1.msra.mxu0 0.0
    %4377 = vmatprep.subr.mxu0 0.0
    %4378 = vmatpush1.msra.mxu0 0.0
    %4379 = vmatprep.subr.mxu0 0.0
    %4380 = vmatpush1.msra.mxu0 0.0
    %4381 = vmatprep.subr.mxu0 0.0
    %4382 = vmatpush1.msra.mxu0 0.0
    %4383 = vmatprep.mubr.f32.mxu0 0.0
    %4384 = vmatmul.mubr.f32.gmra.mrb[0].mxu0 %v4291
    %v4385 = vpop.f32.mrb[0].mxu0
    %v4386 = vadd.f32 %v4317, %v4385
    %v4387 = vpop.f32.mrb[0].mxu0
    %4388 = vmatprep.mubr.f32.mxu0 0.0
    %4389 = vmatmul.mubr.f32.gmra.mrb[0].mxu0 %v4292
    %v4390 = vpop.f32.mrb[0].mxu0
    %v4391 = vadd.f32 %v4317, %v4390
    %v4392 = vpop.f32.mrb[0].mxu0
    %4393 = vmatprep.mubr.f32.mxu0 0.0
    %4394 = vmatmul.mubr.f32.gmra.mrb[0].mxu0 %v4293
    %v4395 = vpop.f32.mrb[0].mxu0
    %v4396 = vadd.f32 %v4317, %v4395
    %v4397 = vpop.f32.mrb[0].mxu0
    %4398 = vmatprep.mubr.f32.mxu0 0.0
    %4399 = vmatmul.mubr.f32.gmra.mrb[0].mxu0 %v4294
    %v4400 = vpop.f32.mrb[0].mxu0
    %v4401 = vadd.f32 %v4317, %v4400
    %v4402 = vpop.f32.mrb[0].mxu0
    %4403 = vmatprep.mubr.f32.mxu0 0.0
    %4404 = vmatmul.mubr.f32.gmra.mrb[0].mxu0 %v4295
    %v4405 = vpop.f32.mrb[0].mxu0
    %v4406 = vadd.f32 %v4317, %v4405
    %v4407 = vpop.f32.mrb[0].mxu0
    %4408 = vdwg.mxu0
    %4409 = vst [vmem:[#allocation9] sm:$0xff] %v4386
    %4410 = vst [vmem:[#allocation9 + $0x8] sm:$0xff] %v4391
    %4411 = vst [vmem:[#allocation9 + $0x10] sm:$0xff] %v4396
    %4412 = vst [vmem:[#allocation9 + $0x18] sm:$0xff] %v4401
    %4413 = vst [vmem:[#allocation9 + $0x20] sm:$0xff] %v4406
    // Predicated region
    $region38: #{tpu_custom_call.1} parent=1 // pred_check
      _
    $region39: #{tpu_custom_call.1} parent=1 // pred_check_branch
      %4415 = sbr.rel (0) target = $region41
    $region40: #{tpu_custom_call.1} parent=1 // pred_region
      %s4417 = ssub.s32 640, 640
      %4418 = vsyncadd [#allocation6], %s4417
      %s4419 = sshll.u32 [#allocation9], 4
      %s4420 = int_to_ptr.vmem [resolvable:$true] %s4419
      %4425 = dma.vmem_to_hbm [thread:$0]  %s4420, 640, %s7, [#allocation6], 128, 128, 8
    $region41: #{tpu_custom_call.1} parent=1 // pred_fallthru
      _
    // Predicated region
    $region42: #{tpu_custom_call.1} parent=1 // pred_check
      _
    $region43: #{tpu_custom_call.1} parent=1 // pred_check_branch
      %4427 = sbr.rel (0) target = $region45
    $region44: #{tpu_custom_call.1} parent=1 // pred_region
      %4428 = dma.done [#allocation6], 640
    $region45: #{tpu_custom_call.1} parent=1 // pred_fallthru
      _
    %4429 = vsyncpa [#allocation5], 1
    %4430 = vsyncpa [#allocation8], 1
    %4431 = vsyncpa [#allocation6], 1

</llo_original>
